<compile_context>
chip_gen: v6e
topology: v6e:2x2x1
jax: 0.10.0
libtpu: 0.0.40
codegen_flags: <defaults>
</compile_context>

<pallas_src>
import jax
import jax.numpy as jnp
from jax.experimental import pallas as pl
from jax.experimental.pallas import tpu as pltpu


_MODULE_NAMES = ("frame_event", "frame_eframe", "event_eframe")
# Distinct inputs are stacked as [event, frame, eframe]; per module, the (rgb, depth)
# arguments of Mutual_info_reg.forward are:
#   mi_frame_event(frame, event), mi_frame_eframe(frame, eframe), mi_event_eframe(event, eframe)
_INPUT_IDX = ((1, 0), (1, 2), (0, 2))
_MODULE_WEIGHTS = (1.0, 0.1, 0.1)


# ------------------------------ Pallas kernel ------------------------------ #

def _mi_fused_kernel(xcol_ref, w1_ref, b1_ref, w2f_ref, bcomb_ref, eps_ref, o_ref):
    """All 3 Mutual_info_reg modules (both paths + latent losses + epilogue) in one step.

    Shapes (everything resident in VMEM, no grid):
      xcol_ref  (3, B*H1*W1, Cin*k*k)  bf16  im2col patches of [event, frame, eframe]
      w1_ref    (3, 2, Cin*k*k, C)     bf16  conv1 weights (path 0 = rgb, 1 = depth)
      b1_ref    (3, 2, 1, C)           f32
      w2f_ref   (3, 2, C, H1*W1, 2L)   f32   conv2 + adaptive-pool + [mu|logvar] FC, folded
      bcomb_ref (3, 2, 1, 2L)          f32
      eps_ref   (3, 2, B, L)           f32   reparametrization noise
      o_ref     (1, 1)                 f32   clip(l0,-1,1) + 0.1*clip(l1) + 0.1*clip(l2)
    """
    n_mod, _, B, L = eps_ref.shape
    n_rows = xcol_ref.shape[1]
    rows_per_sample = n_rows // B            # H1 * W1
    C = w1_ref.shape[-1]

    def softplus(v):
        return jnp.maximum(v, 0.0) + jnp.log(1.0 + jnp.exp(-jnp.abs(v)))

    def sigmoid(v):
        return 1.0 / (1.0 + jnp.exp(-v))

    def kl_mean(mu_p, lv_p, mu_q, lv_q):
        # KL(Independent(Normal(mu_p, scale=exp(lv_p)), 1) || ...), mean over batch.
        # (scale = exp(logvar) while the reparametrization uses exp(0.5*logvar):
        #  faithful to the reference PyTorch code.)
        var_p = jnp.exp(2.0 * lv_p)
        var_q = jnp.exp(2.0 * lv_q)
        per_dim = (lv_q - lv_p) + (var_p + (mu_p - mu_q) ** 2) / (2.0 * var_q) - 0.5
        summed = jnp.sum(per_dim, axis=-1, keepdims=True)            # (B, 1)
        return jnp.mean(summed, axis=0, keepdims=True)               # (1, 1)

    def bce_sum(logits, target):
        # BCELoss(sigmoid(logits), target, reduction='sum'), stable logits form.
        e = target * softplus(-logits) + (1.0 - target) * softplus(logits)
        return jnp.sum(jnp.sum(e, axis=-1, keepdims=True), axis=0, keepdims=True)

    total = None
    for m in range(n_mod):                        # static unroll: 3 modules
        stats = []
        for path in range(2):                     # static unroll: rgb, depth
            src = _INPUT_IDX[m][path]
            xcol = xcol_ref[src]                                      # (B*H1*W1, Cin*k*k)
            # conv1 as a single MXU matmul on the im2col patches (+ bias, LeakyReLU 0.01).
            h = jnp.dot(xcol, w1_ref[m, path],
                        preferred_element_type=jnp.float32)           # (B*H1*W1, C) f32
            h = h + b1_ref[m, path]
            h = jnp.maximum(h, 0.01 * h)
            # conv2 + AdaptiveAvgPool2d + both FC heads, pre-folded into w2f:
            #   pre[b, :] = sum_{r, c} h[b*R + r, c] * w2f[m, path, c, r, :] + bcomb
            # applied as C broadcast-MACs + a sublane reduction (no in-kernel reshape).
            per_sample = []
            for b in range(B):
                h_b = h[b * rows_per_sample:(b + 1) * rows_per_sample, :]   # (R, C)
                acc = h_b[:, 0:1] * w2f_ref[m, path, 0]                     # (R, 2L)
                for c in range(1, C):
                    acc = acc + h_b[:, c:c + 1] * w2f_ref[m, path, c]
                per_sample.append(jnp.sum(acc, axis=0, keepdims=True))      # (1, 2L)
            pre = jnp.concatenate(per_sample, axis=0) + bcomb_ref[m, path]  # (B, 2L)
            mu = jnp.tanh(pre[:, :L])
            lv = jnp.tanh(pre[:, L:])
            # reparametrize: z = mu + eps * exp(0.5 * logvar)
            z = mu + eps_ref[m, path] * jnp.exp(0.5 * lv)
            stats.append((mu, lv, z))

        (mu_r, lv_r, z_r), (mu_d, lv_d, z_d) = stats
        bi_kld = kl_mean(mu_r, lv_r, mu_d, lv_d) + kl_mean(mu_d, lv_d, mu_r, lv_r)
        t_r = sigmoid(z_r)
        t_d = sigmoid(z_d)
        loss_m = bce_sum(z_r, t_d) + bce_sum(z_d, t_r) - bi_kld              # (1, 1)
        loss_m = jnp.clip(loss_m, -1.0, 1.0)                                 # in-kernel clip
        contrib = _MODULE_WEIGHTS[m] * loss_m
        total = contrib if total is None else total + contrib

    o_ref[...] = total                                                       # (1, 1) f32


# --------------------- one-time parameter preprocessing --------------------- #

def prepare_mutual_info_params(params_all, image_hw, latent_size=4,
                               conv_dtype=jnp.bfloat16):
    """One-time folding of Mutual_info_reg parameters (hoisted out of the per-step jit).

    Returns a dict of small arrays consumed directly by the fused kernel:
      w1c   (3, 2, Cin*k*k, C)    conv1 weights in im2col layout (bf16)
      b1c   (3, 2, 1, C)          conv1 biases (f32)
      w2f   (3, 2, C, H1*W1, 2L)  conv2 . adaptive-pool . [fc_mu | fc_logvar] folded (f32)
      bcomb (3, 2, 1, 2L)         conv2-bias routed through pool+FC, plus FC biases (f32)
    """
    H, W = image_hw
    k, s, p = 4, 2, 1
    H1, W1 = (H + 2 * p - k) // s + 1, (W + 2 * p - k) // s + 1
    H2, W2 = (H1 + 2 * p - k) // s + 1, (W1 + 2 * p - k) // s + 1
    # AdaptiveAvgPool2d((32,32)) with 32 % H2 == 0 is pure replication -> folds into the FC.
    assert 32 % H2 == 0 and 32 % W2 == 0
    # TODO(synk): general AdaptiveAvgPool2d (true averaging when conv output > 32x32) is not folded.
    rep_h, rep_w = 32 // H2, 32 // W2

    mods = [params_all[name] for name in _MODULE_NAMES]
    n_mod = len(mods)
    C = mods[0]["w1"].shape[0]
    Cin = mods[0]["w1"].shape[1]
    L = latent_size

    # conv1: path 0 (rgb) uses layer1, path 1 (depth) uses layer2.
    w1 = jnp.stack([jnp.stack([m["w1"], m["w2"]]) for m in mods])       # (3,2,C,Cin,k,k)
    b1 = jnp.stack([jnp.stack([m["b1"], m["b2"]]) for m in mods])       # (3,2,C)
    w1c = w1.reshape(n_mod, 2, C, Cin * k * k).transpose(0, 1, 3, 2)
    w1c = w1c.astype(conv_dtype)                                        # (3,2,Cin*k*k,C)
    b1c = b1[:, :, None, :].astype(jnp.float32)                         # (3,2,1,C)

    # conv2: path 0 uses layer3, path 1 uses layer4.
    w2 = jnp.stack([jnp.stack([m["w3"], m["w4"]]) for m in mods])       # (3,2,C,C,k,k)
    b2 = jnp.stack([jnp.stack([m["b3"], m["b4"]]) for m in mods])       # (3,2,C)

    # FC heads per path: (mu, logvar) = (fc1_*, fc2_*).
    wfc = jnp.stack([jnp.stack([
        jnp.stack([m["fc1_rgb_w"], m["fc2_rgb_w"]]),
        jnp.stack([m["fc1_depth_w"], m["fc2_depth_w"]])]) for m in mods])   # (3,2,2,feat,L)
    bfc = jnp.stack([jnp.stack([
        jnp.stack([m["fc1_rgb_b"], m["fc2_rgb_b"]]),
        jnp.stack([m["fc1_depth_b"], m["fc2_depth_b"]])]) for m in mods])   # (3,2,2,L)

    # Fold the (replication-only) adaptive pool into the FC weights.
    wfc_fold = wfc.reshape(n_mod, 2, 2, C, H2, rep_h, W2, rep_w, L).sum(axis=(5, 7))
    # (3,2,2,C,H2,W2,L)

    # Fold conv2 (k=4, s=2, p=1) and the pooled FC heads into one linear map acting on the
    # conv1 activation laid out as (i1, j1, c).  Zero padding appears as all-zero selector
    # rows, so the composition is numerically exact.
    off = jnp.arange(k)
    sel_h = (jnp.arange(H1)[None, None, :] ==
             (s * jnp.arange(H2)[None, :, None] - p + off[:, None, None])
             ).astype(jnp.float32)                                      # (k,H2,H1)
    sel_w = (jnp.arange(W1)[None, None, :] ==
             (s * jnp.arange(W2)[None, :, None] - p + off[:, None, None])
             ).astype(jnp.float32)                                      # (k,W2,W1)
    w2f = jnp.einsum('MPoiab,aYh,bXw,MPgoYXl->MPihwgl',
                     w2, sel_h, sel_w, wfc_fold)                        # (3,2,C,H1,W1,2,L)
    w2f = w2f.reshape(n_mod, 2, C, H1 * W1, 2 * L).astype(jnp.float32)

    bcomb = jnp.einsum('MPo,MPgoYXl->MPgl', b2, wfc_fold) + bfc         # (3,2,2,L)
    bcomb = bcomb.reshape(n_mod, 2, 1, 2 * L).astype(jnp.float32)

    return {"w1c": w1c, "b1c": b1c, "w2f": w2f, "bcomb": bcomb}


# -------------------------------- forward ----------------------------------- #

def mutual_information_loss_forward(prepared, event, frame, eframe, key,
                                    conv_dtype=jnp.bfloat16):
    """Forward pass of MutualInformationLoss; returns a scalar f32 loss."""
    w1c, b1c = prepared["w1c"], prepared["b1c"]
    w2f, bcomb = prepared["w2f"], prepared["bcomb"]
    B, Cin, H, W = frame.shape
    k, s, p = 4, 2, 1
    H1, W1 = (H + 2 * p - k) // s + 1, (W + 2 * p - k) // s + 1
    L = bcomb.shape[-1] // 2
    n_mod = w1c.shape[0]

    # im2col of the 3 distinct inputs (event, frame, eframe): a single gather, ~50 KiB.
    x = jnp.stack([event, frame, eframe])                               # (3,B,Cin,H,W)
    xp = jnp.pad(x, ((0, 0), (0, 0), (0, 0), (p, p), (p, p)))
    rows = (s * jnp.arange(H1))[:, None, None, None] + jnp.arange(k)[None, None, :, None]
    cols = (s * jnp.arange(W1))[None, :, None, None] + jnp.arange(k)[None, None, None, :]
    patches = xp[:, :, :, rows, cols]                                   # (3,B,Cin,H1,W1,k,k)
    patches = patches.transpose(0, 1, 3, 4, 2, 5, 6)                    # (3,B,H1,W1,Cin,k,k)
    xcol = patches.reshape(3, B * H1 * W1, Cin * k * k).astype(conv_dtype)

    # torch.randn_like(std) -> deterministic jax.random draw fed to the kernel.
    eps = jax.random.normal(key, (n_mod, 2, B, L), jnp.float32)

    vmem = pl.BlockSpec(memory_space=pltpu.MemorySpace.VMEM)
    out = pl.pallas_call(
        _mi_fused_kernel,
        out_shape=jax.ShapeDtypeStruct((1, 1), jnp.float32),
        in_specs=[vmem] * 6,
        out_specs=vmem,
    )(xcol, w1c, b1c, w2f, bcomb, eps)
    return out[0, 0]


# ------------------------------- param init --------------------------------- #

def init_mutual_info_reg_params(key, input_channels, channels, latent_size=4):
    ks = jax.random.split(key, 12)
    feat = channels * 1 * 32 * 32

    def conv_w(k_, cout, cin):
        return 0.1 * jax.random.normal(k_, (cout, cin, 4, 4), jnp.float32)

    def lin_w(k_, fin, fout):
        return 0.02 * jax.random.normal(k_, (fin, fout), jnp.float32)

    return {
        "w1": conv_w(ks[0], channels, input_channels),
        "b1": 0.01 * jax.random.normal(ks[1], (channels,), jnp.float32),
        "w2": conv_w(ks[2], channels, input_channels),
        "b2": 0.01 * jax.random.normal(ks[3], (channels,), jnp.float32),
        "w3": conv_w(ks[4], channels, channels),
        "b3": 0.01 * jax.random.normal(ks[5], (channels,), jnp.float32),
        "w4": conv_w(ks[6], channels, channels),
        "b4": 0.01 * jax.random.normal(ks[7], (channels,), jnp.float32),
        "fc1_rgb_w": lin_w(ks[8], feat, latent_size),
        "fc1_rgb_b": jnp.zeros((latent_size,), jnp.float32),
        "fc2_rgb_w": lin_w(ks[9], feat, latent_size),
        "fc2_rgb_b": jnp.zeros((latent_size,), jnp.float32),
        "fc1_depth_w": lin_w(ks[10], feat, latent_size),
        "fc1_depth_b": jnp.zeros((latent_size,), jnp.float32),
        "fc2_depth_w": lin_w(ks[11], feat, latent_size),
        "fc2_depth_b": jnp.zeros((latent_size,), jnp.float32),
    }


# ---------------------------------- main ------------------------------------ #

if __name__ == "__main__":
    key = jax.random.PRNGKey(0)
    k_ev, k_fr, k_ef, k_p1, k_p2, k_p3, k_eps = jax.random.split(key, 7)

    B, C_in, H, W = 2, 4, 16, 16
    channels = 4

    event = jax.random.normal(k_ev, (B, C_in, H, W), jnp.float32)
    frame = jax.random.normal(k_fr, (B, C_in, H, W), jnp.float32)
    eframe = jax.random.normal(k_ef, (B, C_in, H, W), jnp.float32)

    params_all = {
        "frame_event": init_mutual_info_reg_params(k_p1, C_in, channels),
        "frame_eframe": init_mutual_info_reg_params(k_p2, C_in, channels),
        "event_eframe": init_mutual_info_reg_params(k_p3, C_in, channels),
    }

    # One-time parameter folding (kept OUT of the per-step jitted forward graph).
    prepared = prepare_mutual_info_params(params_all, image_hw=(H, W))

    fwd = jax.jit(mutual_information_loss_forward)
    loss = fwd(prepared, event, frame, eframe, k_eps)
    loss = jax.block_until_ready(loss)

    assert loss.shape == () and bool(jnp.isfinite(loss))
    print("KERNEL_OK")
</pallas_src>

<mosaic_0001>
module attributes {stable_mosaic.version = 11 : i64} {
  func.func @_mi_fused_kernel(%arg0: memref<3x128x64xbf16, #tpu.memory_space<vmem>>, %arg1: memref<3x2x64x4xbf16, #tpu.memory_space<vmem>>, %arg2: memref<3x2x1x4xf32, #tpu.memory_space<vmem>>, %arg3: memref<3x2x4x64x8xf32, #tpu.memory_space<vmem>>, %arg4: memref<3x2x1x8xf32, #tpu.memory_space<vmem>>, %arg5: memref<3x2x2x4xf32, #tpu.memory_space<vmem>>, %arg6: memref<1x1xf32, #tpu.memory_space<vmem>>) attributes {dimension_semantics = [], scalar_prefetch = 0 : i64, scratch_operands = 0 : i64, tpu.core_type = #tpu.core_type<tc>} {
    %c1 = arith.constant 1 : index
    %c0 = arith.constant 0 : index
    %c0_0 = arith.constant 0 : index
    %0 = vector.load %arg0[%c1, %c0, %c0_0] : memref<3x128x64xbf16, #tpu.memory_space<vmem>>, vector<1x128x64xbf16>
    %1 = vector.shape_cast %0 : vector<1x128x64xbf16> to vector<128x64xbf16>
    %c0_1 = arith.constant 0 : index
    %c0_2 = arith.constant 0 : index
    %c0_3 = arith.constant 0 : index
    %c0_4 = arith.constant 0 : index
    %2 = vector.load %arg1[%c0_1, %c0_2, %c0_3, %c0_4] : memref<3x2x64x4xbf16, #tpu.memory_space<vmem>>, vector<1x1x64x4xbf16>
    %3 = vector.shape_cast %2 : vector<1x1x64x4xbf16> to vector<64x4xbf16>
    %cst = arith.constant dense<0.000000e+00> : vector<128x4xf32>
    %4 = tpu.matmul %1, %3, %cst {dimension_numbers = #tpu.dot_dimension_numbers<[1], [0], [0], [1], [0, 0, 1, 1], [], []>} : vector<128x64xbf16>, vector<64x4xbf16>, vector<128x4xf32> -> vector<128x4xf32>
    %c0_5 = arith.constant 0 : index
    %c0_6 = arith.constant 0 : index
    %c0_7 = arith.constant 0 : index
    %c0_8 = arith.constant 0 : index
    %5 = vector.load %arg2[%c0_5, %c0_6, %c0_7, %c0_8] : memref<3x2x1x4xf32, #tpu.memory_space<vmem>>, vector<1x1x1x4xf32>
    %6 = vector.shape_cast %5 : vector<1x1x1x4xf32> to vector<1x4xf32>
    %7 = vector.broadcast %6 : vector<1x4xf32> to vector<128x4xf32>
    %8 = arith.addf %4, %7 : vector<128x4xf32>
    %cst_9 = arith.constant 0.00999999977 : f32
    %9 = vector.broadcast %cst_9 : f32 to vector<128x4xf32>
    %10 = arith.mulf %9, %8 : vector<128x4xf32>
    %11 = arith.maximumf %8, %10 : vector<128x4xf32>
    %12 = vector.extract_strided_slice %11 {offsets = [0, 0], sizes = [64, 4], strides = [1, 1]} : vector<128x4xf32> to vector<64x4xf32>
    %13 = vector.extract_strided_slice %12 {offsets = [0, 0], sizes = [64, 1], strides = [1, 1]} : vector<64x4xf32> to vector<64x1xf32>
    %c0_10 = arith.constant 0 : index
    %c0_11 = arith.constant 0 : index
    %c0_12 = arith.constant 0 : index
    %c0_13 = arith.constant 0 : index
    %c0_14 = arith.constant 0 : index
    %14 = vector.load %arg3[%c0_10, %c0_11, %c0_12, %c0_13, %c0_14] : memref<3x2x4x64x8xf32, #tpu.memory_space<vmem>>, vector<1x1x1x64x8xf32>
    %15 = vector.shape_cast %14 : vector<1x1x1x64x8xf32> to vector<64x8xf32>
    %16 = vector.broadcast %13 : vector<64x1xf32> to vector<64x8xf32>
    %17 = arith.mulf %16, %15 : vector<64x8xf32>
    %18 = vector.extract_strided_slice %12 {offsets = [0, 1], sizes = [64, 1], strides = [1, 1]} : vector<64x4xf32> to vector<64x1xf32>
    %c0_15 = arith.constant 0 : index
    %c0_16 = arith.constant 0 : index
    %c1_17 = arith.constant 1 : index
    %c0_18 = arith.constant 0 : index
    %c0_19 = arith.constant 0 : index
    %19 = vector.load %arg3[%c0_15, %c0_16, %c1_17, %c0_18, %c0_19] : memref<3x2x4x64x8xf32, #tpu.memory_space<vmem>>, vector<1x1x1x64x8xf32>
    %20 = vector.shape_cast %19 : vector<1x1x1x64x8xf32> to vector<64x8xf32>
    %21 = vector.broadcast %18 : vector<64x1xf32> to vector<64x8xf32>
    %22 = arith.mulf %21, %20 : vector<64x8xf32>
    %23 = arith.addf %17, %22 : vector<64x8xf32>
    %24 = vector.extract_strided_slice %12 {offsets = [0, 2], sizes = [64, 1], strides = [1, 1]} : vector<64x4xf32> to vector<64x1xf32>
    %c0_20 = arith.constant 0 : index
    %c0_21 = arith.constant 0 : index
    %c2 = arith.constant 2 : index
    %c0_22 = arith.constant 0 : index
    %c0_23 = arith.constant 0 : index
    %25 = vector.load %arg3[%c0_20, %c0_21, %c2, %c0_22, %c0_23] : memref<3x2x4x64x8xf32, #tpu.memory_space<vmem>>, vector<1x1x1x64x8xf32>
    %26 = vector.shape_cast %25 : vector<1x1x1x64x8xf32> to vector<64x8xf32>
    %27 = vector.broadcast %24 : vector<64x1xf32> to vector<64x8xf32>
    %28 = arith.mulf %27, %26 : vector<64x8xf32>
    %29 = arith.addf %23, %28 : vector<64x8xf32>
    %30 = vector.extract_strided_slice %12 {offsets = [0, 3], sizes = [64, 1], strides = [1, 1]} : vector<64x4xf32> to vector<64x1xf32>
    %c0_24 = arith.constant 0 : index
    %c0_25 = arith.constant 0 : index
    %c3 = arith.constant 3 : index
    %c0_26 = arith.constant 0 : index
    %c0_27 = arith.constant 0 : index
    %31 = vector.load %arg3[%c0_24, %c0_25, %c3, %c0_26, %c0_27] : memref<3x2x4x64x8xf32, #tpu.memory_space<vmem>>, vector<1x1x1x64x8xf32>
    %32 = vector.shape_cast %31 : vector<1x1x1x64x8xf32> to vector<64x8xf32>
    %33 = vector.broadcast %30 : vector<64x1xf32> to vector<64x8xf32>
    %34 = arith.mulf %33, %32 : vector<64x8xf32>
    %35 = arith.addf %29, %34 : vector<64x8xf32>
    %cst_28 = arith.constant dense<0.000000e+00> : vector<8xf32>
    %36 = vector.multi_reduction <add>, %35, %cst_28 [0] : vector<64x8xf32> to vector<8xf32>
    %37 = vector.shape_cast %36 : vector<8xf32> to vector<1x8xf32>
    %38 = vector.extract_strided_slice %11 {offsets = [64, 0], sizes = [64, 4], strides = [1, 1]} : vector<128x4xf32> to vector<64x4xf32>
    %39 = vector.extract_strided_slice %38 {offsets = [0, 0], sizes = [64, 1], strides = [1, 1]} : vector<64x4xf32> to vector<64x1xf32>
    %c0_29 = arith.constant 0 : index
    %c0_30 = arith.constant 0 : index
    %c0_31 = arith.constant 0 : index
    %c0_32 = arith.constant 0 : index
    %c0_33 = arith.constant 0 : index
    %40 = vector.load %arg3[%c0_29, %c0_30, %c0_31, %c0_32, %c0_33] : memref<3x2x4x64x8xf32, #tpu.memory_space<vmem>>, vector<1x1x1x64x8xf32>
    %41 = vector.shape_cast %40 : vector<1x1x1x64x8xf32> to vector<64x8xf32>
    %42 = vector.broadcast %39 : vector<64x1xf32> to vector<64x8xf32>
    %43 = arith.mulf %42, %41 : vector<64x8xf32>
    %44 = vector.extract_strided_slice %38 {offsets = [0, 1], sizes = [64, 1], strides = [1, 1]} : vector<64x4xf32> to vector<64x1xf32>
    %c0_34 = arith.constant 0 : index
    %c0_35 = arith.constant 0 : index
    %c1_36 = arith.constant 1 : index
    %c0_37 = arith.constant 0 : index
    %c0_38 = arith.constant 0 : index
    %45 = vector.load %arg3[%c0_34, %c0_35, %c1_36, %c0_37, %c0_38] : memref<3x2x4x64x8xf32, #tpu.memory_space<vmem>>, vector<1x1x1x64x8xf32>
    %46 = vector.shape_cast %45 : vector<1x1x1x64x8xf32> to vector<64x8xf32>
    %47 = vector.broadcast %44 : vector<64x1xf32> to vector<64x8xf32>
    %48 = arith.mulf %47, %46 : vector<64x8xf32>
    %49 = arith.addf %43, %48 : vector<64x8xf32>
    %50 = vector.extract_strided_slice %38 {offsets = [0, 2], sizes = [64, 1], strides = [1, 1]} : vector<64x4xf32> to vector<64x1xf32>
    %c0_39 = arith.constant 0 : index
    %c0_40 = arith.constant 0 : index
    %c2_41 = arith.constant 2 : index
    %c0_42 = arith.constant 0 : index
    %c0_43 = arith.constant 0 : index
    %51 = vector.load %arg3[%c0_39, %c0_40, %c2_41, %c0_42, %c0_43] : memref<3x2x4x64x8xf32, #tpu.memory_space<vmem>>, vector<1x1x1x64x8xf32>
    %52 = vector.shape_cast %51 : vector<1x1x1x64x8xf32> to vector<64x8xf32>
    %53 = vector.broadcast %50 : vector<64x1xf32> to vector<64x8xf32>
    %54 = arith.mulf %53, %52 : vector<64x8xf32>
    %55 = arith.addf %49, %54 : vector<64x8xf32>
    %56 = vector.extract_strided_slice %38 {offsets = [0, 3], sizes = [64, 1], strides = [1, 1]} : vector<64x4xf32> to vector<64x1xf32>
    %c0_44 = arith.constant 0 : index
    %c0_45 = arith.constant 0 : index
    %c3_46 = arith.constant 3 : index
    %c0_47 = arith.constant 0 : index
    %c0_48 = arith.constant 0 : index
    %57 = vector.load %arg3[%c0_44, %c0_45, %c3_46, %c0_47, %c0_48] : memref<3x2x4x64x8xf32, #tpu.memory_space<vmem>>, vector<1x1x1x64x8xf32>
    %58 = vector.shape_cast %57 : vector<1x1x1x64x8xf32> to vector<64x8xf32>
    %59 = vector.broadcast %56 : vector<64x1xf32> to vector<64x8xf32>
    %60 = arith.mulf %59, %58 : vector<64x8xf32>
    %61 = arith.addf %55, %60 : vector<64x8xf32>
    %cst_49 = arith.constant dense<0.000000e+00> : vector<8xf32>
    %62 = vector.multi_reduction <add>, %61, %cst_49 [0] : vector<64x8xf32> to vector<8xf32>
    %63 = vector.shape_cast %62 : vector<8xf32> to vector<1x8xf32>
    %64 = tpu.concatenate %37, %63 in 0 : vector<1x8xf32>, vector<1x8xf32> -> vector<2x8xf32>
    %c0_50 = arith.constant 0 : index
    %c0_51 = arith.constant 0 : index
    %c0_52 = arith.constant 0 : index
    %c0_53 = arith.constant 0 : index
    %65 = vector.load %arg4[%c0_50, %c0_51, %c0_52, %c0_53] : memref<3x2x1x8xf32, #tpu.memory_space<vmem>>, vector<1x1x1x8xf32>
    %66 = vector.shape_cast %65 : vector<1x1x1x8xf32> to vector<1x8xf32>
    %67 = vector.broadcast %66 : vector<1x8xf32> to vector<2x8xf32>
    %68 = arith.addf %64, %67 : vector<2x8xf32>
    %69 = vector.extract_strided_slice %68 {offsets = [0, 0], sizes = [2, 4], strides = [1, 1]} : vector<2x8xf32> to vector<2x4xf32>
    %70 = math.tanh %69 : vector<2x4xf32>
    %71 = vector.extract_strided_slice %68 {offsets = [0, 4], sizes = [2, 4], strides = [1, 1]} : vector<2x8xf32> to vector<2x4xf32>
    %72 = math.tanh %71 : vector<2x4xf32>
    %c0_54 = arith.constant 0 : index
    %c0_55 = arith.constant 0 : index
    %c0_56 = arith.constant 0 : index
    %c0_57 = arith.constant 0 : index
    %73 = vector.load %arg5[%c0_54, %c0_55, %c0_56, %c0_57] : memref<3x2x2x4xf32, #tpu.memory_space<vmem>>, vector<1x1x2x4xf32>
    %74 = vector.shape_cast %73 : vector<1x1x2x4xf32> to vector<2x4xf32>
    %cst_58 = arith.constant 5.000000e-01 : f32
    %75 = vector.broadcast %cst_58 : f32 to vector<2x4xf32>
    %76 = arith.mulf %75, %72 : vector<2x4xf32>
    %77 = math.exp %76 : vector<2x4xf32>
    %78 = arith.mulf %74, %77 : vector<2x4xf32>
    %79 = arith.addf %70, %78 : vector<2x4xf32>
    %c0_59 = arith.constant 0 : index
    %c0_60 = arith.constant 0 : index
    %c0_61 = arith.constant 0 : index
    %80 = vector.load %arg0[%c0_59, %c0_60, %c0_61] : memref<3x128x64xbf16, #tpu.memory_space<vmem>>, vector<1x128x64xbf16>
    %81 = vector.shape_cast %80 : vector<1x128x64xbf16> to vector<128x64xbf16>
    %c0_62 = arith.constant 0 : index
    %c1_63 = arith.constant 1 : index
    %c0_64 = arith.constant 0 : index
    %c0_65 = arith.constant 0 : index
    %82 = vector.load %arg1[%c0_62, %c1_63, %c0_64, %c0_65] : memref<3x2x64x4xbf16, #tpu.memory_space<vmem>>, vector<1x1x64x4xbf16>
    %83 = vector.shape_cast %82 : vector<1x1x64x4xbf16> to vector<64x4xbf16>
    %cst_66 = arith.constant dense<0.000000e+00> : vector<128x4xf32>
    %84 = tpu.matmul %81, %83, %cst_66 {dimension_numbers = #tpu.dot_dimension_numbers<[1], [0], [0], [1], [0, 0, 1, 1], [], []>} : vector<128x64xbf16>, vector<64x4xbf16>, vector<128x4xf32> -> vector<128x4xf32>
    %c0_67 = arith.constant 0 : index
    %c1_68 = arith.constant 1 : index
    %c0_69 = arith.constant 0 : index
    %c0_70 = arith.constant 0 : index
    %85 = vector.load %arg2[%c0_67, %c1_68, %c0_69, %c0_70] : memref<3x2x1x4xf32, #tpu.memory_space<vmem>>, vector<1x1x1x4xf32>
    %86 = vector.shape_cast %85 : vector<1x1x1x4xf32> to vector<1x4xf32>
    %87 = vector.broadcast %86 : vector<1x4xf32> to vector<128x4xf32>
    %88 = arith.addf %84, %87 : vector<128x4xf32>
    %cst_71 = arith.constant 0.00999999977 : f32
    %89 = vector.broadcast %cst_71 : f32 to vector<128x4xf32>
    %90 = arith.mulf %89, %88 : vector<128x4xf32>
    %91 = arith.maximumf %88, %90 : vector<128x4xf32>
    %92 = vector.extract_strided_slice %91 {offsets = [0, 0], sizes = [64, 4], strides = [1, 1]} : vector<128x4xf32> to vector<64x4xf32>
    %93 = vector.extract_strided_slice %92 {offsets = [0, 0], sizes = [64, 1], strides = [1, 1]} : vector<64x4xf32> to vector<64x1xf32>
    %c0_72 = arith.constant 0 : index
    %c1_73 = arith.constant 1 : index
    %c0_74 = arith.constant 0 : index
    %c0_75 = arith.constant 0 : index
    %c0_76 = arith.constant 0 : index
    %94 = vector.load %arg3[%c0_72, %c1_73, %c0_74, %c0_75, %c0_76] : memref<3x2x4x64x8xf32, #tpu.memory_space<vmem>>, vector<1x1x1x64x8xf32>
    %95 = vector.shape_cast %94 : vector<1x1x1x64x8xf32> to vector<64x8xf32>
    %96 = vector.broadcast %93 : vector<64x1xf32> to vector<64x8xf32>
    %97 = arith.mulf %96, %95 : vector<64x8xf32>
    %98 = vector.extract_strided_slice %92 {offsets = [0, 1], sizes = [64, 1], strides = [1, 1]} : vector<64x4xf32> to vector<64x1xf32>
    %c0_77 = arith.constant 0 : index
    %c1_78 = arith.constant 1 : index
    %c1_79 = arith.constant 1 : index
    %c0_80 = arith.constant 0 : index
    %c0_81 = arith.constant 0 : index
    %99 = vector.load %arg3[%c0_77, %c1_78, %c1_79, %c0_80, %c0_81] : memref<3x2x4x64x8xf32, #tpu.memory_space<vmem>>, vector<1x1x1x64x8xf32>
    %100 = vector.shape_cast %99 : vector<1x1x1x64x8xf32> to vector<64x8xf32>
    %101 = vector.broadcast %98 : vector<64x1xf32> to vector<64x8xf32>
    %102 = arith.mulf %101, %100 : vector<64x8xf32>
    %103 = arith.addf %97, %102 : vector<64x8xf32>
    %104 = vector.extract_strided_slice %92 {offsets = [0, 2], sizes = [64, 1], strides = [1, 1]} : vector<64x4xf32> to vector<64x1xf32>
    %c0_82 = arith.constant 0 : index
    %c1_83 = arith.constant 1 : index
    %c2_84 = arith.constant 2 : index
    %c0_85 = arith.constant 0 : index
    %c0_86 = arith.constant 0 : index
    %105 = vector.load %arg3[%c0_82, %c1_83, %c2_84, %c0_85, %c0_86] : memref<3x2x4x64x8xf32, #tpu.memory_space<vmem>>, vector<1x1x1x64x8xf32>
    %106 = vector.shape_cast %105 : vector<1x1x1x64x8xf32> to vector<64x8xf32>
    %107 = vector.broadcast %104 : vector<64x1xf32> to vector<64x8xf32>
    %108 = arith.mulf %107, %106 : vector<64x8xf32>
    %109 = arith.addf %103, %108 : vector<64x8xf32>
    %110 = vector.extract_strided_slice %92 {offsets = [0, 3], sizes = [64, 1], strides = [1, 1]} : vector<64x4xf32> to vector<64x1xf32>
    %c0_87 = arith.constant 0 : index
    %c1_88 = arith.constant 1 : index
    %c3_89 = arith.constant 3 : index
    %c0_90 = arith.constant 0 : index
    %c0_91 = arith.constant 0 : index
    %111 = vector.load %arg3[%c0_87, %c1_88, %c3_89, %c0_90, %c0_91] : memref<3x2x4x64x8xf32, #tpu.memory_space<vmem>>, vector<1x1x1x64x8xf32>
    %112 = vector.shape_cast %111 : vector<1x1x1x64x8xf32> to vector<64x8xf32>
    %113 = vector.broadcast %110 : vector<64x1xf32> to vector<64x8xf32>
    %114 = arith.mulf %113, %112 : vector<64x8xf32>
    %115 = arith.addf %109, %114 : vector<64x8xf32>
    %cst_92 = arith.constant dense<0.000000e+00> : vector<8xf32>
    %116 = vector.multi_reduction <add>, %115, %cst_92 [0] : vector<64x8xf32> to vector<8xf32>
    %117 = vector.shape_cast %116 : vector<8xf32> to vector<1x8xf32>
    %118 = vector.extract_strided_slice %91 {offsets = [64, 0], sizes = [64, 4], strides = [1, 1]} : vector<128x4xf32> to vector<64x4xf32>
    %119 = vector.extract_strided_slice %118 {offsets = [0, 0], sizes = [64, 1], strides = [1, 1]} : vector<64x4xf32> to vector<64x1xf32>
    %c0_93 = arith.constant 0 : index
    %c1_94 = arith.constant 1 : index
    %c0_95 = arith.constant 0 : index
    %c0_96 = arith.constant 0 : index
    %c0_97 = arith.constant 0 : index
    %120 = vector.load %arg3[%c0_93, %c1_94, %c0_95, %c0_96, %c0_97] : memref<3x2x4x64x8xf32, #tpu.memory_space<vmem>>, vector<1x1x1x64x8xf32>
    %121 = vector.shape_cast %120 : vector<1x1x1x64x8xf32> to vector<64x8xf32>
    %122 = vector.broadcast %119 : vector<64x1xf32> to vector<64x8xf32>
    %123 = arith.mulf %122, %121 : vector<64x8xf32>
    %124 = vector.extract_strided_slice %118 {offsets = [0, 1], sizes = [64, 1], strides = [1, 1]} : vector<64x4xf32> to vector<64x1xf32>
    %c0_98 = arith.constant 0 : index
    %c1_99 = arith.constant 1 : index
    %c1_100 = arith.constant 1 : index
    %c0_101 = arith.constant 0 : index
    %c0_102 = arith.constant 0 : index
    %125 = vector.load %arg3[%c0_98, %c1_99, %c1_100, %c0_101, %c0_102] : memref<3x2x4x64x8xf32, #tpu.memory_space<vmem>>, vector<1x1x1x64x8xf32>
    %126 = vector.shape_cast %125 : vector<1x1x1x64x8xf32> to vector<64x8xf32>
    %127 = vector.broadcast %124 : vector<64x1xf32> to vector<64x8xf32>
    %128 = arith.mulf %127, %126 : vector<64x8xf32>
    %129 = arith.addf %123, %128 : vector<64x8xf32>
    %130 = vector.extract_strided_slice %118 {offsets = [0, 2], sizes = [64, 1], strides = [1, 1]} : vector<64x4xf32> to vector<64x1xf32>
    %c0_103 = arith.constant 0 : index
    %c1_104 = arith.constant 1 : index
    %c2_105 = arith.constant 2 : index
    %c0_106 = arith.constant 0 : index
    %c0_107 = arith.constant 0 : index
    %131 = vector.load %arg3[%c0_103, %c1_104, %c2_105, %c0_106, %c0_107] : memref<3x2x4x64x8xf32, #tpu.memory_space<vmem>>, vector<1x1x1x64x8xf32>
    %132 = vector.shape_cast %131 : vector<1x1x1x64x8xf32> to vector<64x8xf32>
    %133 = vector.broadcast %130 : vector<64x1xf32> to vector<64x8xf32>
    %134 = arith.mulf %133, %132 : vector<64x8xf32>
    %135 = arith.addf %129, %134 : vector<64x8xf32>
    %136 = vector.extract_strided_slice %118 {offsets = [0, 3], sizes = [64, 1], strides = [1, 1]} : vector<64x4xf32> to vector<64x1xf32>
    %c0_108 = arith.constant 0 : index
    %c1_109 = arith.constant 1 : index
    %c3_110 = arith.constant 3 : index
    %c0_111 = arith.constant 0 : index
    %c0_112 = arith.constant 0 : index
    %137 = vector.load %arg3[%c0_108, %c1_109, %c3_110, %c0_111, %c0_112] : memref<3x2x4x64x8xf32, #tpu.memory_space<vmem>>, vector<1x1x1x64x8xf32>
    %138 = vector.shape_cast %137 : vector<1x1x1x64x8xf32> to vector<64x8xf32>
    %139 = vector.broadcast %136 : vector<64x1xf32> to vector<64x8xf32>
    %140 = arith.mulf %139, %138 : vector<64x8xf32>
    %141 = arith.addf %135, %140 : vector<64x8xf32>
    %cst_113 = arith.constant dense<0.000000e+00> : vector<8xf32>
    %142 = vector.multi_reduction <add>, %141, %cst_113 [0] : vector<64x8xf32> to vector<8xf32>
    %143 = vector.shape_cast %142 : vector<8xf32> to vector<1x8xf32>
    %144 = tpu.concatenate %117, %143 in 0 : vector<1x8xf32>, vector<1x8xf32> -> vector<2x8xf32>
    %c0_114 = arith.constant 0 : index
    %c1_115 = arith.constant 1 : index
    %c0_116 = arith.constant 0 : index
    %c0_117 = arith.constant 0 : index
    %145 = vector.load %arg4[%c0_114, %c1_115, %c0_116, %c0_117] : memref<3x2x1x8xf32, #tpu.memory_space<vmem>>, vector<1x1x1x8xf32>
    %146 = vector.shape_cast %145 : vector<1x1x1x8xf32> to vector<1x8xf32>
    %147 = vector.broadcast %146 : vector<1x8xf32> to vector<2x8xf32>
    %148 = arith.addf %144, %147 : vector<2x8xf32>
    %149 = vector.extract_strided_slice %148 {offsets = [0, 0], sizes = [2, 4], strides = [1, 1]} : vector<2x8xf32> to vector<2x4xf32>
    %150 = math.tanh %149 : vector<2x4xf32>
    %151 = vector.extract_strided_slice %148 {offsets = [0, 4], sizes = [2, 4], strides = [1, 1]} : vector<2x8xf32> to vector<2x4xf32>
    %152 = math.tanh %151 : vector<2x4xf32>
    %c0_118 = arith.constant 0 : index
    %c1_119 = arith.constant 1 : index
    %c0_120 = arith.constant 0 : index
    %c0_121 = arith.constant 0 : index
    %153 = vector.load %arg5[%c0_118, %c1_119, %c0_120, %c0_121] : memref<3x2x2x4xf32, #tpu.memory_space<vmem>>, vector<1x1x2x4xf32>
    %154 = vector.shape_cast %153 : vector<1x1x2x4xf32> to vector<2x4xf32>
    %cst_122 = arith.constant 5.000000e-01 : f32
    %155 = vector.broadcast %cst_122 : f32 to vector<2x4xf32>
    %156 = arith.mulf %155, %152 : vector<2x4xf32>
    %157 = math.exp %156 : vector<2x4xf32>
    %158 = arith.mulf %154, %157 : vector<2x4xf32>
    %159 = arith.addf %150, %158 : vector<2x4xf32>
    %cst_123 = arith.constant 2.000000e+00 : f32
    %160 = vector.broadcast %cst_123 : f32 to vector<2x4xf32>
    %161 = arith.mulf %160, %72 : vector<2x4xf32>
    %162 = math.exp %161 : vector<2x4xf32>
    %cst_124 = arith.constant 2.000000e+00 : f32
    %163 = vector.broadcast %cst_124 : f32 to vector<2x4xf32>
    %164 = arith.mulf %163, %152 : vector<2x4xf32>
    %165 = math.exp %164 : vector<2x4xf32>
    %166 = arith.subf %152, %72 : vector<2x4xf32>
    %167 = arith.subf %70, %150 : vector<2x4xf32>
    %168 = arith.mulf %167, %167 : vector<2x4xf32>
    %169 = arith.addf %162, %168 : vector<2x4xf32>
    %cst_125 = arith.constant 2.000000e+00 : f32
    %170 = vector.broadcast %cst_125 : f32 to vector<2x4xf32>
    %171 = arith.mulf %170, %165 : vector<2x4xf32>
    %172 = arith.divf %169, %171 : vector<2x4xf32>
    %173 = arith.addf %166, %172 : vector<2x4xf32>
    %cst_126 = arith.constant 5.000000e-01 : f32
    %174 = vector.broadcast %cst_126 : f32 to vector<2x4xf32>
    %175 = arith.subf %173, %174 : vector<2x4xf32>
    %cst_127 = arith.constant dense<0.000000e+00> : vector<2xf32>
    %176 = vector.multi_reduction <add>, %175, %cst_127 [1] : vector<2x4xf32> to vector<2xf32>
    %177 = vector.shape_cast %176 : vector<2xf32> to vector<2x1xf32>
    %cst_128 = arith.constant dense<0.000000e+00> : vector<1xf32>
    %178 = vector.multi_reduction <add>, %177, %cst_128 [0] : vector<2x1xf32> to vector<1xf32>
    %179 = vector.shape_cast %178 : vector<1xf32> to vector<1x1xf32>
    %cst_129 = arith.constant 2.000000e+00 : f32
    %180 = vector.broadcast %cst_129 : f32 to vector<1x1xf32>
    %181 = arith.divf %179, %180 : vector<1x1xf32>
    %cst_130 = arith.constant 2.000000e+00 : f32
    %182 = vector.broadcast %cst_130 : f32 to vector<2x4xf32>
    %183 = arith.mulf %182, %152 : vector<2x4xf32>
    %184 = math.exp %183 : vector<2x4xf32>
    %cst_131 = arith.constant 2.000000e+00 : f32
    %185 = vector.broadcast %cst_131 : f32 to vector<2x4xf32>
    %186 = arith.mulf %185, %72 : vector<2x4xf32>
    %187 = math.exp %186 : vector<2x4xf32>
    %188 = arith.subf %72, %152 : vector<2x4xf32>
    %189 = arith.subf %150, %70 : vector<2x4xf32>
    %190 = arith.mulf %189, %189 : vector<2x4xf32>
    %191 = arith.addf %184, %190 : vector<2x4xf32>
    %cst_132 = arith.constant 2.000000e+00 : f32
    %192 = vector.broadcast %cst_132 : f32 to vector<2x4xf32>
    %193 = arith.mulf %192, %187 : vector<2x4xf32>
    %194 = arith.divf %191, %193 : vector<2x4xf32>
    %195 = arith.addf %188, %194 : vector<2x4xf32>
    %cst_133 = arith.constant 5.000000e-01 : f32
    %196 = vector.broadcast %cst_133 : f32 to vector<2x4xf32>
    %197 = arith.subf %195, %196 : vector<2x4xf32>
    %cst_134 = arith.constant dense<0.000000e+00> : vector<2xf32>
    %198 = vector.multi_reduction <add>, %197, %cst_134 [1] : vector<2x4xf32> to vector<2xf32>
    %199 = vector.shape_cast %198 : vector<2xf32> to vector<2x1xf32>
    %cst_135 = arith.constant dense<0.000000e+00> : vector<1xf32>
    %200 = vector.multi_reduction <add>, %199, %cst_135 [0] : vector<2x1xf32> to vector<1xf32>
    %201 = vector.shape_cast %200 : vector<1xf32> to vector<1x1xf32>
    %cst_136 = arith.constant 2.000000e+00 : f32
    %202 = vector.broadcast %cst_136 : f32 to vector<1x1xf32>
    %203 = arith.divf %201, %202 : vector<1x1xf32>
    %204 = arith.addf %181, %203 : vector<1x1xf32>
    %cst_137 = arith.constant 0.000000e+00 : f32
    %205 = vector.broadcast %cst_137 : f32 to vector<2x4xf32>
    %206 = arith.subf %205, %79 : vector<2x4xf32>
    %207 = math.exp %206 : vector<2x4xf32>
    %cst_138 = arith.constant 1.000000e+00 : f32
    %208 = vector.broadcast %cst_138 : f32 to vector<2x4xf32>
    %209 = arith.addf %208, %207 : vector<2x4xf32>
    %cst_139 = arith.constant 1.000000e+00 : f32
    %210 = vector.broadcast %cst_139 : f32 to vector<2x4xf32>
    %211 = arith.divf %210, %209 : vector<2x4xf32>
    %cst_140 = arith.constant 0.000000e+00 : f32
    %212 = vector.broadcast %cst_140 : f32 to vector<2x4xf32>
    %213 = arith.subf %212, %159 : vector<2x4xf32>
    %214 = math.exp %213 : vector<2x4xf32>
    %cst_141 = arith.constant 1.000000e+00 : f32
    %215 = vector.broadcast %cst_141 : f32 to vector<2x4xf32>
    %216 = arith.addf %215, %214 : vector<2x4xf32>
    %cst_142 = arith.constant 1.000000e+00 : f32
    %217 = vector.broadcast %cst_142 : f32 to vector<2x4xf32>
    %218 = arith.divf %217, %216 : vector<2x4xf32>
    %cst_143 = arith.constant 0.000000e+00 : f32
    %219 = vector.broadcast %cst_143 : f32 to vector<2x4xf32>
    %220 = arith.subf %219, %79 : vector<2x4xf32>
    %cst_144 = arith.constant 0.000000e+00 : f32
    %221 = vector.broadcast %cst_144 : f32 to vector<2x4xf32>
    %222 = arith.maximumf %220, %221 : vector<2x4xf32>
    %223 = math.absf %220 : vector<2x4xf32>
    %cst_145 = arith.constant 0.000000e+00 : f32
    %224 = vector.broadcast %cst_145 : f32 to vector<2x4xf32>
    %225 = arith.subf %224, %223 : vector<2x4xf32>
    %226 = math.exp %225 : vector<2x4xf32>
    %cst_146 = arith.constant 1.000000e+00 : f32
    %227 = vector.broadcast %cst_146 : f32 to vector<2x4xf32>
    %228 = arith.addf %227, %226 : vector<2x4xf32>
    %229 = math.log %228 : vector<2x4xf32>
    %230 = arith.addf %222, %229 : vector<2x4xf32>
    %231 = arith.mulf %218, %230 : vector<2x4xf32>
    %cst_147 = arith.constant 1.000000e+00 : f32
    %232 = vector.broadcast %cst_147 : f32 to vector<2x4xf32>
    %233 = arith.subf %232, %218 : vector<2x4xf32>
    %cst_148 = arith.constant 0.000000e+00 : f32
    %234 = vector.broadcast %cst_148 : f32 to vector<2x4xf32>
    %235 = arith.maximumf %79, %234 : vector<2x4xf32>
    %236 = math.absf %79 : vector<2x4xf32>
    %cst_149 = arith.constant 0.000000e+00 : f32
    %237 = vector.broadcast %cst_149 : f32 to vector<2x4xf32>
    %238 = arith.subf %237, %236 : vector<2x4xf32>
    %239 = math.exp %238 : vector<2x4xf32>
    %cst_150 = arith.constant 1.000000e+00 : f32
    %240 = vector.broadcast %cst_150 : f32 to vector<2x4xf32>
    %241 = arith.addf %240, %239 : vector<2x4xf32>
    %242 = math.log %241 : vector<2x4xf32>
    %243 = arith.addf %235, %242 : vector<2x4xf32>
    %244 = arith.mulf %233, %243 : vector<2x4xf32>
    %245 = arith.addf %231, %244 : vector<2x4xf32>
    %cst_151 = arith.constant dense<0.000000e+00> : vector<2xf32>
    %246 = vector.multi_reduction <add>, %245, %cst_151 [1] : vector<2x4xf32> to vector<2xf32>
    %247 = vector.shape_cast %246 : vector<2xf32> to vector<2x1xf32>
    %cst_152 = arith.constant dense<0.000000e+00> : vector<1xf32>
    %248 = vector.multi_reduction <add>, %247, %cst_152 [0] : vector<2x1xf32> to vector<1xf32>
    %249 = vector.shape_cast %248 : vector<1xf32> to vector<1x1xf32>
    %cst_153 = arith.constant 0.000000e+00 : f32
    %250 = vector.broadcast %cst_153 : f32 to vector<2x4xf32>
    %251 = arith.subf %250, %159 : vector<2x4xf32>
    %cst_154 = arith.constant 0.000000e+00 : f32
    %252 = vector.broadcast %cst_154 : f32 to vector<2x4xf32>
    %253 = arith.maximumf %251, %252 : vector<2x4xf32>
    %254 = math.absf %251 : vector<2x4xf32>
    %cst_155 = arith.constant 0.000000e+00 : f32
    %255 = vector.broadcast %cst_155 : f32 to vector<2x4xf32>
    %256 = arith.subf %255, %254 : vector<2x4xf32>
    %257 = math.exp %256 : vector<2x4xf32>
    %cst_156 = arith.constant 1.000000e+00 : f32
    %258 = vector.broadcast %cst_156 : f32 to vector<2x4xf32>
    %259 = arith.addf %258, %257 : vector<2x4xf32>
    %260 = math.log %259 : vector<2x4xf32>
    %261 = arith.addf %253, %260 : vector<2x4xf32>
    %262 = arith.mulf %211, %261 : vector<2x4xf32>
    %cst_157 = arith.constant 1.000000e+00 : f32
    %263 = vector.broadcast %cst_157 : f32 to vector<2x4xf32>
    %264 = arith.subf %263, %211 : vector<2x4xf32>
    %cst_158 = arith.constant 0.000000e+00 : f32
    %265 = vector.broadcast %cst_158 : f32 to vector<2x4xf32>
    %266 = arith.maximumf %159, %265 : vector<2x4xf32>
    %267 = math.absf %159 : vector<2x4xf32>
    %cst_159 = arith.constant 0.000000e+00 : f32
    %268 = vector.broadcast %cst_159 : f32 to vector<2x4xf32>
    %269 = arith.subf %268, %267 : vector<2x4xf32>
    %270 = math.exp %269 : vector<2x4xf32>
    %cst_160 = arith.constant 1.000000e+00 : f32
    %271 = vector.broadcast %cst_160 : f32 to vector<2x4xf32>
    %272 = arith.addf %271, %270 : vector<2x4xf32>
    %273 = math.log %272 : vector<2x4xf32>
    %274 = arith.addf %266, %273 : vector<2x4xf32>
    %275 = arith.mulf %264, %274 : vector<2x4xf32>
    %276 = arith.addf %262, %275 : vector<2x4xf32>
    %cst_161 = arith.constant dense<0.000000e+00> : vector<2xf32>
    %277 = vector.multi_reduction <add>, %276, %cst_161 [1] : vector<2x4xf32> to vector<2xf32>
    %278 = vector.shape_cast %277 : vector<2xf32> to vector<2x1xf32>
    %cst_162 = arith.constant dense<0.000000e+00> : vector<1xf32>
    %279 = vector.multi_reduction <add>, %278, %cst_162 [0] : vector<2x1xf32> to vector<1xf32>
    %280 = vector.shape_cast %279 : vector<1xf32> to vector<1x1xf32>
    %281 = arith.addf %249, %280 : vector<1x1xf32>
    %282 = arith.subf %281, %204 : vector<1x1xf32>
    %cst_163 = arith.constant -1.000000e+00 : f32
    %cst_164 = arith.constant 1.000000e+00 : f32
    %283 = vector.broadcast %cst_163 : f32 to vector<1x1xf32>
    %284 = arith.maximumf %283, %282 : vector<1x1xf32>
    %285 = vector.broadcast %cst_164 : f32 to vector<1x1xf32>
    %286 = arith.minimumf %285, %284 : vector<1x1xf32>
    %cst_165 = arith.constant 1.000000e+00 : f32
    %287 = vector.broadcast %cst_165 : f32 to vector<1x1xf32>
    %288 = arith.mulf %287, %286 : vector<1x1xf32>
    %c1_166 = arith.constant 1 : index
    %c0_167 = arith.constant 0 : index
    %c0_168 = arith.constant 0 : index
    %289 = vector.load %arg0[%c1_166, %c0_167, %c0_168] : memref<3x128x64xbf16, #tpu.memory_space<vmem>>, vector<1x128x64xbf16>
    %290 = vector.shape_cast %289 : vector<1x128x64xbf16> to vector<128x64xbf16>
    %c1_169 = arith.constant 1 : index
    %c0_170 = arith.constant 0 : index
    %c0_171 = arith.constant 0 : index
    %c0_172 = arith.constant 0 : index
    %291 = vector.load %arg1[%c1_169, %c0_170, %c0_171, %c0_172] : memref<3x2x64x4xbf16, #tpu.memory_space<vmem>>, vector<1x1x64x4xbf16>
    %292 = vector.shape_cast %291 : vector<1x1x64x4xbf16> to vector<64x4xbf16>
    %cst_173 = arith.constant dense<0.000000e+00> : vector<128x4xf32>
    %293 = tpu.matmul %290, %292, %cst_173 {dimension_numbers = #tpu.dot_dimension_numbers<[1], [0], [0], [1], [0, 0, 1, 1], [], []>} : vector<128x64xbf16>, vector<64x4xbf16>, vector<128x4xf32> -> vector<128x4xf32>
    %c1_174 = arith.constant 1 : index
    %c0_175 = arith.constant 0 : index
    %c0_176 = arith.constant 0 : index
    %c0_177 = arith.constant 0 : index
    %294 = vector.load %arg2[%c1_174, %c0_175, %c0_176, %c0_177] : memref<3x2x1x4xf32, #tpu.memory_space<vmem>>, vector<1x1x1x4xf32>
    %295 = vector.shape_cast %294 : vector<1x1x1x4xf32> to vector<1x4xf32>
    %296 = vector.broadcast %295 : vector<1x4xf32> to vector<128x4xf32>
    %297 = arith.addf %293, %296 : vector<128x4xf32>
    %cst_178 = arith.constant 0.00999999977 : f32
    %298 = vector.broadcast %cst_178 : f32 to vector<128x4xf32>
    %299 = arith.mulf %298, %297 : vector<128x4xf32>
    %300 = arith.maximumf %297, %299 : vector<128x4xf32>
    %301 = vector.extract_strided_slice %300 {offsets = [0, 0], sizes = [64, 4], strides = [1, 1]} : vector<128x4xf32> to vector<64x4xf32>
    %302 = vector.extract_strided_slice %301 {offsets = [0, 0], sizes = [64, 1], strides = [1, 1]} : vector<64x4xf32> to vector<64x1xf32>
    %c1_179 = arith.constant 1 : index
    %c0_180 = arith.constant 0 : index
    %c0_181 = arith.constant 0 : index
    %c0_182 = arith.constant 0 : index
    %c0_183 = arith.constant 0 : index
    %303 = vector.load %arg3[%c1_179, %c0_180, %c0_181, %c0_182, %c0_183] : memref<3x2x4x64x8xf32, #tpu.memory_space<vmem>>, vector<1x1x1x64x8xf32>
    %304 = vector.shape_cast %303 : vector<1x1x1x64x8xf32> to vector<64x8xf32>
    %305 = vector.broadcast %302 : vector<64x1xf32> to vector<64x8xf32>
    %306 = arith.mulf %305, %304 : vector<64x8xf32>
    %307 = vector.extract_strided_slice %301 {offsets = [0, 1], sizes = [64, 1], strides = [1, 1]} : vector<64x4xf32> to vector<64x1xf32>
    %c1_184 = arith.constant 1 : index
    %c0_185 = arith.constant 0 : index
    %c1_186 = arith.constant 1 : index
    %c0_187 = arith.constant 0 : index
    %c0_188 = arith.constant 0 : index
    %308 = vector.load %arg3[%c1_184, %c0_185, %c1_186, %c0_187, %c0_188] : memref<3x2x4x64x8xf32, #tpu.memory_space<vmem>>, vector<1x1x1x64x8xf32>
    %309 = vector.shape_cast %308 : vector<1x1x1x64x8xf32> to vector<64x8xf32>
    %310 = vector.broadcast %307 : vector<64x1xf32> to vector<64x8xf32>
    %311 = arith.mulf %310, %309 : vector<64x8xf32>
    %312 = arith.addf %306, %311 : vector<64x8xf32>
    %313 = vector.extract_strided_slice %301 {offsets = [0, 2], sizes = [64, 1], strides = [1, 1]} : vector<64x4xf32> to vector<64x1xf32>
    %c1_189 = arith.constant 1 : index
    %c0_190 = arith.constant 0 : index
    %c2_191 = arith.constant 2 : index
    %c0_192 = arith.constant 0 : index
    %c0_193 = arith.constant 0 : index
    %314 = vector.load %arg3[%c1_189, %c0_190, %c2_191, %c0_192, %c0_193] : memref<3x2x4x64x8xf32, #tpu.memory_space<vmem>>, vector<1x1x1x64x8xf32>
    %315 = vector.shape_cast %314 : vector<1x1x1x64x8xf32> to vector<64x8xf32>
    %316 = vector.broadcast %313 : vector<64x1xf32> to vector<64x8xf32>
    %317 = arith.mulf %316, %315 : vector<64x8xf32>
    %318 = arith.addf %312, %317 : vector<64x8xf32>
    %319 = vector.extract_strided_slice %301 {offsets = [0, 3], sizes = [64, 1], strides = [1, 1]} : vector<64x4xf32> to vector<64x1xf32>
    %c1_194 = arith.constant 1 : index
    %c0_195 = arith.constant 0 : index
    %c3_196 = arith.constant 3 : index
    %c0_197 = arith.constant 0 : index
    %c0_198 = arith.constant 0 : index
    %320 = vector.load %arg3[%c1_194, %c0_195, %c3_196, %c0_197, %c0_198] : memref<3x2x4x64x8xf32, #tpu.memory_space<vmem>>, vector<1x1x1x64x8xf32>
    %321 = vector.shape_cast %320 : vector<1x1x1x64x8xf32> to vector<64x8xf32>
    %322 = vector.broadcast %319 : vector<64x1xf32> to vector<64x8xf32>
    %323 = arith.mulf %322, %321 : vector<64x8xf32>
    %324 = arith.addf %318, %323 : vector<64x8xf32>
    %cst_199 = arith.constant dense<0.000000e+00> : vector<8xf32>
    %325 = vector.multi_reduction <add>, %324, %cst_199 [0] : vector<64x8xf32> to vector<8xf32>
    %326 = vector.shape_cast %325 : vector<8xf32> to vector<1x8xf32>
    %327 = vector.extract_strided_slice %300 {offsets = [64, 0], sizes = [64, 4], strides = [1, 1]} : vector<128x4xf32> to vector<64x4xf32>
    %328 = vector.extract_strided_slice %327 {offsets = [0, 0], sizes = [64, 1], strides = [1, 1]} : vector<64x4xf32> to vector<64x1xf32>
    %c1_200 = arith.constant 1 : index
    %c0_201 = arith.constant 0 : index
    %c0_202 = arith.constant 0 : index
    %c0_203 = arith.constant 0 : index
    %c0_204 = arith.constant 0 : index
    %329 = vector.load %arg3[%c1_200, %c0_201, %c0_202, %c0_203, %c0_204] : memref<3x2x4x64x8xf32, #tpu.memory_space<vmem>>, vector<1x1x1x64x8xf32>
    %330 = vector.shape_cast %329 : vector<1x1x1x64x8xf32> to vector<64x8xf32>
    %331 = vector.broadcast %328 : vector<64x1xf32> to vector<64x8xf32>
    %332 = arith.mulf %331, %330 : vector<64x8xf32>
    %333 = vector.extract_strided_slice %327 {offsets = [0, 1], sizes = [64, 1], strides = [1, 1]} : vector<64x4xf32> to vector<64x1xf32>
    %c1_205 = arith.constant 1 : index
    %c0_206 = arith.constant 0 : index
    %c1_207 = arith.constant 1 : index
    %c0_208 = arith.constant 0 : index
    %c0_209 = arith.constant 0 : index
    %334 = vector.load %arg3[%c1_205, %c0_206, %c1_207, %c0_208, %c0_209] : memref<3x2x4x64x8xf32, #tpu.memory_space<vmem>>, vector<1x1x1x64x8xf32>
    %335 = vector.shape_cast %334 : vector<1x1x1x64x8xf32> to vector<64x8xf32>
    %336 = vector.broadcast %333 : vector<64x1xf32> to vector<64x8xf32>
    %337 = arith.mulf %336, %335 : vector<64x8xf32>
    %338 = arith.addf %332, %337 : vector<64x8xf32>
    %339 = vector.extract_strided_slice %327 {offsets = [0, 2], sizes = [64, 1], strides = [1, 1]} : vector<64x4xf32> to vector<64x1xf32>
    %c1_210 = arith.constant 1 : index
    %c0_211 = arith.constant 0 : index
    %c2_212 = arith.constant 2 : index
    %c0_213 = arith.constant 0 : index
    %c0_214 = arith.constant 0 : index
    %340 = vector.load %arg3[%c1_210, %c0_211, %c2_212, %c0_213, %c0_214] : memref<3x2x4x64x8xf32, #tpu.memory_space<vmem>>, vector<1x1x1x64x8xf32>
    %341 = vector.shape_cast %340 : vector<1x1x1x64x8xf32> to vector<64x8xf32>
    %342 = vector.broadcast %339 : vector<64x1xf32> to vector<64x8xf32>
    %343 = arith.mulf %342, %341 : vector<64x8xf32>
    %344 = arith.addf %338, %343 : vector<64x8xf32>
    %345 = vector.extract_strided_slice %327 {offsets = [0, 3], sizes = [64, 1], strides = [1, 1]} : vector<64x4xf32> to vector<64x1xf32>
    %c1_215 = arith.constant 1 : index
    %c0_216 = arith.constant 0 : index
    %c3_217 = arith.constant 3 : index
    %c0_218 = arith.constant 0 : index
    %c0_219 = arith.constant 0 : index
    %346 = vector.load %arg3[%c1_215, %c0_216, %c3_217, %c0_218, %c0_219] : memref<3x2x4x64x8xf32, #tpu.memory_space<vmem>>, vector<1x1x1x64x8xf32>
    %347 = vector.shape_cast %346 : vector<1x1x1x64x8xf32> to vector<64x8xf32>
    %348 = vector.broadcast %345 : vector<64x1xf32> to vector<64x8xf32>
    %349 = arith.mulf %348, %347 : vector<64x8xf32>
    %350 = arith.addf %344, %349 : vector<64x8xf32>
    %cst_220 = arith.constant dense<0.000000e+00> : vector<8xf32>
    %351 = vector.multi_reduction <add>, %350, %cst_220 [0] : vector<64x8xf32> to vector<8xf32>
    %352 = vector.shape_cast %351 : vector<8xf32> to vector<1x8xf32>
    %353 = tpu.concatenate %326, %352 in 0 : vector<1x8xf32>, vector<1x8xf32> -> vector<2x8xf32>
    %c1_221 = arith.constant 1 : index
    %c0_222 = arith.constant 0 : index
    %c0_223 = arith.constant 0 : index
    %c0_224 = arith.constant 0 : index
    %354 = vector.load %arg4[%c1_221, %c0_222, %c0_223, %c0_224] : memref<3x2x1x8xf32, #tpu.memory_space<vmem>>, vector<1x1x1x8xf32>
    %355 = vector.shape_cast %354 : vector<1x1x1x8xf32> to vector<1x8xf32>
    %356 = vector.broadcast %355 : vector<1x8xf32> to vector<2x8xf32>
    %357 = arith.addf %353, %356 : vector<2x8xf32>
    %358 = vector.extract_strided_slice %357 {offsets = [0, 0], sizes = [2, 4], strides = [1, 1]} : vector<2x8xf32> to vector<2x4xf32>
    %359 = math.tanh %358 : vector<2x4xf32>
    %360 = vector.extract_strided_slice %357 {offsets = [0, 4], sizes = [2, 4], strides = [1, 1]} : vector<2x8xf32> to vector<2x4xf32>
    %361 = math.tanh %360 : vector<2x4xf32>
    %c1_225 = arith.constant 1 : index
    %c0_226 = arith.constant 0 : index
    %c0_227 = arith.constant 0 : index
    %c0_228 = arith.constant 0 : index
    %362 = vector.load %arg5[%c1_225, %c0_226, %c0_227, %c0_228] : memref<3x2x2x4xf32, #tpu.memory_space<vmem>>, vector<1x1x2x4xf32>
    %363 = vector.shape_cast %362 : vector<1x1x2x4xf32> to vector<2x4xf32>
    %cst_229 = arith.constant 5.000000e-01 : f32
    %364 = vector.broadcast %cst_229 : f32 to vector<2x4xf32>
    %365 = arith.mulf %364, %361 : vector<2x4xf32>
    %366 = math.exp %365 : vector<2x4xf32>
    %367 = arith.mulf %363, %366 : vector<2x4xf32>
    %368 = arith.addf %359, %367 : vector<2x4xf32>
    %c2_230 = arith.constant 2 : index
    %c0_231 = arith.constant 0 : index
    %c0_232 = arith.constant 0 : index
    %369 = vector.load %arg0[%c2_230, %c0_231, %c0_232] : memref<3x128x64xbf16, #tpu.memory_space<vmem>>, vector<1x128x64xbf16>
    %370 = vector.shape_cast %369 : vector<1x128x64xbf16> to vector<128x64xbf16>
    %c1_233 = arith.constant 1 : index
    %c1_234 = arith.constant 1 : index
    %c0_235 = arith.constant 0 : index
    %c0_236 = arith.constant 0 : index
    %371 = vector.load %arg1[%c1_233, %c1_234, %c0_235, %c0_236] : memref<3x2x64x4xbf16, #tpu.memory_space<vmem>>, vector<1x1x64x4xbf16>
    %372 = vector.shape_cast %371 : vector<1x1x64x4xbf16> to vector<64x4xbf16>
    %cst_237 = arith.constant dense<0.000000e+00> : vector<128x4xf32>
    %373 = tpu.matmul %370, %372, %cst_237 {dimension_numbers = #tpu.dot_dimension_numbers<[1], [0], [0], [1], [0, 0, 1, 1], [], []>} : vector<128x64xbf16>, vector<64x4xbf16>, vector<128x4xf32> -> vector<128x4xf32>
    %c1_238 = arith.constant 1 : index
    %c1_239 = arith.constant 1 : index
    %c0_240 = arith.constant 0 : index
    %c0_241 = arith.constant 0 : index
    %374 = vector.load %arg2[%c1_238, %c1_239, %c0_240, %c0_241] : memref<3x2x1x4xf32, #tpu.memory_space<vmem>>, vector<1x1x1x4xf32>
    %375 = vector.shape_cast %374 : vector<1x1x1x4xf32> to vector<1x4xf32>
    %376 = vector.broadcast %375 : vector<1x4xf32> to vector<128x4xf32>
    %377 = arith.addf %373, %376 : vector<128x4xf32>
    %cst_242 = arith.constant 0.00999999977 : f32
    %378 = vector.broadcast %cst_242 : f32 to vector<128x4xf32>
    %379 = arith.mulf %378, %377 : vector<128x4xf32>
    %380 = arith.maximumf %377, %379 : vector<128x4xf32>
    %381 = vector.extract_strided_slice %380 {offsets = [0, 0], sizes = [64, 4], strides = [1, 1]} : vector<128x4xf32> to vector<64x4xf32>
    %382 = vector.extract_strided_slice %381 {offsets = [0, 0], sizes = [64, 1], strides = [1, 1]} : vector<64x4xf32> to vector<64x1xf32>
    %c1_243 = arith.constant 1 : index
    %c1_244 = arith.constant 1 : index
    %c0_245 = arith.constant 0 : index
    %c0_246 = arith.constant 0 : index
    %c0_247 = arith.constant 0 : index
    %383 = vector.load %arg3[%c1_243, %c1_244, %c0_245, %c0_246, %c0_247] : memref<3x2x4x64x8xf32, #tpu.memory_space<vmem>>, vector<1x1x1x64x8xf32>
    %384 = vector.shape_cast %383 : vector<1x1x1x64x8xf32> to vector<64x8xf32>
    %385 = vector.broadcast %382 : vector<64x1xf32> to vector<64x8xf32>
    %386 = arith.mulf %385, %384 : vector<64x8xf32>
    %387 = vector.extract_strided_slice %381 {offsets = [0, 1], sizes = [64, 1], strides = [1, 1]} : vector<64x4xf32> to vector<64x1xf32>
    %c1_248 = arith.constant 1 : index
    %c1_249 = arith.constant 1 : index
    %c1_250 = arith.constant 1 : index
    %c0_251 = arith.constant 0 : index
    %c0_252 = arith.constant 0 : index
    %388 = vector.load %arg3[%c1_248, %c1_249, %c1_250, %c0_251, %c0_252] : memref<3x2x4x64x8xf32, #tpu.memory_space<vmem>>, vector<1x1x1x64x8xf32>
    %389 = vector.shape_cast %388 : vector<1x1x1x64x8xf32> to vector<64x8xf32>
    %390 = vector.broadcast %387 : vector<64x1xf32> to vector<64x8xf32>
    %391 = arith.mulf %390, %389 : vector<64x8xf32>
    %392 = arith.addf %386, %391 : vector<64x8xf32>
    %393 = vector.extract_strided_slice %381 {offsets = [0, 2], sizes = [64, 1], strides = [1, 1]} : vector<64x4xf32> to vector<64x1xf32>
    %c1_253 = arith.constant 1 : index
    %c1_254 = arith.constant 1 : index
    %c2_255 = arith.constant 2 : index
    %c0_256 = arith.constant 0 : index
    %c0_257 = arith.constant 0 : index
    %394 = vector.load %arg3[%c1_253, %c1_254, %c2_255, %c0_256, %c0_257] : memref<3x2x4x64x8xf32, #tpu.memory_space<vmem>>, vector<1x1x1x64x8xf32>
    %395 = vector.shape_cast %394 : vector<1x1x1x64x8xf32> to vector<64x8xf32>
    %396 = vector.broadcast %393 : vector<64x1xf32> to vector<64x8xf32>
    %397 = arith.mulf %396, %395 : vector<64x8xf32>
    %398 = arith.addf %392, %397 : vector<64x8xf32>
    %399 = vector.extract_strided_slice %381 {offsets = [0, 3], sizes = [64, 1], strides = [1, 1]} : vector<64x4xf32> to vector<64x1xf32>
    %c1_258 = arith.constant 1 : index
    %c1_259 = arith.constant 1 : index
    %c3_260 = arith.constant 3 : index
    %c0_261 = arith.constant 0 : index
    %c0_262 = arith.constant 0 : index
    %400 = vector.load %arg3[%c1_258, %c1_259, %c3_260, %c0_261, %c0_262] : memref<3x2x4x64x8xf32, #tpu.memory_space<vmem>>, vector<1x1x1x64x8xf32>
    %401 = vector.shape_cast %400 : vector<1x1x1x64x8xf32> to vector<64x8xf32>
    %402 = vector.broadcast %399 : vector<64x1xf32> to vector<64x8xf32>
    %403 = arith.mulf %402, %401 : vector<64x8xf32>
    %404 = arith.addf %398, %403 : vector<64x8xf32>
    %cst_263 = arith.constant dense<0.000000e+00> : vector<8xf32>
    %405 = vector.multi_reduction <add>, %404, %cst_263 [0] : vector<64x8xf32> to vector<8xf32>
    %406 = vector.shape_cast %405 : vector<8xf32> to vector<1x8xf32>
    %407 = vector.extract_strided_slice %380 {offsets = [64, 0], sizes = [64, 4], strides = [1, 1]} : vector<128x4xf32> to vector<64x4xf32>
    %408 = vector.extract_strided_slice %407 {offsets = [0, 0], sizes = [64, 1], strides = [1, 1]} : vector<64x4xf32> to vector<64x1xf32>
    %c1_264 = arith.constant 1 : index
    %c1_265 = arith.constant 1 : index
    %c0_266 = arith.constant 0 : index
    %c0_267 = arith.constant 0 : index
    %c0_268 = arith.constant 0 : index
    %409 = vector.load %arg3[%c1_264, %c1_265, %c0_266, %c0_267, %c0_268] : memref<3x2x4x64x8xf32, #tpu.memory_space<vmem>>, vector<1x1x1x64x8xf32>
    %410 = vector.shape_cast %409 : vector<1x1x1x64x8xf32> to vector<64x8xf32>
    %411 = vector.broadcast %408 : vector<64x1xf32> to vector<64x8xf32>
    %412 = arith.mulf %411, %410 : vector<64x8xf32>
    %413 = vector.extract_strided_slice %407 {offsets = [0, 1], sizes = [64, 1], strides = [1, 1]} : vector<64x4xf32> to vector<64x1xf32>
    %c1_269 = arith.constant 1 : index
    %c1_270 = arith.constant 1 : index
    %c1_271 = arith.constant 1 : index
    %c0_272 = arith.constant 0 : index
    %c0_273 = arith.constant 0 : index
    %414 = vector.load %arg3[%c1_269, %c1_270, %c1_271, %c0_272, %c0_273] : memref<3x2x4x64x8xf32, #tpu.memory_space<vmem>>, vector<1x1x1x64x8xf32>
    %415 = vector.shape_cast %414 : vector<1x1x1x64x8xf32> to vector<64x8xf32>
    %416 = vector.broadcast %413 : vector<64x1xf32> to vector<64x8xf32>
    %417 = arith.mulf %416, %415 : vector<64x8xf32>
    %418 = arith.addf %412, %417 : vector<64x8xf32>
    %419 = vector.extract_strided_slice %407 {offsets = [0, 2], sizes = [64, 1], strides = [1, 1]} : vector<64x4xf32> to vector<64x1xf32>
    %c1_274 = arith.constant 1 : index
    %c1_275 = arith.constant 1 : index
    %c2_276 = arith.constant 2 : index
    %c0_277 = arith.constant 0 : index
    %c0_278 = arith.constant 0 : index
    %420 = vector.load %arg3[%c1_274, %c1_275, %c2_276, %c0_277, %c0_278] : memref<3x2x4x64x8xf32, #tpu.memory_space<vmem>>, vector<1x1x1x64x8xf32>
    %421 = vector.shape_cast %420 : vector<1x1x1x64x8xf32> to vector<64x8xf32>
    %422 = vector.broadcast %419 : vector<64x1xf32> to vector<64x8xf32>
    %423 = arith.mulf %422, %421 : vector<64x8xf32>
    %424 = arith.addf %418, %423 : vector<64x8xf32>
    %425 = vector.extract_strided_slice %407 {offsets = [0, 3], sizes = [64, 1], strides = [1, 1]} : vector<64x4xf32> to vector<64x1xf32>
    %c1_279 = arith.constant 1 : index
    %c1_280 = arith.constant 1 : index
    %c3_281 = arith.constant 3 : index
    %c0_282 = arith.constant 0 : index
    %c0_283 = arith.constant 0 : index
    %426 = vector.load %arg3[%c1_279, %c1_280, %c3_281, %c0_282, %c0_283] : memref<3x2x4x64x8xf32, #tpu.memory_space<vmem>>, vector<1x1x1x64x8xf32>
    %427 = vector.shape_cast %426 : vector<1x1x1x64x8xf32> to vector<64x8xf32>
    %428 = vector.broadcast %425 : vector<64x1xf32> to vector<64x8xf32>
    %429 = arith.mulf %428, %427 : vector<64x8xf32>
    %430 = arith.addf %424, %429 : vector<64x8xf32>
    %cst_284 = arith.constant dense<0.000000e+00> : vector<8xf32>
    %431 = vector.multi_reduction <add>, %430, %cst_284 [0] : vector<64x8xf32> to vector<8xf32>
    %432 = vector.shape_cast %431 : vector<8xf32> to vector<1x8xf32>
    %433 = tpu.concatenate %406, %432 in 0 : vector<1x8xf32>, vector<1x8xf32> -> vector<2x8xf32>
    %c1_285 = arith.constant 1 : index
    %c1_286 = arith.constant 1 : index
    %c0_287 = arith.constant 0 : index
    %c0_288 = arith.constant 0 : index
    %434 = vector.load %arg4[%c1_285, %c1_286, %c0_287, %c0_288] : memref<3x2x1x8xf32, #tpu.memory_space<vmem>>, vector<1x1x1x8xf32>
    %435 = vector.shape_cast %434 : vector<1x1x1x8xf32> to vector<1x8xf32>
    %436 = vector.broadcast %435 : vector<1x8xf32> to vector<2x8xf32>
    %437 = arith.addf %433, %436 : vector<2x8xf32>
    %438 = vector.extract_strided_slice %437 {offsets = [0, 0], sizes = [2, 4], strides = [1, 1]} : vector<2x8xf32> to vector<2x4xf32>
    %439 = math.tanh %438 : vector<2x4xf32>
    %440 = vector.extract_strided_slice %437 {offsets = [0, 4], sizes = [2, 4], strides = [1, 1]} : vector<2x8xf32> to vector<2x4xf32>
    %441 = math.tanh %440 : vector<2x4xf32>
    %c1_289 = arith.constant 1 : index
    %c1_290 = arith.constant 1 : index
    %c0_291 = arith.constant 0 : index
    %c0_292 = arith.constant 0 : index
    %442 = vector.load %arg5[%c1_289, %c1_290, %c0_291, %c0_292] : memref<3x2x2x4xf32, #tpu.memory_space<vmem>>, vector<1x1x2x4xf32>
    %443 = vector.shape_cast %442 : vector<1x1x2x4xf32> to vector<2x4xf32>
    %cst_293 = arith.constant 5.000000e-01 : f32
    %444 = vector.broadcast %cst_293 : f32 to vector<2x4xf32>
    %445 = arith.mulf %444, %441 : vector<2x4xf32>
    %446 = math.exp %445 : vector<2x4xf32>
    %447 = arith.mulf %443, %446 : vector<2x4xf32>
    %448 = arith.addf %439, %447 : vector<2x4xf32>
    %cst_294 = arith.constant 2.000000e+00 : f32
    %449 = vector.broadcast %cst_294 : f32 to vector<2x4xf32>
    %450 = arith.mulf %449, %361 : vector<2x4xf32>
    %451 = math.exp %450 : vector<2x4xf32>
    %cst_295 = arith.constant 2.000000e+00 : f32
    %452 = vector.broadcast %cst_295 : f32 to vector<2x4xf32>
    %453 = arith.mulf %452, %441 : vector<2x4xf32>
    %454 = math.exp %453 : vector<2x4xf32>
    %455 = arith.subf %441, %361 : vector<2x4xf32>
    %456 = arith.subf %359, %439 : vector<2x4xf32>
    %457 = arith.mulf %456, %456 : vector<2x4xf32>
    %458 = arith.addf %451, %457 : vector<2x4xf32>
    %cst_296 = arith.constant 2.000000e+00 : f32
    %459 = vector.broadcast %cst_296 : f32 to vector<2x4xf32>
    %460 = arith.mulf %459, %454 : vector<2x4xf32>
    %461 = arith.divf %458, %460 : vector<2x4xf32>
    %462 = arith.addf %455, %461 : vector<2x4xf32>
    %cst_297 = arith.constant 5.000000e-01 : f32
    %463 = vector.broadcast %cst_297 : f32 to vector<2x4xf32>
    %464 = arith.subf %462, %463 : vector<2x4xf32>
    %cst_298 = arith.constant dense<0.000000e+00> : vector<2xf32>
    %465 = vector.multi_reduction <add>, %464, %cst_298 [1] : vector<2x4xf32> to vector<2xf32>
    %466 = vector.shape_cast %465 : vector<2xf32> to vector<2x1xf32>
    %cst_299 = arith.constant dense<0.000000e+00> : vector<1xf32>
    %467 = vector.multi_reduction <add>, %466, %cst_299 [0] : vector<2x1xf32> to vector<1xf32>
    %468 = vector.shape_cast %467 : vector<1xf32> to vector<1x1xf32>
    %cst_300 = arith.constant 2.000000e+00 : f32
    %469 = vector.broadcast %cst_300 : f32 to vector<1x1xf32>
    %470 = arith.divf %468, %469 : vector<1x1xf32>
    %cst_301 = arith.constant 2.000000e+00 : f32
    %471 = vector.broadcast %cst_301 : f32 to vector<2x4xf32>
    %472 = arith.mulf %471, %441 : vector<2x4xf32>
    %473 = math.exp %472 : vector<2x4xf32>
    %cst_302 = arith.constant 2.000000e+00 : f32
    %474 = vector.broadcast %cst_302 : f32 to vector<2x4xf32>
    %475 = arith.mulf %474, %361 : vector<2x4xf32>
    %476 = math.exp %475 : vector<2x4xf32>
    %477 = arith.subf %361, %441 : vector<2x4xf32>
    %478 = arith.subf %439, %359 : vector<2x4xf32>
    %479 = arith.mulf %478, %478 : vector<2x4xf32>
    %480 = arith.addf %473, %479 : vector<2x4xf32>
    %cst_303 = arith.constant 2.000000e+00 : f32
    %481 = vector.broadcast %cst_303 : f32 to vector<2x4xf32>
    %482 = arith.mulf %481, %476 : vector<2x4xf32>
    %483 = arith.divf %480, %482 : vector<2x4xf32>
    %484 = arith.addf %477, %483 : vector<2x4xf32>
    %cst_304 = arith.constant 5.000000e-01 : f32
    %485 = vector.broadcast %cst_304 : f32 to vector<2x4xf32>
    %486 = arith.subf %484, %485 : vector<2x4xf32>
    %cst_305 = arith.constant dense<0.000000e+00> : vector<2xf32>
    %487 = vector.multi_reduction <add>, %486, %cst_305 [1] : vector<2x4xf32> to vector<2xf32>
    %488 = vector.shape_cast %487 : vector<2xf32> to vector<2x1xf32>
    %cst_306 = arith.constant dense<0.000000e+00> : vector<1xf32>
    %489 = vector.multi_reduction <add>, %488, %cst_306 [0] : vector<2x1xf32> to vector<1xf32>
    %490 = vector.shape_cast %489 : vector<1xf32> to vector<1x1xf32>
    %cst_307 = arith.constant 2.000000e+00 : f32
    %491 = vector.broadcast %cst_307 : f32 to vector<1x1xf32>
    %492 = arith.divf %490, %491 : vector<1x1xf32>
    %493 = arith.addf %470, %492 : vector<1x1xf32>
    %cst_308 = arith.constant 0.000000e+00 : f32
    %494 = vector.broadcast %cst_308 : f32 to vector<2x4xf32>
    %495 = arith.subf %494, %368 : vector<2x4xf32>
    %496 = math.exp %495 : vector<2x4xf32>
    %cst_309 = arith.constant 1.000000e+00 : f32
    %497 = vector.broadcast %cst_309 : f32 to vector<2x4xf32>
    %498 = arith.addf %497, %496 : vector<2x4xf32>
    %cst_310 = arith.constant 1.000000e+00 : f32
    %499 = vector.broadcast %cst_310 : f32 to vector<2x4xf32>
    %500 = arith.divf %499, %498 : vector<2x4xf32>
    %cst_311 = arith.constant 0.000000e+00 : f32
    %501 = vector.broadcast %cst_311 : f32 to vector<2x4xf32>
    %502 = arith.subf %501, %448 : vector<2x4xf32>
    %503 = math.exp %502 : vector<2x4xf32>
    %cst_312 = arith.constant 1.000000e+00 : f32
    %504 = vector.broadcast %cst_312 : f32 to vector<2x4xf32>
    %505 = arith.addf %504, %503 : vector<2x4xf32>
    %cst_313 = arith.constant 1.000000e+00 : f32
    %506 = vector.broadcast %cst_313 : f32 to vector<2x4xf32>
    %507 = arith.divf %506, %505 : vector<2x4xf32>
    %cst_314 = arith.constant 0.000000e+00 : f32
    %508 = vector.broadcast %cst_314 : f32 to vector<2x4xf32>
    %509 = arith.subf %508, %368 : vector<2x4xf32>
    %cst_315 = arith.constant 0.000000e+00 : f32
    %510 = vector.broadcast %cst_315 : f32 to vector<2x4xf32>
    %511 = arith.maximumf %509, %510 : vector<2x4xf32>
    %512 = math.absf %509 : vector<2x4xf32>
    %cst_316 = arith.constant 0.000000e+00 : f32
    %513 = vector.broadcast %cst_316 : f32 to vector<2x4xf32>
    %514 = arith.subf %513, %512 : vector<2x4xf32>
    %515 = math.exp %514 : vector<2x4xf32>
    %cst_317 = arith.constant 1.000000e+00 : f32
    %516 = vector.broadcast %cst_317 : f32 to vector<2x4xf32>
    %517 = arith.addf %516, %515 : vector<2x4xf32>
    %518 = math.log %517 : vector<2x4xf32>
    %519 = arith.addf %511, %518 : vector<2x4xf32>
    %520 = arith.mulf %507, %519 : vector<2x4xf32>
    %cst_318 = arith.constant 1.000000e+00 : f32
    %521 = vector.broadcast %cst_318 : f32 to vector<2x4xf32>
    %522 = arith.subf %521, %507 : vector<2x4xf32>
    %cst_319 = arith.constant 0.000000e+00 : f32
    %523 = vector.broadcast %cst_319 : f32 to vector<2x4xf32>
    %524 = arith.maximumf %368, %523 : vector<2x4xf32>
    %525 = math.absf %368 : vector<2x4xf32>
    %cst_320 = arith.constant 0.000000e+00 : f32
    %526 = vector.broadcast %cst_320 : f32 to vector<2x4xf32>
    %527 = arith.subf %526, %525 : vector<2x4xf32>
    %528 = math.exp %527 : vector<2x4xf32>
    %cst_321 = arith.constant 1.000000e+00 : f32
    %529 = vector.broadcast %cst_321 : f32 to vector<2x4xf32>
    %530 = arith.addf %529, %528 : vector<2x4xf32>
    %531 = math.log %530 : vector<2x4xf32>
    %532 = arith.addf %524, %531 : vector<2x4xf32>
    %533 = arith.mulf %522, %532 : vector<2x4xf32>
    %534 = arith.addf %520, %533 : vector<2x4xf32>
    %cst_322 = arith.constant dense<0.000000e+00> : vector<2xf32>
    %535 = vector.multi_reduction <add>, %534, %cst_322 [1] : vector<2x4xf32> to vector<2xf32>
    %536 = vector.shape_cast %535 : vector<2xf32> to vector<2x1xf32>
    %cst_323 = arith.constant dense<0.000000e+00> : vector<1xf32>
    %537 = vector.multi_reduction <add>, %536, %cst_323 [0] : vector<2x1xf32> to vector<1xf32>
    %538 = vector.shape_cast %537 : vector<1xf32> to vector<1x1xf32>
    %cst_324 = arith.constant 0.000000e+00 : f32
    %539 = vector.broadcast %cst_324 : f32 to vector<2x4xf32>
    %540 = arith.subf %539, %448 : vector<2x4xf32>
    %cst_325 = arith.constant 0.000000e+00 : f32
    %541 = vector.broadcast %cst_325 : f32 to vector<2x4xf32>
    %542 = arith.maximumf %540, %541 : vector<2x4xf32>
    %543 = math.absf %540 : vector<2x4xf32>
    %cst_326 = arith.constant 0.000000e+00 : f32
    %544 = vector.broadcast %cst_326 : f32 to vector<2x4xf32>
    %545 = arith.subf %544, %543 : vector<2x4xf32>
    %546 = math.exp %545 : vector<2x4xf32>
    %cst_327 = arith.constant 1.000000e+00 : f32
    %547 = vector.broadcast %cst_327 : f32 to vector<2x4xf32>
    %548 = arith.addf %547, %546 : vector<2x4xf32>
    %549 = math.log %548 : vector<2x4xf32>
    %550 = arith.addf %542, %549 : vector<2x4xf32>
    %551 = arith.mulf %500, %550 : vector<2x4xf32>
    %cst_328 = arith.constant 1.000000e+00 : f32
    %552 = vector.broadcast %cst_328 : f32 to vector<2x4xf32>
    %553 = arith.subf %552, %500 : vector<2x4xf32>
    %cst_329 = arith.constant 0.000000e+00 : f32
    %554 = vector.broadcast %cst_329 : f32 to vector<2x4xf32>
    %555 = arith.maximumf %448, %554 : vector<2x4xf32>
    %556 = math.absf %448 : vector<2x4xf32>
    %cst_330 = arith.constant 0.000000e+00 : f32
    %557 = vector.broadcast %cst_330 : f32 to vector<2x4xf32>
    %558 = arith.subf %557, %556 : vector<2x4xf32>
    %559 = math.exp %558 : vector<2x4xf32>
    %cst_331 = arith.constant 1.000000e+00 : f32
    %560 = vector.broadcast %cst_331 : f32 to vector<2x4xf32>
    %561 = arith.addf %560, %559 : vector<2x4xf32>
    %562 = math.log %561 : vector<2x4xf32>
    %563 = arith.addf %555, %562 : vector<2x4xf32>
    %564 = arith.mulf %553, %563 : vector<2x4xf32>
    %565 = arith.addf %551, %564 : vector<2x4xf32>
    %cst_332 = arith.constant dense<0.000000e+00> : vector<2xf32>
    %566 = vector.multi_reduction <add>, %565, %cst_332 [1] : vector<2x4xf32> to vector<2xf32>
    %567 = vector.shape_cast %566 : vector<2xf32> to vector<2x1xf32>
    %cst_333 = arith.constant dense<0.000000e+00> : vector<1xf32>
    %568 = vector.multi_reduction <add>, %567, %cst_333 [0] : vector<2x1xf32> to vector<1xf32>
    %569 = vector.shape_cast %568 : vector<1xf32> to vector<1x1xf32>
    %570 = arith.addf %538, %569 : vector<1x1xf32>
    %571 = arith.subf %570, %493 : vector<1x1xf32>
    %cst_334 = arith.constant -1.000000e+00 : f32
    %cst_335 = arith.constant 1.000000e+00 : f32
    %572 = vector.broadcast %cst_334 : f32 to vector<1x1xf32>
    %573 = arith.maximumf %572, %571 : vector<1x1xf32>
    %574 = vector.broadcast %cst_335 : f32 to vector<1x1xf32>
    %575 = arith.minimumf %574, %573 : vector<1x1xf32>
    %cst_336 = arith.constant 1.000000e-01 : f32
    %576 = vector.broadcast %cst_336 : f32 to vector<1x1xf32>
    %577 = arith.mulf %576, %575 : vector<1x1xf32>
    %578 = arith.addf %288, %577 : vector<1x1xf32>
    %c0_337 = arith.constant 0 : index
    %c0_338 = arith.constant 0 : index
    %c0_339 = arith.constant 0 : index
    %579 = vector.load %arg0[%c0_337, %c0_338, %c0_339] : memref<3x128x64xbf16, #tpu.memory_space<vmem>>, vector<1x128x64xbf16>
    %580 = vector.shape_cast %579 : vector<1x128x64xbf16> to vector<128x64xbf16>
    %c2_340 = arith.constant 2 : index
    %c0_341 = arith.constant 0 : index
    %c0_342 = arith.constant 0 : index
    %c0_343 = arith.constant 0 : index
    %581 = vector.load %arg1[%c2_340, %c0_341, %c0_342, %c0_343] : memref<3x2x64x4xbf16, #tpu.memory_space<vmem>>, vector<1x1x64x4xbf16>
    %582 = vector.shape_cast %581 : vector<1x1x64x4xbf16> to vector<64x4xbf16>
    %cst_344 = arith.constant dense<0.000000e+00> : vector<128x4xf32>
    %583 = tpu.matmul %580, %582, %cst_344 {dimension_numbers = #tpu.dot_dimension_numbers<[1], [0], [0], [1], [0, 0, 1, 1], [], []>} : vector<128x64xbf16>, vector<64x4xbf16>, vector<128x4xf32> -> vector<128x4xf32>
    %c2_345 = arith.constant 2 : index
    %c0_346 = arith.constant 0 : index
    %c0_347 = arith.constant 0 : index
    %c0_348 = arith.constant 0 : index
    %584 = vector.load %arg2[%c2_345, %c0_346, %c0_347, %c0_348] : memref<3x2x1x4xf32, #tpu.memory_space<vmem>>, vector<1x1x1x4xf32>
    %585 = vector.shape_cast %584 : vector<1x1x1x4xf32> to vector<1x4xf32>
    %586 = vector.broadcast %585 : vector<1x4xf32> to vector<128x4xf32>
    %587 = arith.addf %583, %586 : vector<128x4xf32>
    %cst_349 = arith.constant 0.00999999977 : f32
    %588 = vector.broadcast %cst_349 : f32 to vector<128x4xf32>
    %589 = arith.mulf %588, %587 : vector<128x4xf32>
    %590 = arith.maximumf %587, %589 : vector<128x4xf32>
    %591 = vector.extract_strided_slice %590 {offsets = [0, 0], sizes = [64, 4], strides = [1, 1]} : vector<128x4xf32> to vector<64x4xf32>
    %592 = vector.extract_strided_slice %591 {offsets = [0, 0], sizes = [64, 1], strides = [1, 1]} : vector<64x4xf32> to vector<64x1xf32>
    %c2_350 = arith.constant 2 : index
    %c0_351 = arith.constant 0 : index
    %c0_352 = arith.constant 0 : index
    %c0_353 = arith.constant 0 : index
    %c0_354 = arith.constant 0 : index
    %593 = vector.load %arg3[%c2_350, %c0_351, %c0_352, %c0_353, %c0_354] : memref<3x2x4x64x8xf32, #tpu.memory_space<vmem>>, vector<1x1x1x64x8xf32>
    %594 = vector.shape_cast %593 : vector<1x1x1x64x8xf32> to vector<64x8xf32>
    %595 = vector.broadcast %592 : vector<64x1xf32> to vector<64x8xf32>
    %596 = arith.mulf %595, %594 : vector<64x8xf32>
    %597 = vector.extract_strided_slice %591 {offsets = [0, 1], sizes = [64, 1], strides = [1, 1]} : vector<64x4xf32> to vector<64x1xf32>
    %c2_355 = arith.constant 2 : index
    %c0_356 = arith.constant 0 : index
    %c1_357 = arith.constant 1 : index
    %c0_358 = arith.constant 0 : index
    %c0_359 = arith.constant 0 : index
    %598 = vector.load %arg3[%c2_355, %c0_356, %c1_357, %c0_358, %c0_359] : memref<3x2x4x64x8xf32, #tpu.memory_space<vmem>>, vector<1x1x1x64x8xf32>
    %599 = vector.shape_cast %598 : vector<1x1x1x64x8xf32> to vector<64x8xf32>
    %600 = vector.broadcast %597 : vector<64x1xf32> to vector<64x8xf32>
    %601 = arith.mulf %600, %599 : vector<64x8xf32>
    %602 = arith.addf %596, %601 : vector<64x8xf32>
    %603 = vector.extract_strided_slice %591 {offsets = [0, 2], sizes = [64, 1], strides = [1, 1]} : vector<64x4xf32> to vector<64x1xf32>
    %c2_360 = arith.constant 2 : index
    %c0_361 = arith.constant 0 : index
    %c2_362 = arith.constant 2 : index
    %c0_363 = arith.constant 0 : index
    %c0_364 = arith.constant 0 : index
    %604 = vector.load %arg3[%c2_360, %c0_361, %c2_362, %c0_363, %c0_364] : memref<3x2x4x64x8xf32, #tpu.memory_space<vmem>>, vector<1x1x1x64x8xf32>
    %605 = vector.shape_cast %604 : vector<1x1x1x64x8xf32> to vector<64x8xf32>
    %606 = vector.broadcast %603 : vector<64x1xf32> to vector<64x8xf32>
    %607 = arith.mulf %606, %605 : vector<64x8xf32>
    %608 = arith.addf %602, %607 : vector<64x8xf32>
    %609 = vector.extract_strided_slice %591 {offsets = [0, 3], sizes = [64, 1], strides = [1, 1]} : vector<64x4xf32> to vector<64x1xf32>
    %c2_365 = arith.constant 2 : index
    %c0_366 = arith.constant 0 : index
    %c3_367 = arith.constant 3 : index
    %c0_368 = arith.constant 0 : index
    %c0_369 = arith.constant 0 : index
    %610 = vector.load %arg3[%c2_365, %c0_366, %c3_367, %c0_368, %c0_369] : memref<3x2x4x64x8xf32, #tpu.memory_space<vmem>>, vector<1x1x1x64x8xf32>
    %611 = vector.shape_cast %610 : vector<1x1x1x64x8xf32> to vector<64x8xf32>
    %612 = vector.broadcast %609 : vector<64x1xf32> to vector<64x8xf32>
    %613 = arith.mulf %612, %611 : vector<64x8xf32>
    %614 = arith.addf %608, %613 : vector<64x8xf32>
    %cst_370 = arith.constant dense<0.000000e+00> : vector<8xf32>
    %615 = vector.multi_reduction <add>, %614, %cst_370 [0] : vector<64x8xf32> to vector<8xf32>
    %616 = vector.shape_cast %615 : vector<8xf32> to vector<1x8xf32>
    %617 = vector.extract_strided_slice %590 {offsets = [64, 0], sizes = [64, 4], strides = [1, 1]} : vector<128x4xf32> to vector<64x4xf32>
    %618 = vector.extract_strided_slice %617 {offsets = [0, 0], sizes = [64, 1], strides = [1, 1]} : vector<64x4xf32> to vector<64x1xf32>
    %c2_371 = arith.constant 2 : index
    %c0_372 = arith.constant 0 : index
    %c0_373 = arith.constant 0 : index
    %c0_374 = arith.constant 0 : index
    %c0_375 = arith.constant 0 : index
    %619 = vector.load %arg3[%c2_371, %c0_372, %c0_373, %c0_374, %c0_375] : memref<3x2x4x64x8xf32, #tpu.memory_space<vmem>>, vector<1x1x1x64x8xf32>
    %620 = vector.shape_cast %619 : vector<1x1x1x64x8xf32> to vector<64x8xf32>
    %621 = vector.broadcast %618 : vector<64x1xf32> to vector<64x8xf32>
    %622 = arith.mulf %621, %620 : vector<64x8xf32>
    %623 = vector.extract_strided_slice %617 {offsets = [0, 1], sizes = [64, 1], strides = [1, 1]} : vector<64x4xf32> to vector<64x1xf32>
    %c2_376 = arith.constant 2 : index
    %c0_377 = arith.constant 0 : index
    %c1_378 = arith.constant 1 : index
    %c0_379 = arith.constant 0 : index
    %c0_380 = arith.constant 0 : index
    %624 = vector.load %arg3[%c2_376, %c0_377, %c1_378, %c0_379, %c0_380] : memref<3x2x4x64x8xf32, #tpu.memory_space<vmem>>, vector<1x1x1x64x8xf32>
    %625 = vector.shape_cast %624 : vector<1x1x1x64x8xf32> to vector<64x8xf32>
    %626 = vector.broadcast %623 : vector<64x1xf32> to vector<64x8xf32>
    %627 = arith.mulf %626, %625 : vector<64x8xf32>
    %628 = arith.addf %622, %627 : vector<64x8xf32>
    %629 = vector.extract_strided_slice %617 {offsets = [0, 2], sizes = [64, 1], strides = [1, 1]} : vector<64x4xf32> to vector<64x1xf32>
    %c2_381 = arith.constant 2 : index
    %c0_382 = arith.constant 0 : index
    %c2_383 = arith.constant 2 : index
    %c0_384 = arith.constant 0 : index
    %c0_385 = arith.constant 0 : index
    %630 = vector.load %arg3[%c2_381, %c0_382, %c2_383, %c0_384, %c0_385] : memref<3x2x4x64x8xf32, #tpu.memory_space<vmem>>, vector<1x1x1x64x8xf32>
    %631 = vector.shape_cast %630 : vector<1x1x1x64x8xf32> to vector<64x8xf32>
    %632 = vector.broadcast %629 : vector<64x1xf32> to vector<64x8xf32>
    %633 = arith.mulf %632, %631 : vector<64x8xf32>
    %634 = arith.addf %628, %633 : vector<64x8xf32>
    %635 = vector.extract_strided_slice %617 {offsets = [0, 3], sizes = [64, 1], strides = [1, 1]} : vector<64x4xf32> to vector<64x1xf32>
    %c2_386 = arith.constant 2 : index
    %c0_387 = arith.constant 0 : index
    %c3_388 = arith.constant 3 : index
    %c0_389 = arith.constant 0 : index
    %c0_390 = arith.constant 0 : index
    %636 = vector.load %arg3[%c2_386, %c0_387, %c3_388, %c0_389, %c0_390] : memref<3x2x4x64x8xf32, #tpu.memory_space<vmem>>, vector<1x1x1x64x8xf32>
    %637 = vector.shape_cast %636 : vector<1x1x1x64x8xf32> to vector<64x8xf32>
    %638 = vector.broadcast %635 : vector<64x1xf32> to vector<64x8xf32>
    %639 = arith.mulf %638, %637 : vector<64x8xf32>
    %640 = arith.addf %634, %639 : vector<64x8xf32>
    %cst_391 = arith.constant dense<0.000000e+00> : vector<8xf32>
    %641 = vector.multi_reduction <add>, %640, %cst_391 [0] : vector<64x8xf32> to vector<8xf32>
    %642 = vector.shape_cast %641 : vector<8xf32> to vector<1x8xf32>
    %643 = tpu.concatenate %616, %642 in 0 : vector<1x8xf32>, vector<1x8xf32> -> vector<2x8xf32>
    %c2_392 = arith.constant 2 : index
    %c0_393 = arith.constant 0 : index
    %c0_394 = arith.constant 0 : index
    %c0_395 = arith.constant 0 : index
    %644 = vector.load %arg4[%c2_392, %c0_393, %c0_394, %c0_395] : memref<3x2x1x8xf32, #tpu.memory_space<vmem>>, vector<1x1x1x8xf32>
    %645 = vector.shape_cast %644 : vector<1x1x1x8xf32> to vector<1x8xf32>
    %646 = vector.broadcast %645 : vector<1x8xf32> to vector<2x8xf32>
    %647 = arith.addf %643, %646 : vector<2x8xf32>
    %648 = vector.extract_strided_slice %647 {offsets = [0, 0], sizes = [2, 4], strides = [1, 1]} : vector<2x8xf32> to vector<2x4xf32>
    %649 = math.tanh %648 : vector<2x4xf32>
    %650 = vector.extract_strided_slice %647 {offsets = [0, 4], sizes = [2, 4], strides = [1, 1]} : vector<2x8xf32> to vector<2x4xf32>
    %651 = math.tanh %650 : vector<2x4xf32>
    %c2_396 = arith.constant 2 : index
    %c0_397 = arith.constant 0 : index
    %c0_398 = arith.constant 0 : index
    %c0_399 = arith.constant 0 : index
    %652 = vector.load %arg5[%c2_396, %c0_397, %c0_398, %c0_399] : memref<3x2x2x4xf32, #tpu.memory_space<vmem>>, vector<1x1x2x4xf32>
    %653 = vector.shape_cast %652 : vector<1x1x2x4xf32> to vector<2x4xf32>
    %cst_400 = arith.constant 5.000000e-01 : f32
    %654 = vector.broadcast %cst_400 : f32 to vector<2x4xf32>
    %655 = arith.mulf %654, %651 : vector<2x4xf32>
    %656 = math.exp %655 : vector<2x4xf32>
    %657 = arith.mulf %653, %656 : vector<2x4xf32>
    %658 = arith.addf %649, %657 : vector<2x4xf32>
    %c2_401 = arith.constant 2 : index
    %c0_402 = arith.constant 0 : index
    %c0_403 = arith.constant 0 : index
    %659 = vector.load %arg0[%c2_401, %c0_402, %c0_403] : memref<3x128x64xbf16, #tpu.memory_space<vmem>>, vector<1x128x64xbf16>
    %660 = vector.shape_cast %659 : vector<1x128x64xbf16> to vector<128x64xbf16>
    %c2_404 = arith.constant 2 : index
    %c1_405 = arith.constant 1 : index
    %c0_406 = arith.constant 0 : index
    %c0_407 = arith.constant 0 : index
    %661 = vector.load %arg1[%c2_404, %c1_405, %c0_406, %c0_407] : memref<3x2x64x4xbf16, #tpu.memory_space<vmem>>, vector<1x1x64x4xbf16>
    %662 = vector.shape_cast %661 : vector<1x1x64x4xbf16> to vector<64x4xbf16>
    %cst_408 = arith.constant dense<0.000000e+00> : vector<128x4xf32>
    %663 = tpu.matmul %660, %662, %cst_408 {dimension_numbers = #tpu.dot_dimension_numbers<[1], [0], [0], [1], [0, 0, 1, 1], [], []>} : vector<128x64xbf16>, vector<64x4xbf16>, vector<128x4xf32> -> vector<128x4xf32>
    %c2_409 = arith.constant 2 : index
    %c1_410 = arith.constant 1 : index
    %c0_411 = arith.constant 0 : index
    %c0_412 = arith.constant 0 : index
    %664 = vector.load %arg2[%c2_409, %c1_410, %c0_411, %c0_412] : memref<3x2x1x4xf32, #tpu.memory_space<vmem>>, vector<1x1x1x4xf32>
    %665 = vector.shape_cast %664 : vector<1x1x1x4xf32> to vector<1x4xf32>
    %666 = vector.broadcast %665 : vector<1x4xf32> to vector<128x4xf32>
    %667 = arith.addf %663, %666 : vector<128x4xf32>
    %cst_413 = arith.constant 0.00999999977 : f32
    %668 = vector.broadcast %cst_413 : f32 to vector<128x4xf32>
    %669 = arith.mulf %668, %667 : vector<128x4xf32>
    %670 = arith.maximumf %667, %669 : vector<128x4xf32>
    %671 = vector.extract_strided_slice %670 {offsets = [0, 0], sizes = [64, 4], strides = [1, 1]} : vector<128x4xf32> to vector<64x4xf32>
    %672 = vector.extract_strided_slice %671 {offsets = [0, 0], sizes = [64, 1], strides = [1, 1]} : vector<64x4xf32> to vector<64x1xf32>
    %c2_414 = arith.constant 2 : index
    %c1_415 = arith.constant 1 : index
    %c0_416 = arith.constant 0 : index
    %c0_417 = arith.constant 0 : index
    %c0_418 = arith.constant 0 : index
    %673 = vector.load %arg3[%c2_414, %c1_415, %c0_416, %c0_417, %c0_418] : memref<3x2x4x64x8xf32, #tpu.memory_space<vmem>>, vector<1x1x1x64x8xf32>
    %674 = vector.shape_cast %673 : vector<1x1x1x64x8xf32> to vector<64x8xf32>
    %675 = vector.broadcast %672 : vector<64x1xf32> to vector<64x8xf32>
    %676 = arith.mulf %675, %674 : vector<64x8xf32>
    %677 = vector.extract_strided_slice %671 {offsets = [0, 1], sizes = [64, 1], strides = [1, 1]} : vector<64x4xf32> to vector<64x1xf32>
    %c2_419 = arith.constant 2 : index
    %c1_420 = arith.constant 1 : index
    %c1_421 = arith.constant 1 : index
    %c0_422 = arith.constant 0 : index
    %c0_423 = arith.constant 0 : index
    %678 = vector.load %arg3[%c2_419, %c1_420, %c1_421, %c0_422, %c0_423] : memref<3x2x4x64x8xf32, #tpu.memory_space<vmem>>, vector<1x1x1x64x8xf32>
    %679 = vector.shape_cast %678 : vector<1x1x1x64x8xf32> to vector<64x8xf32>
    %680 = vector.broadcast %677 : vector<64x1xf32> to vector<64x8xf32>
    %681 = arith.mulf %680, %679 : vector<64x8xf32>
    %682 = arith.addf %676, %681 : vector<64x8xf32>
    %683 = vector.extract_strided_slice %671 {offsets = [0, 2], sizes = [64, 1], strides = [1, 1]} : vector<64x4xf32> to vector<64x1xf32>
    %c2_424 = arith.constant 2 : index
    %c1_425 = arith.constant 1 : index
    %c2_426 = arith.constant 2 : index
    %c0_427 = arith.constant 0 : index
    %c0_428 = arith.constant 0 : index
    %684 = vector.load %arg3[%c2_424, %c1_425, %c2_426, %c0_427, %c0_428] : memref<3x2x4x64x8xf32, #tpu.memory_space<vmem>>, vector<1x1x1x64x8xf32>
    %685 = vector.shape_cast %684 : vector<1x1x1x64x8xf32> to vector<64x8xf32>
    %686 = vector.broadcast %683 : vector<64x1xf32> to vector<64x8xf32>
    %687 = arith.mulf %686, %685 : vector<64x8xf32>
    %688 = arith.addf %682, %687 : vector<64x8xf32>
    %689 = vector.extract_strided_slice %671 {offsets = [0, 3], sizes = [64, 1], strides = [1, 1]} : vector<64x4xf32> to vector<64x1xf32>
    %c2_429 = arith.constant 2 : index
    %c1_430 = arith.constant 1 : index
    %c3_431 = arith.constant 3 : index
    %c0_432 = arith.constant 0 : index
    %c0_433 = arith.constant 0 : index
    %690 = vector.load %arg3[%c2_429, %c1_430, %c3_431, %c0_432, %c0_433] : memref<3x2x4x64x8xf32, #tpu.memory_space<vmem>>, vector<1x1x1x64x8xf32>
    %691 = vector.shape_cast %690 : vector<1x1x1x64x8xf32> to vector<64x8xf32>
    %692 = vector.broadcast %689 : vector<64x1xf32> to vector<64x8xf32>
    %693 = arith.mulf %692, %691 : vector<64x8xf32>
    %694 = arith.addf %688, %693 : vector<64x8xf32>
    %cst_434 = arith.constant dense<0.000000e+00> : vector<8xf32>
    %695 = vector.multi_reduction <add>, %694, %cst_434 [0] : vector<64x8xf32> to vector<8xf32>
    %696 = vector.shape_cast %695 : vector<8xf32> to vector<1x8xf32>
    %697 = vector.extract_strided_slice %670 {offsets = [64, 0], sizes = [64, 4], strides = [1, 1]} : vector<128x4xf32> to vector<64x4xf32>
    %698 = vector.extract_strided_slice %697 {offsets = [0, 0], sizes = [64, 1], strides = [1, 1]} : vector<64x4xf32> to vector<64x1xf32>
    %c2_435 = arith.constant 2 : index
    %c1_436 = arith.constant 1 : index
    %c0_437 = arith.constant 0 : index
    %c0_438 = arith.constant 0 : index
    %c0_439 = arith.constant 0 : index
    %699 = vector.load %arg3[%c2_435, %c1_436, %c0_437, %c0_438, %c0_439] : memref<3x2x4x64x8xf32, #tpu.memory_space<vmem>>, vector<1x1x1x64x8xf32>
    %700 = vector.shape_cast %699 : vector<1x1x1x64x8xf32> to vector<64x8xf32>
    %701 = vector.broadcast %698 : vector<64x1xf32> to vector<64x8xf32>
    %702 = arith.mulf %701, %700 : vector<64x8xf32>
    %703 = vector.extract_strided_slice %697 {offsets = [0, 1], sizes = [64, 1], strides = [1, 1]} : vector<64x4xf32> to vector<64x1xf32>
    %c2_440 = arith.constant 2 : index
    %c1_441 = arith.constant 1 : index
    %c1_442 = arith.constant 1 : index
    %c0_443 = arith.constant 0 : index
    %c0_444 = arith.constant 0 : index
    %704 = vector.load %arg3[%c2_440, %c1_441, %c1_442, %c0_443, %c0_444] : memref<3x2x4x64x8xf32, #tpu.memory_space<vmem>>, vector<1x1x1x64x8xf32>
    %705 = vector.shape_cast %704 : vector<1x1x1x64x8xf32> to vector<64x8xf32>
    %706 = vector.broadcast %703 : vector<64x1xf32> to vector<64x8xf32>
    %707 = arith.mulf %706, %705 : vector<64x8xf32>
    %708 = arith.addf %702, %707 : vector<64x8xf32>
    %709 = vector.extract_strided_slice %697 {offsets = [0, 2], sizes = [64, 1], strides = [1, 1]} : vector<64x4xf32> to vector<64x1xf32>
    %c2_445 = arith.constant 2 : index
    %c1_446 = arith.constant 1 : index
    %c2_447 = arith.constant 2 : index
    %c0_448 = arith.constant 0 : index
    %c0_449 = arith.constant 0 : index
    %710 = vector.load %arg3[%c2_445, %c1_446, %c2_447, %c0_448, %c0_449] : memref<3x2x4x64x8xf32, #tpu.memory_space<vmem>>, vector<1x1x1x64x8xf32>
    %711 = vector.shape_cast %710 : vector<1x1x1x64x8xf32> to vector<64x8xf32>
    %712 = vector.broadcast %709 : vector<64x1xf32> to vector<64x8xf32>
    %713 = arith.mulf %712, %711 : vector<64x8xf32>
    %714 = arith.addf %708, %713 : vector<64x8xf32>
    %715 = vector.extract_strided_slice %697 {offsets = [0, 3], sizes = [64, 1], strides = [1, 1]} : vector<64x4xf32> to vector<64x1xf32>
    %c2_450 = arith.constant 2 : index
    %c1_451 = arith.constant 1 : index
    %c3_452 = arith.constant 3 : index
    %c0_453 = arith.constant 0 : index
    %c0_454 = arith.constant 0 : index
    %716 = vector.load %arg3[%c2_450, %c1_451, %c3_452, %c0_453, %c0_454] : memref<3x2x4x64x8xf32, #tpu.memory_space<vmem>>, vector<1x1x1x64x8xf32>
    %717 = vector.shape_cast %716 : vector<1x1x1x64x8xf32> to vector<64x8xf32>
    %718 = vector.broadcast %715 : vector<64x1xf32> to vector<64x8xf32>
    %719 = arith.mulf %718, %717 : vector<64x8xf32>
    %720 = arith.addf %714, %719 : vector<64x8xf32>
    %cst_455 = arith.constant dense<0.000000e+00> : vector<8xf32>
    %721 = vector.multi_reduction <add>, %720, %cst_455 [0] : vector<64x8xf32> to vector<8xf32>
    %722 = vector.shape_cast %721 : vector<8xf32> to vector<1x8xf32>
    %723 = tpu.concatenate %696, %722 in 0 : vector<1x8xf32>, vector<1x8xf32> -> vector<2x8xf32>
    %c2_456 = arith.constant 2 : index
    %c1_457 = arith.constant 1 : index
    %c0_458 = arith.constant 0 : index
    %c0_459 = arith.constant 0 : index
    %724 = vector.load %arg4[%c2_456, %c1_457, %c0_458, %c0_459] : memref<3x2x1x8xf32, #tpu.memory_space<vmem>>, vector<1x1x1x8xf32>
    %725 = vector.shape_cast %724 : vector<1x1x1x8xf32> to vector<1x8xf32>
    %726 = vector.broadcast %725 : vector<1x8xf32> to vector<2x8xf32>
    %727 = arith.addf %723, %726 : vector<2x8xf32>
    %728 = vector.extract_strided_slice %727 {offsets = [0, 0], sizes = [2, 4], strides = [1, 1]} : vector<2x8xf32> to vector<2x4xf32>
    %729 = math.tanh %728 : vector<2x4xf32>
    %730 = vector.extract_strided_slice %727 {offsets = [0, 4], sizes = [2, 4], strides = [1, 1]} : vector<2x8xf32> to vector<2x4xf32>
    %731 = math.tanh %730 : vector<2x4xf32>
    %c2_460 = arith.constant 2 : index
    %c1_461 = arith.constant 1 : index
    %c0_462 = arith.constant 0 : index
    %c0_463 = arith.constant 0 : index
    %732 = vector.load %arg5[%c2_460, %c1_461, %c0_462, %c0_463] : memref<3x2x2x4xf32, #tpu.memory_space<vmem>>, vector<1x1x2x4xf32>
    %733 = vector.shape_cast %732 : vector<1x1x2x4xf32> to vector<2x4xf32>
    %cst_464 = arith.constant 5.000000e-01 : f32
    %734 = vector.broadcast %cst_464 : f32 to vector<2x4xf32>
    %735 = arith.mulf %734, %731 : vector<2x4xf32>
    %736 = math.exp %735 : vector<2x4xf32>
    %737 = arith.mulf %733, %736 : vector<2x4xf32>
    %738 = arith.addf %729, %737 : vector<2x4xf32>
    %cst_465 = arith.constant 2.000000e+00 : f32
    %739 = vector.broadcast %cst_465 : f32 to vector<2x4xf32>
    %740 = arith.mulf %739, %651 : vector<2x4xf32>
    %741 = math.exp %740 : vector<2x4xf32>
    %cst_466 = arith.constant 2.000000e+00 : f32
    %742 = vector.broadcast %cst_466 : f32 to vector<2x4xf32>
    %743 = arith.mulf %742, %731 : vector<2x4xf32>
    %744 = math.exp %743 : vector<2x4xf32>
    %745 = arith.subf %731, %651 : vector<2x4xf32>
    %746 = arith.subf %649, %729 : vector<2x4xf32>
    %747 = arith.mulf %746, %746 : vector<2x4xf32>
    %748 = arith.addf %741, %747 : vector<2x4xf32>
    %cst_467 = arith.constant 2.000000e+00 : f32
    %749 = vector.broadcast %cst_467 : f32 to vector<2x4xf32>
    %750 = arith.mulf %749, %744 : vector<2x4xf32>
    %751 = arith.divf %748, %750 : vector<2x4xf32>
    %752 = arith.addf %745, %751 : vector<2x4xf32>
    %cst_468 = arith.constant 5.000000e-01 : f32
    %753 = vector.broadcast %cst_468 : f32 to vector<2x4xf32>
    %754 = arith.subf %752, %753 : vector<2x4xf32>
    %cst_469 = arith.constant dense<0.000000e+00> : vector<2xf32>
    %755 = vector.multi_reduction <add>, %754, %cst_469 [1] : vector<2x4xf32> to vector<2xf32>
    %756 = vector.shape_cast %755 : vector<2xf32> to vector<2x1xf32>
    %cst_470 = arith.constant dense<0.000000e+00> : vector<1xf32>
    %757 = vector.multi_reduction <add>, %756, %cst_470 [0] : vector<2x1xf32> to vector<1xf32>
    %758 = vector.shape_cast %757 : vector<1xf32> to vector<1x1xf32>
    %cst_471 = arith.constant 2.000000e+00 : f32
    %759 = vector.broadcast %cst_471 : f32 to vector<1x1xf32>
    %760 = arith.divf %758, %759 : vector<1x1xf32>
    %cst_472 = arith.constant 2.000000e+00 : f32
    %761 = vector.broadcast %cst_472 : f32 to vector<2x4xf32>
    %762 = arith.mulf %761, %731 : vector<2x4xf32>
    %763 = math.exp %762 : vector<2x4xf32>
    %cst_473 = arith.constant 2.000000e+00 : f32
    %764 = vector.broadcast %cst_473 : f32 to vector<2x4xf32>
    %765 = arith.mulf %764, %651 : vector<2x4xf32>
    %766 = math.exp %765 : vector<2x4xf32>
    %767 = arith.subf %651, %731 : vector<2x4xf32>
    %768 = arith.subf %729, %649 : vector<2x4xf32>
    %769 = arith.mulf %768, %768 : vector<2x4xf32>
    %770 = arith.addf %763, %769 : vector<2x4xf32>
    %cst_474 = arith.constant 2.000000e+00 : f32
    %771 = vector.broadcast %cst_474 : f32 to vector<2x4xf32>
    %772 = arith.mulf %771, %766 : vector<2x4xf32>
    %773 = arith.divf %770, %772 : vector<2x4xf32>
    %774 = arith.addf %767, %773 : vector<2x4xf32>
    %cst_475 = arith.constant 5.000000e-01 : f32
    %775 = vector.broadcast %cst_475 : f32 to vector<2x4xf32>
    %776 = arith.subf %774, %775 : vector<2x4xf32>
    %cst_476 = arith.constant dense<0.000000e+00> : vector<2xf32>
    %777 = vector.multi_reduction <add>, %776, %cst_476 [1] : vector<2x4xf32> to vector<2xf32>
    %778 = vector.shape_cast %777 : vector<2xf32> to vector<2x1xf32>
    %cst_477 = arith.constant dense<0.000000e+00> : vector<1xf32>
    %779 = vector.multi_reduction <add>, %778, %cst_477 [0] : vector<2x1xf32> to vector<1xf32>
    %780 = vector.shape_cast %779 : vector<1xf32> to vector<1x1xf32>
    %cst_478 = arith.constant 2.000000e+00 : f32
    %781 = vector.broadcast %cst_478 : f32 to vector<1x1xf32>
    %782 = arith.divf %780, %781 : vector<1x1xf32>
    %783 = arith.addf %760, %782 : vector<1x1xf32>
    %cst_479 = arith.constant 0.000000e+00 : f32
    %784 = vector.broadcast %cst_479 : f32 to vector<2x4xf32>
    %785 = arith.subf %784, %658 : vector<2x4xf32>
    %786 = math.exp %785 : vector<2x4xf32>
    %cst_480 = arith.constant 1.000000e+00 : f32
    %787 = vector.broadcast %cst_480 : f32 to vector<2x4xf32>
    %788 = arith.addf %787, %786 : vector<2x4xf32>
    %cst_481 = arith.constant 1.000000e+00 : f32
    %789 = vector.broadcast %cst_481 : f32 to vector<2x4xf32>
    %790 = arith.divf %789, %788 : vector<2x4xf32>
    %cst_482 = arith.constant 0.000000e+00 : f32
    %791 = vector.broadcast %cst_482 : f32 to vector<2x4xf32>
    %792 = arith.subf %791, %738 : vector<2x4xf32>
    %793 = math.exp %792 : vector<2x4xf32>
    %cst_483 = arith.constant 1.000000e+00 : f32
    %794 = vector.broadcast %cst_483 : f32 to vector<2x4xf32>
    %795 = arith.addf %794, %793 : vector<2x4xf32>
    %cst_484 = arith.constant 1.000000e+00 : f32
    %796 = vector.broadcast %cst_484 : f32 to vector<2x4xf32>
    %797 = arith.divf %796, %795 : vector<2x4xf32>
    %cst_485 = arith.constant 0.000000e+00 : f32
    %798 = vector.broadcast %cst_485 : f32 to vector<2x4xf32>
    %799 = arith.subf %798, %658 : vector<2x4xf32>
    %cst_486 = arith.constant 0.000000e+00 : f32
    %800 = vector.broadcast %cst_486 : f32 to vector<2x4xf32>
    %801 = arith.maximumf %799, %800 : vector<2x4xf32>
    %802 = math.absf %799 : vector<2x4xf32>
    %cst_487 = arith.constant 0.000000e+00 : f32
    %803 = vector.broadcast %cst_487 : f32 to vector<2x4xf32>
    %804 = arith.subf %803, %802 : vector<2x4xf32>
    %805 = math.exp %804 : vector<2x4xf32>
    %cst_488 = arith.constant 1.000000e+00 : f32
    %806 = vector.broadcast %cst_488 : f32 to vector<2x4xf32>
    %807 = arith.addf %806, %805 : vector<2x4xf32>
    %808 = math.log %807 : vector<2x4xf32>
    %809 = arith.addf %801, %808 : vector<2x4xf32>
    %810 = arith.mulf %797, %809 : vector<2x4xf32>
    %cst_489 = arith.constant 1.000000e+00 : f32
    %811 = vector.broadcast %cst_489 : f32 to vector<2x4xf32>
    %812 = arith.subf %811, %797 : vector<2x4xf32>
    %cst_490 = arith.constant 0.000000e+00 : f32
    %813 = vector.broadcast %cst_490 : f32 to vector<2x4xf32>
    %814 = arith.maximumf %658, %813 : vector<2x4xf32>
    %815 = math.absf %658 : vector<2x4xf32>
    %cst_491 = arith.constant 0.000000e+00 : f32
    %816 = vector.broadcast %cst_491 : f32 to vector<2x4xf32>
    %817 = arith.subf %816, %815 : vector<2x4xf32>
    %818 = math.exp %817 : vector<2x4xf32>
    %cst_492 = arith.constant 1.000000e+00 : f32
    %819 = vector.broadcast %cst_492 : f32 to vector<2x4xf32>
    %820 = arith.addf %819, %818 : vector<2x4xf32>
    %821 = math.log %820 : vector<2x4xf32>
    %822 = arith.addf %814, %821 : vector<2x4xf32>
    %823 = arith.mulf %812, %822 : vector<2x4xf32>
    %824 = arith.addf %810, %823 : vector<2x4xf32>
    %cst_493 = arith.constant dense<0.000000e+00> : vector<2xf32>
    %825 = vector.multi_reduction <add>, %824, %cst_493 [1] : vector<2x4xf32> to vector<2xf32>
    %826 = vector.shape_cast %825 : vector<2xf32> to vector<2x1xf32>
    %cst_494 = arith.constant dense<0.000000e+00> : vector<1xf32>
    %827 = vector.multi_reduction <add>, %826, %cst_494 [0] : vector<2x1xf32> to vector<1xf32>
    %828 = vector.shape_cast %827 : vector<1xf32> to vector<1x1xf32>
    %cst_495 = arith.constant 0.000000e+00 : f32
    %829 = vector.broadcast %cst_495 : f32 to vector<2x4xf32>
    %830 = arith.subf %829, %738 : vector<2x4xf32>
    %cst_496 = arith.constant 0.000000e+00 : f32
    %831 = vector.broadcast %cst_496 : f32 to vector<2x4xf32>
    %832 = arith.maximumf %830, %831 : vector<2x4xf32>
    %833 = math.absf %830 : vector<2x4xf32>
    %cst_497 = arith.constant 0.000000e+00 : f32
    %834 = vector.broadcast %cst_497 : f32 to vector<2x4xf32>
    %835 = arith.subf %834, %833 : vector<2x4xf32>
    %836 = math.exp %835 : vector<2x4xf32>
    %cst_498 = arith.constant 1.000000e+00 : f32
    %837 = vector.broadcast %cst_498 : f32 to vector<2x4xf32>
    %838 = arith.addf %837, %836 : vector<2x4xf32>
    %839 = math.log %838 : vector<2x4xf32>
    %840 = arith.addf %832, %839 : vector<2x4xf32>
    %841 = arith.mulf %790, %840 : vector<2x4xf32>
    %cst_499 = arith.constant 1.000000e+00 : f32
    %842 = vector.broadcast %cst_499 : f32 to vector<2x4xf32>
    %843 = arith.subf %842, %790 : vector<2x4xf32>
    %cst_500 = arith.constant 0.000000e+00 : f32
    %844 = vector.broadcast %cst_500 : f32 to vector<2x4xf32>
    %845 = arith.maximumf %738, %844 : vector<2x4xf32>
    %846 = math.absf %738 : vector<2x4xf32>
    %cst_501 = arith.constant 0.000000e+00 : f32
    %847 = vector.broadcast %cst_501 : f32 to vector<2x4xf32>
    %848 = arith.subf %847, %846 : vector<2x4xf32>
    %849 = math.exp %848 : vector<2x4xf32>
    %cst_502 = arith.constant 1.000000e+00 : f32
    %850 = vector.broadcast %cst_502 : f32 to vector<2x4xf32>
    %851 = arith.addf %850, %849 : vector<2x4xf32>
    %852 = math.log %851 : vector<2x4xf32>
    %853 = arith.addf %845, %852 : vector<2x4xf32>
    %854 = arith.mulf %843, %853 : vector<2x4xf32>
    %855 = arith.addf %841, %854 : vector<2x4xf32>
    %cst_503 = arith.constant dense<0.000000e+00> : vector<2xf32>
    %856 = vector.multi_reduction <add>, %855, %cst_503 [1] : vector<2x4xf32> to vector<2xf32>
    %857 = vector.shape_cast %856 : vector<2xf32> to vector<2x1xf32>
    %cst_504 = arith.constant dense<0.000000e+00> : vector<1xf32>
    %858 = vector.multi_reduction <add>, %857, %cst_504 [0] : vector<2x1xf32> to vector<1xf32>
    %859 = vector.shape_cast %858 : vector<1xf32> to vector<1x1xf32>
    %860 = arith.addf %828, %859 : vector<1x1xf32>
    %861 = arith.subf %860, %783 : vector<1x1xf32>
    %cst_505 = arith.constant -1.000000e+00 : f32
    %cst_506 = arith.constant 1.000000e+00 : f32
    %862 = vector.broadcast %cst_505 : f32 to vector<1x1xf32>
    %863 = arith.maximumf %862, %861 : vector<1x1xf32>
    %864 = vector.broadcast %cst_506 : f32 to vector<1x1xf32>
    %865 = arith.minimumf %864, %863 : vector<1x1xf32>
    %cst_507 = arith.constant 1.000000e-01 : f32
    %866 = vector.broadcast %cst_507 : f32 to vector<1x1xf32>
    %867 = arith.mulf %866, %865 : vector<1x1xf32>
    %868 = arith.addf %578, %867 : vector<1x1xf32>
    %c0_508 = arith.constant 0 : index
    %c0_509 = arith.constant 0 : index
    %869 = vector.load %arg6[%c0_508, %c0_509] : memref<1x1xf32, #tpu.memory_space<vmem>>, vector<1x1xf32>
    tpu.vector_store %arg6[%c0_508, %c0_509], %868 {strides = array<i32>} : memref<1x1xf32, #tpu.memory_space<vmem>>, vector<1x1xf32>,
    return
  }
}

</mosaic_0001>

<llo_original>
// kernel: mutual_information_loss_forward.1
$region0: #{mutual_information_loss_forward.1}
  #allocation0 [shape = 'u32[]', space=smem, size = 0x4, offset = 0x4, fixed_abs, tag = 'smem constant byte address 0x4 - core index']
  #allocation1 [shape = 'u32[144,128]{1,0:T(1,128)}', space=vmem, size = 0x12000, scoped, tag = 'internal scratch']
  %s0 = inlined_call_operand.vmem [shape: bf16[3,128,64], index: 0, kind: input, shape index: {}]
  %s1 = inlined_call_operand.vmem [shape: bf16[3,2,64,4], index: 1, kind: input, shape index: {}]
  %s2 = inlined_call_operand.vmem [shape: f32[3,2,1,4], index: 2, kind: input, shape index: {}]
  %s3 = inlined_call_operand.vmem [shape: f32[3,2,4,64,8], index: 3, kind: input, shape index: {}]
  %s4 = inlined_call_operand.vmem [shape: f32[3,2,1,8], index: 4, kind: input, shape index: {}]
  %s5 = inlined_call_operand.vmem [shape: f32[3,2,2,4], index: 5, kind: input, shape index: {}]
  %s6 = inlined_call_operand.hbm [shape: f32[1,1], index: 6, kind: output, shape index: {}]
  %s7 = sld [smem:[#allocation0]]
  $region34: #{mutual_information_loss_forward.1} parent=0
    _
  %s9 = ssub.s32 1, %s7
  %s10 = scalar_select 0, %s9, %s7
  $region1: #{mutual_information_loss_forward.1} parent=0
    #allocation2 [shape = 'u8[512]{0}', space=vmem, size = 0x400, scoped, tag = 'output window, operand 0, single buffered']
    #allocation3 [shape = 's32[1]{0}', space=sflag, size = 0x4, scoped, tag = 'scoped memory for mutual_information_loss_forward.1']
    %11 = vsyncpa [#allocation3], 0
    // Predicated region
    $region2: #{mutual_information_loss_forward.1} parent=1 // pred_check
      _
    $region3: #{mutual_information_loss_forward.1} parent=1 // pred_check_branch
      %13 = sbr.rel (0) target = $region5
    $region4: #{mutual_information_loss_forward.1} parent=1 // pred_region
      _
    $region5: #{mutual_information_loss_forward.1} parent=1 // pred_fallthru
      _
    // Predicated region
    $region6: #{mutual_information_loss_forward.1} parent=1 // pred_check
      _
    $region7: #{mutual_information_loss_forward.1} parent=1 // pred_check_branch
      %15 = sbr.rel (0) target = $region9
    $region8: #{mutual_information_loss_forward.1} parent=1 // pred_region
      _
    $region9: #{mutual_information_loss_forward.1} parent=1 // pred_fallthru
      _
    // Predicated region
    $region10: #{mutual_information_loss_forward.1} parent=1 // pred_check
      _
    $region11: #{mutual_information_loss_forward.1} parent=1 // pred_check_branch
      %17 = sbr.rel (0) target = $region13
    $region12: #{mutual_information_loss_forward.1} parent=1 // pred_region
      _
    $region13: #{mutual_information_loss_forward.1} parent=1 // pred_fallthru
      _
    // Predicated region
    $region14: #{mutual_information_loss_forward.1} parent=1 // pred_check
      _
    $region15: #{mutual_information_loss_forward.1} parent=1 // pred_check_branch
      %19 = sbr.rel (0) target = $region17
    $region16: #{mutual_information_loss_forward.1} parent=1 // pred_region
      _
    $region17: #{mutual_information_loss_forward.1} parent=1 // pred_fallthru
      _
    // Predicated region
    $region18: #{mutual_information_loss_forward.1} parent=1 // pred_check
      _
    $region19: #{mutual_information_loss_forward.1} parent=1 // pred_check_branch
      %21 = sbr.rel (0) target = $region21
    $region20: #{mutual_information_loss_forward.1} parent=1 // pred_region
      _
    $region21: #{mutual_information_loss_forward.1} parent=1 // pred_fallthru
      _
    // Predicated region
    $region22: #{mutual_information_loss_forward.1} parent=1 // pred_check
      _
    $region23: #{mutual_information_loss_forward.1} parent=1 // pred_check_branch
      %23 = sbr.rel (0) target = $region25
    $region24: #{mutual_information_loss_forward.1} parent=1 // pred_region
      _
    $region25: #{mutual_information_loss_forward.1} parent=1 // pred_fallthru
      _
    %s25 = scalar_lea.vmem %s0, 64
    %v26 = vld [vmem:[%s25] sm:$0xf]
    %v27 = vld [vmem:[%s25 + $0x4] sm:$0xf]
    %v28 = vld [vmem:[%s25 + $0x8] sm:$0xf]
    %v29 = vld [vmem:[%s25 + $0xc] sm:$0xf]
    %v30 = vld [vmem:[%s25 + $0x10] sm:$0xf]
    %v31 = vld [vmem:[%s25 + $0x14] sm:$0xf]
    %v32 = vld [vmem:[%s25 + $0x18] sm:$0xf]
    %v33 = vld [vmem:[%s25 + $0x1c] sm:$0xf]
    %v34 = vld [vmem:[%s25 + $0x20] sm:$0xf]
    %v35 = vld [vmem:[%s25 + $0x24] sm:$0xf]
    %v36 = vld [vmem:[%s25 + $0x28] sm:$0xf]
    %v37 = vld [vmem:[%s25 + $0x2c] sm:$0xf]
    %v38 = vld [vmem:[%s25 + $0x30] sm:$0xf]
    %v39 = vld [vmem:[%s25 + $0x34] sm:$0xf]
    %v40 = vld [vmem:[%s25 + $0x38] sm:$0xf]
    %v41 = vld [vmem:[%s25 + $0x3c] sm:$0xf]
    %v42 = vld [vmem:[%s1] sm:$0xf]
    %v43 = vld [vmem:[%s1 + $0x4] sm:$0xf]
    %v44 = vld [vmem:[%s1 + $0x8] sm:$0xf]
    %v45 = vld [vmem:[%s1 + $0xc] sm:$0xf]
    %v46 = vld [vmem:[%s1 + $0x10] sm:$0xf]
    %v47 = vld [vmem:[%s1 + $0x14] sm:$0xf]
    %v48 = vld [vmem:[%s1 + $0x18] sm:$0xf]
    %v49 = vld [vmem:[%s1 + $0x1c] sm:$0xf]
    %v50 = vld [vmem:[%s2] sm:$0x1]
    %v52 = vlaneseq
    %v53 = vshrl.u32 %v52, 7
    %v54 = vsub.s32 0, %v53
    %v55 = vrot.slane %v50, %v54
    %v73 = vunpack.c.l.b16 %v26
    %v74 = vunpack.c.l.b16 %v27
    %v75 = vunpack.c.l.b16 %v28
    %v76 = vunpack.c.l.b16 %v29
    %v77 = vunpack.c.l.b16 %v30
    %v78 = vunpack.c.l.b16 %v31
    %v79 = vunpack.c.l.b16 %v32
    %v80 = vunpack.c.l.b16 %v33
    %v81 = vunpack.c.l.b16 %v34
    %v82 = vunpack.c.l.b16 %v35
    %v83 = vunpack.c.l.b16 %v36
    %v84 = vunpack.c.l.b16 %v37
    %v85 = vunpack.c.l.b16 %v38
    %v86 = vunpack.c.l.b16 %v39
    %v87 = vunpack.c.l.b16 %v40
    %v88 = vunpack.c.l.b16 %v41
    %v89 = vpack.c.b16 %v74, %v73
    %v90 = vpack.c.b16 %v76, %v75
    %v91 = vpack.c.b16 %v78, %v77
    %v92 = vpack.c.b16 %v80, %v79
    %v93 = vpack.c.b16 %v82, %v81
    %v94 = vpack.c.b16 %v84, %v83
    %v95 = vpack.c.b16 %v86, %v85
    %v96 = vpack.c.b16 %v88, %v87
    %v105 = vunpack.c.l.b16 %v42
    %v106 = vunpack.c.l.b16 %v43
    %v107 = vunpack.c.l.b16 %v44
    %v108 = vunpack.c.l.b16 %v45
    %v109 = vunpack.c.l.b16 %v46
    %v110 = vunpack.c.l.b16 %v47
    %v111 = vunpack.c.l.b16 %v48
    %v112 = vunpack.c.l.b16 %v49
    %v113 = vpack.c.b16 %v106, %v105
    %v114 = vpack.c.b16 %v108, %v107
    %v115 = vpack.c.b16 %v110, %v109
    %v116 = vpack.c.b16 %v112, %v111
    %vm121 = vcmask 523264
    %v123 = vsel %vm121, %v89, 0
    %v126 = vsel %vm121, %v90, 0
    %v129 = vsel %vm121, %v91, 0
    %v132 = vsel %vm121, %v92, 0
    %v135 = vsel %vm121, %v93, 0
    %v138 = vsel %vm121, %v94, 0
    %v141 = vsel %vm121, %v95, 0
    %v144 = vsel %vm121, %v96, 0
    %146 = vmatprep.subr.bf16.mxu0 0
    %147 = vmatpush1.bf16.msra.mxu0 0
    %148 = vmatprep.subr.bf16.mxu0 0
    %149 = vmatpush1.bf16.msra.mxu0 0
    %150 = vmatprep.subr.bf16.mxu0 0
    %151 = vmatpush1.bf16.msra.mxu0 0
    %152 = vmatprep.subr.bf16.mxu0 0
    %153 = vmatpush1.bf16.msra.mxu0 0
    %154 = vmatprep.subr.bf16.mxu0 0
    %155 = vmatpush1.bf16.msra.mxu0 %v116
    %156 = vmatprep.subr.bf16.mxu0 0
    %157 = vmatpush1.bf16.msra.mxu0 %v115
    %158 = vmatprep.subr.bf16.mxu0 0
    %159 = vmatpush1.bf16.msra.mxu0 %v114
    %160 = vmatprep.subr.bf16.mxu0 0
    %161 = vmatpush1.bf16.msra.mxu0 %v113
    %162 = vmatprep.subr.bf16.mxu0 0
    %163 = vmatpush2.bf16.msra.mxu0 0
    %164 = vmatprep.subr.bf16.mxu0 0
    %165 = vmatpush2.bf16.msra.mxu0 0
    %166 = vmatprep.subr.bf16.mxu0 0
    %167 = vmatpush2.bf16.msra.mxu0 0
    %168 = vmatprep.subr.bf16.mxu0 0
    %169 = vmatpush2.bf16.msra.mxu0 0
    %170 = vmatprep.subr.bf16.mxu0 0
    %171 = vmatpush2.bf16.msra.mxu0 0
    %172 = vmatprep.subr.bf16.mxu0 0
    %173 = vmatpush2.bf16.msra.mxu0 0
    %174 = vmatprep.subr.bf16.mxu0 0
    %175 = vmatpush2.bf16.msra.mxu0 0
    %176 = vmatprep.subr.bf16.mxu0 0
    %177 = vmatpush2.bf16.msra.mxu0 0
    %178 = vmatprep.mubr.bf16.mxu0 0
    %179 = vmatmul.mubr.bf16.gmra.mxu0 %v123
    %v180 = vpop.f32.mrf.mxu0
    %v181 = vadd.f32 %v55, %v180
    %v182 = vpop.f32.mrf.mxu0
    %v183 = vpop.f32.mrf.mxu0
    %v184 = vadd.f32 %v55, %v183
    %v185 = vpop.f32.mrf.mxu0
    %186 = vmatprep.mubr.bf16.mxu0 0
    %187 = vmatmul.mubr.bf16.gmra.mxu0 %v126
    %v188 = vpop.f32.mrf.mxu0
    %v189 = vadd.f32 %v55, %v188
    %v190 = vpop.f32.mrf.mxu0
    %v191 = vpop.f32.mrf.mxu0
    %v192 = vadd.f32 %v55, %v191
    %v193 = vpop.f32.mrf.mxu0
    %194 = vmatprep.mubr.bf16.mxu0 0
    %195 = vmatmul.mubr.bf16.gmra.mxu0 %v129
    %v196 = vpop.f32.mrf.mxu0
    %v197 = vadd.f32 %v55, %v196
    %v198 = vpop.f32.mrf.mxu0
    %v199 = vpop.f32.mrf.mxu0
    %v200 = vadd.f32 %v55, %v199
    %v201 = vpop.f32.mrf.mxu0
    %202 = vmatprep.mubr.bf16.mxu0 0
    %203 = vmatmul.mubr.bf16.gmra.mxu0 %v132
    %v204 = vpop.f32.mrf.mxu0
    %v205 = vadd.f32 %v55, %v204
    %v206 = vpop.f32.mrf.mxu0
    %v207 = vpop.f32.mrf.mxu0
    %v208 = vadd.f32 %v55, %v207
    %v209 = vpop.f32.mrf.mxu0
    %210 = vmatprep.mubr.bf16.mxu0 0
    %211 = vmatmul.mubr.bf16.gmra.mxu0 %v135
    %v212 = vpop.f32.mrf.mxu0
    %v213 = vadd.f32 %v55, %v212
    %v214 = vpop.f32.mrf.mxu0
    %v215 = vpop.f32.mrf.mxu0
    %v216 = vadd.f32 %v55, %v215
    %v217 = vpop.f32.mrf.mxu0
    %218 = vmatprep.mubr.bf16.mxu0 0
    %219 = vmatmul.mubr.bf16.gmra.mxu0 %v138
    %v220 = vpop.f32.mrf.mxu0
    %v221 = vadd.f32 %v55, %v220
    %v222 = vpop.f32.mrf.mxu0
    %v223 = vpop.f32.mrf.mxu0
    %v224 = vadd.f32 %v55, %v223
    %v225 = vpop.f32.mrf.mxu0
    %226 = vmatprep.mubr.bf16.mxu0 0
    %227 = vmatmul.mubr.bf16.gmra.mxu0 %v141
    %v228 = vpop.f32.mrf.mxu0
    %v229 = vadd.f32 %v55, %v228
    %v230 = vpop.f32.mrf.mxu0
    %v231 = vpop.f32.mrf.mxu0
    %v232 = vadd.f32 %v55, %v231
    %v233 = vpop.f32.mrf.mxu0
    %234 = vmatprep.mubr.bf16.mxu0 0
    %235 = vmatmul.mubr.bf16.gmra.mxu0 %v144
    %v236 = vpop.f32.mrf.mxu0
    %v237 = vadd.f32 %v55, %v236
    %v238 = vpop.f32.mrf.mxu0
    %v239 = vpop.f32.mrf.mxu0
    %v240 = vadd.f32 %v55, %v239
    %v241 = vpop.f32.mrf.mxu0
    %242 = vdwg.mxu0
    %v243 = vmul.f32 %v181, 0.01
    %v244 = vmul.f32 %v184, 0.01
    %v245 = vmul.f32 %v189, 0.01
    %v246 = vmul.f32 %v192, 0.01
    %v247 = vmul.f32 %v197, 0.01
    %v248 = vmul.f32 %v200, 0.01
    %v249 = vmul.f32 %v205, 0.01
    %v250 = vmul.f32 %v208, 0.01
    %v251 = vmul.f32 %v213, 0.01
    %v252 = vmul.f32 %v216, 0.01
    %v253 = vmul.f32 %v221, 0.01
    %v254 = vmul.f32 %v224, 0.01
    %v255 = vmul.f32 %v229, 0.01
    %v256 = vmul.f32 %v232, 0.01
    %v257 = vmul.f32 %v237, 0.01
    %v258 = vmul.f32 %v240, 0.01
    %v259 = vmax.f32 %v181, %v243
    %v260 = vmax.f32 %v184, %v244
    %v261 = vmax.f32 %v189, %v245
    %v262 = vmax.f32 %v192, %v246
    %v263 = vmax.f32 %v197, %v247
    %v264 = vmax.f32 %v200, %v248
    %v265 = vmax.f32 %v205, %v249
    %v266 = vmax.f32 %v208, %v250
    %v267 = vmax.f32 %v213, %v251
    %v268 = vmax.f32 %v216, %v252
    %v269 = vmax.f32 %v221, %v253
    %v270 = vmax.f32 %v224, %v254
    %v271 = vmax.f32 %v229, %v255
    %v272 = vmax.f32 %v232, %v256
    %v273 = vmax.f32 %v237, %v257
    %v274 = vmax.f32 %v240, %v258
    %v275 = vld [vmem:[%s3] sm:$0xff]
    %v276 = vld [vmem:[%s3 + $0x8] sm:$0xff]
    %v277 = vld [vmem:[%s3 + $0x10] sm:$0xff]
    %v278 = vld [vmem:[%s3 + $0x18] sm:$0xff]
    %v279 = vld [vmem:[%s3 + $0x20] sm:$0xff]
    %v280 = vld [vmem:[%s3 + $0x28] sm:$0xff]
    %v281 = vld [vmem:[%s3 + $0x30] sm:$0xff]
    %v282 = vld [vmem:[%s3 + $0x38] sm:$0xff]
    %284 = vset.pattern.permute.xlu0 0
    %285 = vperm.xlu0 %284, %v259
    %v286 = vpop.permute.xlu0 %285
    %289 = vset.pattern.permute.xlu0 0
    %290 = vperm.xlu0 %289, %v260
    %v291 = vpop.permute.xlu0 %290
    %294 = vset.pattern.permute.xlu0 0
    %295 = vperm.xlu0 %294, %v261
    %v296 = vpop.permute.xlu0 %295
    %299 = vset.pattern.permute.xlu0 0
    %300 = vperm.xlu0 %299, %v262
    %v301 = vpop.permute.xlu0 %300
    %304 = vset.pattern.permute.xlu0 0
    %305 = vperm.xlu0 %304, %v263
    %v306 = vpop.permute.xlu0 %305
    %309 = vset.pattern.permute.xlu0 0
    %310 = vperm.xlu0 %309, %v264
    %v311 = vpop.permute.xlu0 %310
    %314 = vset.pattern.permute.xlu0 0
    %315 = vperm.xlu0 %314, %v265
    %v316 = vpop.permute.xlu0 %315
    %319 = vset.pattern.permute.xlu0 0
    %320 = vperm.xlu0 %319, %v266
    %v321 = vpop.permute.xlu0 %320
    %v323 = vmul.f32 %v286, %v275
    %v324 = vmul.f32 %v291, %v276
    %v325 = vmul.f32 %v296, %v277
    %v326 = vmul.f32 %v301, %v278
    %v327 = vmul.f32 %v306, %v279
    %v328 = vmul.f32 %v311, %v280
    %v329 = vmul.f32 %v316, %v281
    %v330 = vmul.f32 %v321, %v282
    %s331 = scalar_lea.vmem %s3, 64
    %v332 = vld [vmem:[%s331] sm:$0xff]
    %v333 = vld [vmem:[%s331 + $0x8] sm:$0xff]
    %v334 = vld [vmem:[%s331 + $0x10] sm:$0xff]
    %v335 = vld [vmem:[%s331 + $0x18] sm:$0xff]
    %v336 = vld [vmem:[%s331 + $0x20] sm:$0xff]
    %v337 = vld [vmem:[%s331 + $0x28] sm:$0xff]
    %v338 = vld [vmem:[%s331 + $0x30] sm:$0xff]
    %v339 = vld [vmem:[%s331 + $0x38] sm:$0xff]
    %340 = vset.pattern.permute.xlu0 1
    %341 = vperm.xlu0 %340, %v259
    %v342 = vpop.permute.xlu0 %341
    %344 = vset.pattern.permute.xlu0 1
    %345 = vperm.xlu0 %344, %v260
    %v346 = vpop.permute.xlu0 %345
    %348 = vset.pattern.permute.xlu0 1
    %349 = vperm.xlu0 %348, %v261
    %v350 = vpop.permute.xlu0 %349
    %352 = vset.pattern.permute.xlu0 1
    %353 = vperm.xlu0 %352, %v262
    %v354 = vpop.permute.xlu0 %353
    %356 = vset.pattern.permute.xlu0 1
    %357 = vperm.xlu0 %356, %v263
    %v358 = vpop.permute.xlu0 %357
    %360 = vset.pattern.permute.xlu0 1
    %361 = vperm.xlu0 %360, %v264
    %v362 = vpop.permute.xlu0 %361
    %364 = vset.pattern.permute.xlu0 1
    %365 = vperm.xlu0 %364, %v265
    %v366 = vpop.permute.xlu0 %365
    %368 = vset.pattern.permute.xlu0 1
    %369 = vperm.xlu0 %368, %v266
    %v370 = vpop.permute.xlu0 %369
    %v372 = vmul.f32 %v342, %v332
    %v373 = vmul.f32 %v346, %v333
    %v374 = vmul.f32 %v350, %v334
    %v375 = vmul.f32 %v354, %v335
    %v376 = vmul.f32 %v358, %v336
    %v377 = vmul.f32 %v362, %v337
    %v378 = vmul.f32 %v366, %v338
    %v379 = vmul.f32 %v370, %v339
    %v380 = vadd.f32 %v323, %v372
    %v381 = vadd.f32 %v324, %v373
    %v382 = vadd.f32 %v325, %v374
    %v383 = vadd.f32 %v326, %v375
    %v384 = vadd.f32 %v327, %v376
    %v385 = vadd.f32 %v328, %v377
    %v386 = vadd.f32 %v329, %v378
    %v387 = vadd.f32 %v330, %v379
    %s388 = scalar_lea.vmem %s3, 128
    %v389 = vld [vmem:[%s388] sm:$0xff]
    %v390 = vld [vmem:[%s388 + $0x8] sm:$0xff]
    %v391 = vld [vmem:[%s388 + $0x10] sm:$0xff]
    %v392 = vld [vmem:[%s388 + $0x18] sm:$0xff]
    %v393 = vld [vmem:[%s388 + $0x20] sm:$0xff]
    %v394 = vld [vmem:[%s388 + $0x28] sm:$0xff]
    %v395 = vld [vmem:[%s388 + $0x30] sm:$0xff]
    %v396 = vld [vmem:[%s388 + $0x38] sm:$0xff]
    %397 = vset.pattern.permute.xlu0 2
    %398 = vperm.xlu0 %397, %v259
    %v399 = vpop.permute.xlu0 %398
    %401 = vset.pattern.permute.xlu0 2
    %402 = vperm.xlu0 %401, %v260
    %v403 = vpop.permute.xlu0 %402
    %405 = vset.pattern.permute.xlu0 2
    %406 = vperm.xlu0 %405, %v261
    %v407 = vpop.permute.xlu0 %406
    %409 = vset.pattern.permute.xlu0 2
    %410 = vperm.xlu0 %409, %v262
    %v411 = vpop.permute.xlu0 %410
    %413 = vset.pattern.permute.xlu0 2
    %414 = vperm.xlu0 %413, %v263
    %v415 = vpop.permute.xlu0 %414
    %417 = vset.pattern.permute.xlu0 2
    %418 = vperm.xlu0 %417, %v264
    %v419 = vpop.permute.xlu0 %418
    %421 = vset.pattern.permute.xlu0 2
    %422 = vperm.xlu0 %421, %v265
    %v423 = vpop.permute.xlu0 %422
    %425 = vset.pattern.permute.xlu0 2
    %426 = vperm.xlu0 %425, %v266
    %v427 = vpop.permute.xlu0 %426
    %v429 = vmul.f32 %v399, %v389
    %v430 = vmul.f32 %v403, %v390
    %v431 = vmul.f32 %v407, %v391
    %v432 = vmul.f32 %v411, %v392
    %v433 = vmul.f32 %v415, %v393
    %v434 = vmul.f32 %v419, %v394
    %v435 = vmul.f32 %v423, %v395
    %v436 = vmul.f32 %v427, %v396
    %v437 = vadd.f32 %v380, %v429
    %v438 = vadd.f32 %v381, %v430
    %v439 = vadd.f32 %v382, %v431
    %v440 = vadd.f32 %v383, %v432
    %v441 = vadd.f32 %v384, %v433
    %v442 = vadd.f32 %v385, %v434
    %v443 = vadd.f32 %v386, %v435
    %v444 = vadd.f32 %v387, %v436
    %s445 = scalar_lea.vmem %s3, 192
    %v446 = vld [vmem:[%s445] sm:$0xff]
    %v447 = vld [vmem:[%s445 + $0x8] sm:$0xff]
    %v448 = vld [vmem:[%s445 + $0x10] sm:$0xff]
    %v449 = vld [vmem:[%s445 + $0x18] sm:$0xff]
    %v450 = vld [vmem:[%s445 + $0x20] sm:$0xff]
    %v451 = vld [vmem:[%s445 + $0x28] sm:$0xff]
    %v452 = vld [vmem:[%s445 + $0x30] sm:$0xff]
    %v453 = vld [vmem:[%s445 + $0x38] sm:$0xff]
    %454 = vset.pattern.permute.xlu0 3
    %455 = vperm.xlu0 %454, %v259
    %v456 = vpop.permute.xlu0 %455
    %458 = vset.pattern.permute.xlu0 3
    %459 = vperm.xlu0 %458, %v260
    %v460 = vpop.permute.xlu0 %459
    %462 = vset.pattern.permute.xlu0 3
    %463 = vperm.xlu0 %462, %v261
    %v464 = vpop.permute.xlu0 %463
    %466 = vset.pattern.permute.xlu0 3
    %467 = vperm.xlu0 %466, %v262
    %v468 = vpop.permute.xlu0 %467
    %470 = vset.pattern.permute.xlu0 3
    %471 = vperm.xlu0 %470, %v263
    %v472 = vpop.permute.xlu0 %471
    %474 = vset.pattern.permute.xlu0 3
    %475 = vperm.xlu0 %474, %v264
    %v476 = vpop.permute.xlu0 %475
    %478 = vset.pattern.permute.xlu0 3
    %479 = vperm.xlu0 %478, %v265
    %v480 = vpop.permute.xlu0 %479
    %482 = vset.pattern.permute.xlu0 3
    %483 = vperm.xlu0 %482, %v266
    %v484 = vpop.permute.xlu0 %483
    %v486 = vmul.f32 %v456, %v446
    %v487 = vmul.f32 %v460, %v447
    %v488 = vmul.f32 %v464, %v448
    %v489 = vmul.f32 %v468, %v449
    %v490 = vmul.f32 %v472, %v450
    %v491 = vmul.f32 %v476, %v451
    %v492 = vmul.f32 %v480, %v452
    %v493 = vmul.f32 %v484, %v453
    %v494 = vadd.f32 %v437, %v486
    %v495 = vadd.f32 %v438, %v487
    %v496 = vadd.f32 %v439, %v488
    %v497 = vadd.f32 %v440, %v489
    %v498 = vadd.f32 %v441, %v490
    %v499 = vadd.f32 %v442, %v491
    %v500 = vadd.f32 %v443, %v492
    %v501 = vadd.f32 %v444, %v493
    %vm502 = vcmask 64512
    %v503 = vsel %vm502, %v494, 0.0
    %v504 = vsel %vm502, %v495, 0.0
    %v505 = vadd.f32 %v503, %v504
    %v506 = vsel %vm502, %v496, 0.0
    %v507 = vadd.f32 %v505, %v506
    %v508 = vsel %vm502, %v497, 0.0
    %v509 = vadd.f32 %v507, %v508
    %v510 = vsel %vm502, %v498, 0.0
    %v511 = vadd.f32 %v509, %v510
    %v512 = vsel %vm502, %v499, 0.0
    %v513 = vadd.f32 %v511, %v512
    %v514 = vsel %vm502, %v500, 0.0
    %v515 = vadd.f32 %v513, %v514
    %v516 = vsel %vm502, %v501, 0.0
    %v517 = vadd.f32 %v515, %v516
    %v518 = vrot.slane %v517, 4
    %v519 = vadd.f32 %v517, %v518
    %v520 = vrot.slane %v519, 2
    %v521 = vadd.f32 %v519, %v520
    %v522 = vrot.slane %v521, 1
    %v523 = vadd.f32 %v521, %v522
    %525 = vset.pattern.permute.xlu0 0
    %526 = vperm.xlu0 %525, %v267
    %v527 = vpop.permute.xlu0 %526
    %530 = vset.pattern.permute.xlu0 0
    %531 = vperm.xlu0 %530, %v268
    %v532 = vpop.permute.xlu0 %531
    %535 = vset.pattern.permute.xlu0 0
    %536 = vperm.xlu0 %535, %v269
    %v537 = vpop.permute.xlu0 %536
    %540 = vset.pattern.permute.xlu0 0
    %541 = vperm.xlu0 %540, %v270
    %v542 = vpop.permute.xlu0 %541
    %545 = vset.pattern.permute.xlu0 0
    %546 = vperm.xlu0 %545, %v271
    %v547 = vpop.permute.xlu0 %546
    %550 = vset.pattern.permute.xlu0 0
    %551 = vperm.xlu0 %550, %v272
    %v552 = vpop.permute.xlu0 %551
    %555 = vset.pattern.permute.xlu0 0
    %556 = vperm.xlu0 %555, %v273
    %v557 = vpop.permute.xlu0 %556
    %560 = vset.pattern.permute.xlu0 0
    %561 = vperm.xlu0 %560, %v274
    %v562 = vpop.permute.xlu0 %561
    %v564 = vmul.f32 %v527, %v275
    %v565 = vmul.f32 %v532, %v276
    %v566 = vmul.f32 %v537, %v277
    %v567 = vmul.f32 %v542, %v278
    %v568 = vmul.f32 %v547, %v279
    %v569 = vmul.f32 %v552, %v280
    %v570 = vmul.f32 %v557, %v281
    %v571 = vmul.f32 %v562, %v282
    %572 = vset.pattern.permute.xlu0 1
    %573 = vperm.xlu0 %572, %v267
    %v574 = vpop.permute.xlu0 %573
    %576 = vset.pattern.permute.xlu0 1
    %577 = vperm.xlu0 %576, %v268
    %v578 = vpop.permute.xlu0 %577
    %580 = vset.pattern.permute.xlu0 1
    %581 = vperm.xlu0 %580, %v269
    %v582 = vpop.permute.xlu0 %581
    %584 = vset.pattern.permute.xlu0 1
    %585 = vperm.xlu0 %584, %v270
    %v586 = vpop.permute.xlu0 %585
    %588 = vset.pattern.permute.xlu0 1
    %589 = vperm.xlu0 %588, %v271
    %v590 = vpop.permute.xlu0 %589
    %592 = vset.pattern.permute.xlu0 1
    %593 = vperm.xlu0 %592, %v272
    %v594 = vpop.permute.xlu0 %593
    %596 = vset.pattern.permute.xlu0 1
    %597 = vperm.xlu0 %596, %v273
    %v598 = vpop.permute.xlu0 %597
    %600 = vset.pattern.permute.xlu0 1
    %601 = vperm.xlu0 %600, %v274
    %v602 = vpop.permute.xlu0 %601
    %v604 = vmul.f32 %v574, %v332
    %v605 = vmul.f32 %v578, %v333
    %v606 = vmul.f32 %v582, %v334
    %v607 = vmul.f32 %v586, %v335
    %v608 = vmul.f32 %v590, %v336
    %v609 = vmul.f32 %v594, %v337
    %v610 = vmul.f32 %v598, %v338
    %v611 = vmul.f32 %v602, %v339
    %v612 = vadd.f32 %v564, %v604
    %v613 = vadd.f32 %v565, %v605
    %v614 = vadd.f32 %v566, %v606
    %v615 = vadd.f32 %v567, %v607
    %v616 = vadd.f32 %v568, %v608
    %v617 = vadd.f32 %v569, %v609
    %v618 = vadd.f32 %v570, %v610
    %v619 = vadd.f32 %v571, %v611
    %620 = vset.pattern.permute.xlu0 2
    %621 = vperm.xlu0 %620, %v267
    %v622 = vpop.permute.xlu0 %621
    %624 = vset.pattern.permute.xlu0 2
    %625 = vperm.xlu0 %624, %v268
    %v626 = vpop.permute.xlu0 %625
    %628 = vset.pattern.permute.xlu0 2
    %629 = vperm.xlu0 %628, %v269
    %v630 = vpop.permute.xlu0 %629
    %632 = vset.pattern.permute.xlu0 2
    %633 = vperm.xlu0 %632, %v270
    %v634 = vpop.permute.xlu0 %633
    %636 = vset.pattern.permute.xlu0 2
    %637 = vperm.xlu0 %636, %v271
    %v638 = vpop.permute.xlu0 %637
    %640 = vset.pattern.permute.xlu0 2
    %641 = vperm.xlu0 %640, %v272
    %v642 = vpop.permute.xlu0 %641
    %644 = vset.pattern.permute.xlu0 2
    %645 = vperm.xlu0 %644, %v273
    %v646 = vpop.permute.xlu0 %645
    %648 = vset.pattern.permute.xlu0 2
    %649 = vperm.xlu0 %648, %v274
    %v650 = vpop.permute.xlu0 %649
    %v652 = vmul.f32 %v622, %v389
    %v653 = vmul.f32 %v626, %v390
    %v654 = vmul.f32 %v630, %v391
    %v655 = vmul.f32 %v634, %v392
    %v656 = vmul.f32 %v638, %v393
    %v657 = vmul.f32 %v642, %v394
    %v658 = vmul.f32 %v646, %v395
    %v659 = vmul.f32 %v650, %v396
    %v660 = vadd.f32 %v612, %v652
    %v661 = vadd.f32 %v613, %v653
    %v662 = vadd.f32 %v614, %v654
    %v663 = vadd.f32 %v615, %v655
    %v664 = vadd.f32 %v616, %v656
    %v665 = vadd.f32 %v617, %v657
    %v666 = vadd.f32 %v618, %v658
    %v667 = vadd.f32 %v619, %v659
    %668 = vset.pattern.permute.xlu0 3
    %669 = vperm.xlu0 %668, %v267
    %v670 = vpop.permute.xlu0 %669
    %672 = vset.pattern.permute.xlu0 3
    %673 = vperm.xlu0 %672, %v268
    %v674 = vpop.permute.xlu0 %673
    %676 = vset.pattern.permute.xlu0 3
    %677 = vperm.xlu0 %676, %v269
    %v678 = vpop.permute.xlu0 %677
    %680 = vset.pattern.permute.xlu0 3
    %681 = vperm.xlu0 %680, %v270
    %v682 = vpop.permute.xlu0 %681
    %684 = vset.pattern.permute.xlu0 3
    %685 = vperm.xlu0 %684, %v271
    %v686 = vpop.permute.xlu0 %685
    %688 = vset.pattern.permute.xlu0 3
    %689 = vperm.xlu0 %688, %v272
    %v690 = vpop.permute.xlu0 %689
    %692 = vset.pattern.permute.xlu0 3
    %693 = vperm.xlu0 %692, %v273
    %v694 = vpop.permute.xlu0 %693
    %696 = vset.pattern.permute.xlu0 3
    %697 = vperm.xlu0 %696, %v274
    %v698 = vpop.permute.xlu0 %697
    %v700 = vmul.f32 %v670, %v446
    %v701 = vmul.f32 %v674, %v447
    %v702 = vmul.f32 %v678, %v448
    %v703 = vmul.f32 %v682, %v449
    %v704 = vmul.f32 %v686, %v450
    %v705 = vmul.f32 %v690, %v451
    %v706 = vmul.f32 %v694, %v452
    %v707 = vmul.f32 %v698, %v453
    %v708 = vadd.f32 %v660, %v700
    %v709 = vadd.f32 %v661, %v701
    %v710 = vadd.f32 %v662, %v702
    %v711 = vadd.f32 %v663, %v703
    %v712 = vadd.f32 %v664, %v704
    %v713 = vadd.f32 %v665, %v705
    %v714 = vadd.f32 %v666, %v706
    %v715 = vadd.f32 %v667, %v707
    %v716 = vsel %vm502, %v708, 0.0
    %v717 = vsel %vm502, %v709, 0.0
    %v718 = vadd.f32 %v716, %v717
    %v719 = vsel %vm502, %v710, 0.0
    %v720 = vadd.f32 %v718, %v719
    %v721 = vsel %vm502, %v711, 0.0
    %v722 = vadd.f32 %v720, %v721
    %v723 = vsel %vm502, %v712, 0.0
    %v724 = vadd.f32 %v722, %v723
    %v725 = vsel %vm502, %v713, 0.0
    %v726 = vadd.f32 %v724, %v725
    %v727 = vsel %vm502, %v714, 0.0
    %v728 = vadd.f32 %v726, %v727
    %v729 = vsel %vm502, %v715, 0.0
    %v730 = vadd.f32 %v728, %v729
    %v731 = vrot.slane %v730, 4
    %v732 = vadd.f32 %v730, %v731
    %v733 = vrot.slane %v732, 2
    %v734 = vadd.f32 %v732, %v733
    %v735 = vrot.slane %v734, 1
    %v736 = vadd.f32 %v734, %v735
    %vm737 = vcmask 1040384
    %v738 = vsel %vm737, %v523, %v736
    %v739 = vld [vmem:[%s4] sm:$0x1]
    %v741 = vlaneseq
    %v742 = vshrl.u32 %v741, 7
    %v743 = vsub.s32 0, %v742
    %v744 = vrot.slane %v739, %v743
    %v746 = vadd.f32 %v738, %v744
    %v747 = vtanh.pop %v746
    %v748 = vld [vmem:[%s5] sm:$0x3]
    %v749 = vmul.f32 %v747, 0.5
    %v750 = vmul.f32 %v749, 1.442695
    %v751 = vpow.pop %v750
    %753 = vrot.lane.b32.xlu0 %v751, 124
    %v754 = vpop.permute.xlu0 %753
    %v756 = vmul.f32 %v748, %v754
    %v757 = vadd.f32 %v747, %v756
    %v758 = vld [vmem:[%s0] sm:$0xf]
    %v759 = vld [vmem:[%s0 + $0x4] sm:$0xf]
    %v760 = vld [vmem:[%s0 + $0x8] sm:$0xf]
    %v761 = vld [vmem:[%s0 + $0xc] sm:$0xf]
    %v762 = vld [vmem:[%s0 + $0x10] sm:$0xf]
    %v763 = vld [vmem:[%s0 + $0x14] sm:$0xf]
    %v764 = vld [vmem:[%s0 + $0x18] sm:$0xf]
    %v765 = vld [vmem:[%s0 + $0x1c] sm:$0xf]
    %v766 = vld [vmem:[%s0 + $0x20] sm:$0xf]
    %v767 = vld [vmem:[%s0 + $0x24] sm:$0xf]
    %v768 = vld [vmem:[%s0 + $0x28] sm:$0xf]
    %v769 = vld [vmem:[%s0 + $0x2c] sm:$0xf]
    %v770 = vld [vmem:[%s0 + $0x30] sm:$0xf]
    %v771 = vld [vmem:[%s0 + $0x34] sm:$0xf]
    %v772 = vld [vmem:[%s0 + $0x38] sm:$0xf]
    %v773 = vld [vmem:[%s0 + $0x3c] sm:$0xf]
    %s774 = scalar_lea.vmem %s1, 32
    %v775 = vld [vmem:[%s774] sm:$0xf]
    %v776 = vld [vmem:[%s774 + $0x4] sm:$0xf]
    %v777 = vld [vmem:[%s774 + $0x8] sm:$0xf]
    %v778 = vld [vmem:[%s774 + $0xc] sm:$0xf]
    %v779 = vld [vmem:[%s774 + $0x10] sm:$0xf]
    %v780 = vld [vmem:[%s774 + $0x14] sm:$0xf]
    %v781 = vld [vmem:[%s774 + $0x18] sm:$0xf]
    %v782 = vld [vmem:[%s774 + $0x1c] sm:$0xf]
    %s783 = scalar_lea.vmem %s2, 1
    %v784 = vld [vmem:[%s783] sm:$0x1]
    %v786 = vlaneseq
    %v787 = vshrl.u32 %v786, 7
    %v788 = vsub.s32 0, %v787
    %v789 = vrot.slane %v784, %v788
    %v807 = vunpack.c.l.b16 %v758
    %v808 = vunpack.c.l.b16 %v759
    %v809 = vunpack.c.l.b16 %v760
    %v810 = vunpack.c.l.b16 %v761
    %v811 = vunpack.c.l.b16 %v762
    %v812 = vunpack.c.l.b16 %v763
    %v813 = vunpack.c.l.b16 %v764
    %v814 = vunpack.c.l.b16 %v765
    %v815 = vunpack.c.l.b16 %v766
    %v816 = vunpack.c.l.b16 %v767
    %v817 = vunpack.c.l.b16 %v768
    %v818 = vunpack.c.l.b16 %v769
    %v819 = vunpack.c.l.b16 %v770
    %v820 = vunpack.c.l.b16 %v771
    %v821 = vunpack.c.l.b16 %v772
    %v822 = vunpack.c.l.b16 %v773
    %v823 = vpack.c.b16 %v808, %v807
    %v824 = vpack.c.b16 %v810, %v809
    %v825 = vpack.c.b16 %v812, %v811
    %v826 = vpack.c.b16 %v814, %v813
    %v827 = vpack.c.b16 %v816, %v815
    %v828 = vpack.c.b16 %v818, %v817
    %v829 = vpack.c.b16 %v820, %v819
    %v830 = vpack.c.b16 %v822, %v821
    %v839 = vunpack.c.l.b16 %v775
    %v840 = vunpack.c.l.b16 %v776
    %v841 = vunpack.c.l.b16 %v777
    %v842 = vunpack.c.l.b16 %v778
    %v843 = vunpack.c.l.b16 %v779
    %v844 = vunpack.c.l.b16 %v780
    %v845 = vunpack.c.l.b16 %v781
    %v846 = vunpack.c.l.b16 %v782
    %v847 = vpack.c.b16 %v840, %v839
    %v848 = vpack.c.b16 %v842, %v841
    %v849 = vpack.c.b16 %v844, %v843
    %v850 = vpack.c.b16 %v846, %v845
    %v856 = vsel %vm121, %v823, 0
    %v859 = vsel %vm121, %v824, 0
    %v862 = vsel %vm121, %v825, 0
    %v865 = vsel %vm121, %v826, 0
    %v868 = vsel %vm121, %v827, 0
    %v871 = vsel %vm121, %v828, 0
    %v874 = vsel %vm121, %v829, 0
    %v877 = vsel %vm121, %v830, 0
    %879 = vmatprep.subr.bf16.mxu0 0
    %880 = vmatpush1.bf16.msra.mxu0 0
    %881 = vmatprep.subr.bf16.mxu0 0
    %882 = vmatpush1.bf16.msra.mxu0 0
    %883 = vmatprep.subr.bf16.mxu0 0
    %884 = vmatpush1.bf16.msra.mxu0 0
    %885 = vmatprep.subr.bf16.mxu0 0
    %886 = vmatpush1.bf16.msra.mxu0 0
    %887 = vmatprep.subr.bf16.mxu0 0
    %888 = vmatpush1.bf16.msra.mxu0 %v850
    %889 = vmatprep.subr.bf16.mxu0 0
    %890 = vmatpush1.bf16.msra.mxu0 %v849
    %891 = vmatprep.subr.bf16.mxu0 0
    %892 = vmatpush1.bf16.msra.mxu0 %v848
    %893 = vmatprep.subr.bf16.mxu0 0
    %894 = vmatpush1.bf16.msra.mxu0 %v847
    %895 = vmatprep.subr.bf16.mxu0 0
    %896 = vmatpush2.bf16.msra.mxu0 0
    %897 = vmatprep.subr.bf16.mxu0 0
    %898 = vmatpush2.bf16.msra.mxu0 0
    %899 = vmatprep.subr.bf16.mxu0 0
    %900 = vmatpush2.bf16.msra.mxu0 0
    %901 = vmatprep.subr.bf16.mxu0 0
    %902 = vmatpush2.bf16.msra.mxu0 0
    %903 = vmatprep.subr.bf16.mxu0 0
    %904 = vmatpush2.bf16.msra.mxu0 0
    %905 = vmatprep.subr.bf16.mxu0 0
    %906 = vmatpush2.bf16.msra.mxu0 0
    %907 = vmatprep.subr.bf16.mxu0 0
    %908 = vmatpush2.bf16.msra.mxu0 0
    %909 = vmatprep.subr.bf16.mxu0 0
    %910 = vmatpush2.bf16.msra.mxu0 0
    %911 = vmatprep.mubr.bf16.mxu0 0
    %912 = vmatmul.mubr.bf16.gmra.mxu0 %v856
    %v913 = vpop.f32.mrf.mxu0
    %v914 = vadd.f32 %v789, %v913
    %v915 = vpop.f32.mrf.mxu0
    %v916 = vpop.f32.mrf.mxu0
    %v917 = vadd.f32 %v789, %v916
    %v918 = vpop.f32.mrf.mxu0
    %919 = vmatprep.mubr.bf16.mxu0 0
    %920 = vmatmul.mubr.bf16.gmra.mxu0 %v859
    %v921 = vpop.f32.mrf.mxu0
    %v922 = vadd.f32 %v789, %v921
    %v923 = vpop.f32.mrf.mxu0
    %v924 = vpop.f32.mrf.mxu0
    %v925 = vadd.f32 %v789, %v924
    %v926 = vpop.f32.mrf.mxu0
    %927 = vmatprep.mubr.bf16.mxu0 0
    %928 = vmatmul.mubr.bf16.gmra.mxu0 %v862
    %v929 = vpop.f32.mrf.mxu0
    %v930 = vadd.f32 %v789, %v929
    %v931 = vpop.f32.mrf.mxu0
    %v932 = vpop.f32.mrf.mxu0
    %v933 = vadd.f32 %v789, %v932
    %v934 = vpop.f32.mrf.mxu0
    %935 = vmatprep.mubr.bf16.mxu0 0
    %936 = vmatmul.mubr.bf16.gmra.mxu0 %v865
    %v937 = vpop.f32.mrf.mxu0
    %v938 = vadd.f32 %v789, %v937
    %v939 = vpop.f32.mrf.mxu0
    %v940 = vpop.f32.mrf.mxu0
    %v941 = vadd.f32 %v789, %v940
    %v942 = vpop.f32.mrf.mxu0
    %943 = vmatprep.mubr.bf16.mxu0 0
    %944 = vmatmul.mubr.bf16.gmra.mxu0 %v868
    %v945 = vpop.f32.mrf.mxu0
    %v946 = vadd.f32 %v789, %v945
    %v947 = vpop.f32.mrf.mxu0
    %v948 = vpop.f32.mrf.mxu0
    %v949 = vadd.f32 %v789, %v948
    %v950 = vpop.f32.mrf.mxu0
    %951 = vmatprep.mubr.bf16.mxu0 0
    %952 = vmatmul.mubr.bf16.gmra.mxu0 %v871
    %v953 = vpop.f32.mrf.mxu0
    %v954 = vadd.f32 %v789, %v953
    %v955 = vpop.f32.mrf.mxu0
    %v956 = vpop.f32.mrf.mxu0
    %v957 = vadd.f32 %v789, %v956
    %v958 = vpop.f32.mrf.mxu0
    %959 = vmatprep.mubr.bf16.mxu0 0
    %960 = vmatmul.mubr.bf16.gmra.mxu0 %v874
    %v961 = vpop.f32.mrf.mxu0
    %v962 = vadd.f32 %v789, %v961
    %v963 = vpop.f32.mrf.mxu0
    %v964 = vpop.f32.mrf.mxu0
    %v965 = vadd.f32 %v789, %v964
    %v966 = vpop.f32.mrf.mxu0
    %967 = vmatprep.mubr.bf16.mxu0 0
    %968 = vmatmul.mubr.bf16.gmra.mxu0 %v877
    %v969 = vpop.f32.mrf.mxu0
    %v970 = vadd.f32 %v789, %v969
    %v971 = vpop.f32.mrf.mxu0
    %v972 = vpop.f32.mrf.mxu0
    %v973 = vadd.f32 %v789, %v972
    %v974 = vpop.f32.mrf.mxu0
    %975 = vdwg.mxu0
    %v976 = vmul.f32 %v914, 0.01
    %v977 = vmul.f32 %v917, 0.01
    %v978 = vmul.f32 %v922, 0.01
    %v979 = vmul.f32 %v925, 0.01
    %v980 = vmul.f32 %v930, 0.01
    %v981 = vmul.f32 %v933, 0.01
    %v982 = vmul.f32 %v938, 0.01
    %v983 = vmul.f32 %v941, 0.01
    %v984 = vmul.f32 %v946, 0.01
    %v985 = vmul.f32 %v949, 0.01
    %v986 = vmul.f32 %v954, 0.01
    %v987 = vmul.f32 %v957, 0.01
    %v988 = vmul.f32 %v962, 0.01
    %v989 = vmul.f32 %v965, 0.01
    %v990 = vmul.f32 %v970, 0.01
    %v991 = vmul.f32 %v973, 0.01
    %v992 = vmax.f32 %v914, %v976
    %v993 = vmax.f32 %v917, %v977
    %v994 = vmax.f32 %v922, %v978
    %v995 = vmax.f32 %v925, %v979
    %v996 = vmax.f32 %v930, %v980
    %v997 = vmax.f32 %v933, %v981
    %v998 = vmax.f32 %v938, %v982
    %v999 = vmax.f32 %v941, %v983
    %v1000 = vmax.f32 %v946, %v984
    %v1001 = vmax.f32 %v949, %v985
    %v1002 = vmax.f32 %v954, %v986
    %v1003 = vmax.f32 %v957, %v987
    %v1004 = vmax.f32 %v962, %v988
    %v1005 = vmax.f32 %v965, %v989
    %v1006 = vmax.f32 %v970, %v990
    %v1007 = vmax.f32 %v973, %v991
    %s1008 = scalar_lea.vmem %s3, 256
    %v1009 = vld [vmem:[%s1008] sm:$0xff]
    %v1010 = vld [vmem:[%s1008 + $0x8] sm:$0xff]
    %v1011 = vld [vmem:[%s1008 + $0x10] sm:$0xff]
    %v1012 = vld [vmem:[%s1008 + $0x18] sm:$0xff]
    %v1013 = vld [vmem:[%s1008 + $0x20] sm:$0xff]
    %v1014 = vld [vmem:[%s1008 + $0x28] sm:$0xff]
    %v1015 = vld [vmem:[%s1008 + $0x30] sm:$0xff]
    %v1016 = vld [vmem:[%s1008 + $0x38] sm:$0xff]
    %1018 = vset.pattern.permute.xlu0 0
    %1019 = vperm.xlu0 %1018, %v992
    %v1020 = vpop.permute.xlu0 %1019
    %1023 = vset.pattern.permute.xlu0 0
    %1024 = vperm.xlu0 %1023, %v993
    %v1025 = vpop.permute.xlu0 %1024
    %1028 = vset.pattern.permute.xlu0 0
    %1029 = vperm.xlu0 %1028, %v994
    %v1030 = vpop.permute.xlu0 %1029
    %1033 = vset.pattern.permute.xlu0 0
    %1034 = vperm.xlu0 %1033, %v995
    %v1035 = vpop.permute.xlu0 %1034
    %1038 = vset.pattern.permute.xlu0 0
    %1039 = vperm.xlu0 %1038, %v996
    %v1040 = vpop.permute.xlu0 %1039
    %1043 = vset.pattern.permute.xlu0 0
    %1044 = vperm.xlu0 %1043, %v997
    %v1045 = vpop.permute.xlu0 %1044
    %1048 = vset.pattern.permute.xlu0 0
    %1049 = vperm.xlu0 %1048, %v998
    %v1050 = vpop.permute.xlu0 %1049
    %1053 = vset.pattern.permute.xlu0 0
    %1054 = vperm.xlu0 %1053, %v999
    %v1055 = vpop.permute.xlu0 %1054
    %v1057 = vmul.f32 %v1020, %v1009
    %v1058 = vmul.f32 %v1025, %v1010
    %v1059 = vmul.f32 %v1030, %v1011
    %v1060 = vmul.f32 %v1035, %v1012
    %v1061 = vmul.f32 %v1040, %v1013
    %v1062 = vmul.f32 %v1045, %v1014
    %v1063 = vmul.f32 %v1050, %v1015
    %v1064 = vmul.f32 %v1055, %v1016
    %s1065 = scalar_lea.vmem %s3, 320
    %v1066 = vld [vmem:[%s1065] sm:$0xff]
    %v1067 = vld [vmem:[%s1065 + $0x8] sm:$0xff]
    %v1068 = vld [vmem:[%s1065 + $0x10] sm:$0xff]
    %v1069 = vld [vmem:[%s1065 + $0x18] sm:$0xff]
    %v1070 = vld [vmem:[%s1065 + $0x20] sm:$0xff]
    %v1071 = vld [vmem:[%s1065 + $0x28] sm:$0xff]
    %v1072 = vld [vmem:[%s1065 + $0x30] sm:$0xff]
    %v1073 = vld [vmem:[%s1065 + $0x38] sm:$0xff]
    %1074 = vset.pattern.permute.xlu0 1
    %1075 = vperm.xlu0 %1074, %v992
    %v1076 = vpop.permute.xlu0 %1075
    %1078 = vset.pattern.permute.xlu0 1
    %1079 = vperm.xlu0 %1078, %v993
    %v1080 = vpop.permute.xlu0 %1079
    %1082 = vset.pattern.permute.xlu0 1
    %1083 = vperm.xlu0 %1082, %v994
    %v1084 = vpop.permute.xlu0 %1083
    %1086 = vset.pattern.permute.xlu0 1
    %1087 = vperm.xlu0 %1086, %v995
    %v1088 = vpop.permute.xlu0 %1087
    %1090 = vset.pattern.permute.xlu0 1
    %1091 = vperm.xlu0 %1090, %v996
    %v1092 = vpop.permute.xlu0 %1091
    %1094 = vset.pattern.permute.xlu0 1
    %1095 = vperm.xlu0 %1094, %v997
    %v1096 = vpop.permute.xlu0 %1095
    %1098 = vset.pattern.permute.xlu0 1
    %1099 = vperm.xlu0 %1098, %v998
    %v1100 = vpop.permute.xlu0 %1099
    %1102 = vset.pattern.permute.xlu0 1
    %1103 = vperm.xlu0 %1102, %v999
    %v1104 = vpop.permute.xlu0 %1103
    %v1106 = vmul.f32 %v1076, %v1066
    %v1107 = vmul.f32 %v1080, %v1067
    %v1108 = vmul.f32 %v1084, %v1068
    %v1109 = vmul.f32 %v1088, %v1069
    %v1110 = vmul.f32 %v1092, %v1070
    %v1111 = vmul.f32 %v1096, %v1071
    %v1112 = vmul.f32 %v1100, %v1072
    %v1113 = vmul.f32 %v1104, %v1073
    %v1114 = vadd.f32 %v1057, %v1106
    %v1115 = vadd.f32 %v1058, %v1107
    %v1116 = vadd.f32 %v1059, %v1108
    %v1117 = vadd.f32 %v1060, %v1109
    %v1118 = vadd.f32 %v1061, %v1110
    %v1119 = vadd.f32 %v1062, %v1111
    %v1120 = vadd.f32 %v1063, %v1112
    %v1121 = vadd.f32 %v1064, %v1113
    %s1122 = scalar_lea.vmem %s3, 384
    %v1123 = vld [vmem:[%s1122] sm:$0xff]
    %v1124 = vld [vmem:[%s1122 + $0x8] sm:$0xff]
    %v1125 = vld [vmem:[%s1122 + $0x10] sm:$0xff]
    %v1126 = vld [vmem:[%s1122 + $0x18] sm:$0xff]
    %v1127 = vld [vmem:[%s1122 + $0x20] sm:$0xff]
    %v1128 = vld [vmem:[%s1122 + $0x28] sm:$0xff]
    %v1129 = vld [vmem:[%s1122 + $0x30] sm:$0xff]
    %v1130 = vld [vmem:[%s1122 + $0x38] sm:$0xff]
    %1131 = vset.pattern.permute.xlu0 2
    %1132 = vperm.xlu0 %1131, %v992
    %v1133 = vpop.permute.xlu0 %1132
    %1135 = vset.pattern.permute.xlu0 2
    %1136 = vperm.xlu0 %1135, %v993
    %v1137 = vpop.permute.xlu0 %1136
    %1139 = vset.pattern.permute.xlu0 2
    %1140 = vperm.xlu0 %1139, %v994
    %v1141 = vpop.permute.xlu0 %1140
    %1143 = vset.pattern.permute.xlu0 2
    %1144 = vperm.xlu0 %1143, %v995
    %v1145 = vpop.permute.xlu0 %1144
    %1147 = vset.pattern.permute.xlu0 2
    %1148 = vperm.xlu0 %1147, %v996
    %v1149 = vpop.permute.xlu0 %1148
    %1151 = vset.pattern.permute.xlu0 2
    %1152 = vperm.xlu0 %1151, %v997
    %v1153 = vpop.permute.xlu0 %1152
    %1155 = vset.pattern.permute.xlu0 2
    %1156 = vperm.xlu0 %1155, %v998
    %v1157 = vpop.permute.xlu0 %1156
    %1159 = vset.pattern.permute.xlu0 2
    %1160 = vperm.xlu0 %1159, %v999
    %v1161 = vpop.permute.xlu0 %1160
    %v1163 = vmul.f32 %v1133, %v1123
    %v1164 = vmul.f32 %v1137, %v1124
    %v1165 = vmul.f32 %v1141, %v1125
    %v1166 = vmul.f32 %v1145, %v1126
    %v1167 = vmul.f32 %v1149, %v1127
    %v1168 = vmul.f32 %v1153, %v1128
    %v1169 = vmul.f32 %v1157, %v1129
    %v1170 = vmul.f32 %v1161, %v1130
    %v1171 = vadd.f32 %v1114, %v1163
    %v1172 = vadd.f32 %v1115, %v1164
    %v1173 = vadd.f32 %v1116, %v1165
    %v1174 = vadd.f32 %v1117, %v1166
    %v1175 = vadd.f32 %v1118, %v1167
    %v1176 = vadd.f32 %v1119, %v1168
    %v1177 = vadd.f32 %v1120, %v1169
    %v1178 = vadd.f32 %v1121, %v1170
    %s1179 = scalar_lea.vmem %s3, 448
    %v1180 = vld [vmem:[%s1179] sm:$0xff]
    %v1181 = vld [vmem:[%s1179 + $0x8] sm:$0xff]
    %v1182 = vld [vmem:[%s1179 + $0x10] sm:$0xff]
    %v1183 = vld [vmem:[%s1179 + $0x18] sm:$0xff]
    %v1184 = vld [vmem:[%s1179 + $0x20] sm:$0xff]
    %v1185 = vld [vmem:[%s1179 + $0x28] sm:$0xff]
    %v1186 = vld [vmem:[%s1179 + $0x30] sm:$0xff]
    %v1187 = vld [vmem:[%s1179 + $0x38] sm:$0xff]
    %1188 = vset.pattern.permute.xlu0 3
    %1189 = vperm.xlu0 %1188, %v992
    %v1190 = vpop.permute.xlu0 %1189
    %1192 = vset.pattern.permute.xlu0 3
    %1193 = vperm.xlu0 %1192, %v993
    %v1194 = vpop.permute.xlu0 %1193
    %1196 = vset.pattern.permute.xlu0 3
    %1197 = vperm.xlu0 %1196, %v994
    %v1198 = vpop.permute.xlu0 %1197
    %1200 = vset.pattern.permute.xlu0 3
    %1201 = vperm.xlu0 %1200, %v995
    %v1202 = vpop.permute.xlu0 %1201
    %1204 = vset.pattern.permute.xlu0 3
    %1205 = vperm.xlu0 %1204, %v996
    %v1206 = vpop.permute.xlu0 %1205
    %1208 = vset.pattern.permute.xlu0 3
    %1209 = vperm.xlu0 %1208, %v997
    %v1210 = vpop.permute.xlu0 %1209
    %1212 = vset.pattern.permute.xlu0 3
    %1213 = vperm.xlu0 %1212, %v998
    %v1214 = vpop.permute.xlu0 %1213
    %1216 = vset.pattern.permute.xlu0 3
    %1217 = vperm.xlu0 %1216, %v999
    %v1218 = vpop.permute.xlu0 %1217
    %v1220 = vmul.f32 %v1190, %v1180
    %v1221 = vmul.f32 %v1194, %v1181
    %v1222 = vmul.f32 %v1198, %v1182
    %v1223 = vmul.f32 %v1202, %v1183
    %v1224 = vmul.f32 %v1206, %v1184
    %v1225 = vmul.f32 %v1210, %v1185
    %v1226 = vmul.f32 %v1214, %v1186
    %v1227 = vmul.f32 %v1218, %v1187
    %v1228 = vadd.f32 %v1171, %v1220
    %v1229 = vadd.f32 %v1172, %v1221
    %v1230 = vadd.f32 %v1173, %v1222
    %v1231 = vadd.f32 %v1174, %v1223
    %v1232 = vadd.f32 %v1175, %v1224
    %v1233 = vadd.f32 %v1176, %v1225
    %v1234 = vadd.f32 %v1177, %v1226
    %v1235 = vadd.f32 %v1178, %v1227
    %v1236 = vsel %vm502, %v1228, 0.0
    %v1237 = vsel %vm502, %v1229, 0.0
    %v1238 = vadd.f32 %v1236, %v1237
    %v1239 = vsel %vm502, %v1230, 0.0
    %v1240 = vadd.f32 %v1238, %v1239
    %v1241 = vsel %vm502, %v1231, 0.0
    %v1242 = vadd.f32 %v1240, %v1241
    %v1243 = vsel %vm502, %v1232, 0.0
    %v1244 = vadd.f32 %v1242, %v1243
    %v1245 = vsel %vm502, %v1233, 0.0
    %v1246 = vadd.f32 %v1244, %v1245
    %v1247 = vsel %vm502, %v1234, 0.0
    %v1248 = vadd.f32 %v1246, %v1247
    %v1249 = vsel %vm502, %v1235, 0.0
    %v1250 = vadd.f32 %v1248, %v1249
    %v1251 = vrot.slane %v1250, 4
    %v1252 = vadd.f32 %v1250, %v1251
    %v1253 = vrot.slane %v1252, 2
    %v1254 = vadd.f32 %v1252, %v1253
    %v1255 = vrot.slane %v1254, 1
    %v1256 = vadd.f32 %v1254, %v1255
    %1258 = vset.pattern.permute.xlu0 0
    %1259 = vperm.xlu0 %1258, %v1000
    %v1260 = vpop.permute.xlu0 %1259
    %1263 = vset.pattern.permute.xlu0 0
    %1264 = vperm.xlu0 %1263, %v1001
    %v1265 = vpop.permute.xlu0 %1264
    %1268 = vset.pattern.permute.xlu0 0
    %1269 = vperm.xlu0 %1268, %v1002
    %v1270 = vpop.permute.xlu0 %1269
    %1273 = vset.pattern.permute.xlu0 0
    %1274 = vperm.xlu0 %1273, %v1003
    %v1275 = vpop.permute.xlu0 %1274
    %1278 = vset.pattern.permute.xlu0 0
    %1279 = vperm.xlu0 %1278, %v1004
    %v1280 = vpop.permute.xlu0 %1279
    %1283 = vset.pattern.permute.xlu0 0
    %1284 = vperm.xlu0 %1283, %v1005
    %v1285 = vpop.permute.xlu0 %1284
    %1288 = vset.pattern.permute.xlu0 0
    %1289 = vperm.xlu0 %1288, %v1006
    %v1290 = vpop.permute.xlu0 %1289
    %1293 = vset.pattern.permute.xlu0 0
    %1294 = vperm.xlu0 %1293, %v1007
    %v1295 = vpop.permute.xlu0 %1294
    %v1297 = vmul.f32 %v1260, %v1009
    %v1298 = vmul.f32 %v1265, %v1010
    %v1299 = vmul.f32 %v1270, %v1011
    %v1300 = vmul.f32 %v1275, %v1012
    %v1301 = vmul.f32 %v1280, %v1013
    %v1302 = vmul.f32 %v1285, %v1014
    %v1303 = vmul.f32 %v1290, %v1015
    %v1304 = vmul.f32 %v1295, %v1016
    %1305 = vset.pattern.permute.xlu0 1
    %1306 = vperm.xlu0 %1305, %v1000
    %v1307 = vpop.permute.xlu0 %1306
    %1309 = vset.pattern.permute.xlu0 1
    %1310 = vperm.xlu0 %1309, %v1001
    %v1311 = vpop.permute.xlu0 %1310
    %1313 = vset.pattern.permute.xlu0 1
    %1314 = vperm.xlu0 %1313, %v1002
    %v1315 = vpop.permute.xlu0 %1314
    %1317 = vset.pattern.permute.xlu0 1
    %1318 = vperm.xlu0 %1317, %v1003
    %v1319 = vpop.permute.xlu0 %1318
    %1321 = vset.pattern.permute.xlu0 1
    %1322 = vperm.xlu0 %1321, %v1004
    %v1323 = vpop.permute.xlu0 %1322
    %1325 = vset.pattern.permute.xlu0 1
    %1326 = vperm.xlu0 %1325, %v1005
    %v1327 = vpop.permute.xlu0 %1326
    %1329 = vset.pattern.permute.xlu0 1
    %1330 = vperm.xlu0 %1329, %v1006
    %v1331 = vpop.permute.xlu0 %1330
    %1333 = vset.pattern.permute.xlu0 1
    %1334 = vperm.xlu0 %1333, %v1007
    %v1335 = vpop.permute.xlu0 %1334
    %v1337 = vmul.f32 %v1307, %v1066
    %v1338 = vmul.f32 %v1311, %v1067
    %v1339 = vmul.f32 %v1315, %v1068
    %v1340 = vmul.f32 %v1319, %v1069
    %v1341 = vmul.f32 %v1323, %v1070
    %v1342 = vmul.f32 %v1327, %v1071
    %v1343 = vmul.f32 %v1331, %v1072
    %v1344 = vmul.f32 %v1335, %v1073
    %v1345 = vadd.f32 %v1297, %v1337
    %v1346 = vadd.f32 %v1298, %v1338
    %v1347 = vadd.f32 %v1299, %v1339
    %v1348 = vadd.f32 %v1300, %v1340
    %v1349 = vadd.f32 %v1301, %v1341
    %v1350 = vadd.f32 %v1302, %v1342
    %v1351 = vadd.f32 %v1303, %v1343
    %v1352 = vadd.f32 %v1304, %v1344
    %1353 = vset.pattern.permute.xlu0 2
    %1354 = vperm.xlu0 %1353, %v1000
    %v1355 = vpop.permute.xlu0 %1354
    %1357 = vset.pattern.permute.xlu0 2
    %1358 = vperm.xlu0 %1357, %v1001
    %v1359 = vpop.permute.xlu0 %1358
    %1361 = vset.pattern.permute.xlu0 2
    %1362 = vperm.xlu0 %1361, %v1002
    %v1363 = vpop.permute.xlu0 %1362
    %1365 = vset.pattern.permute.xlu0 2
    %1366 = vperm.xlu0 %1365, %v1003
    %v1367 = vpop.permute.xlu0 %1366
    %1369 = vset.pattern.permute.xlu0 2
    %1370 = vperm.xlu0 %1369, %v1004
    %v1371 = vpop.permute.xlu0 %1370
    %1373 = vset.pattern.permute.xlu0 2
    %1374 = vperm.xlu0 %1373, %v1005
    %v1375 = vpop.permute.xlu0 %1374
    %1377 = vset.pattern.permute.xlu0 2
    %1378 = vperm.xlu0 %1377, %v1006
    %v1379 = vpop.permute.xlu0 %1378
    %1381 = vset.pattern.permute.xlu0 2
    %1382 = vperm.xlu0 %1381, %v1007
    %v1383 = vpop.permute.xlu0 %1382
    %v1385 = vmul.f32 %v1355, %v1123
    %v1386 = vmul.f32 %v1359, %v1124
    %v1387 = vmul.f32 %v1363, %v1125
    %v1388 = vmul.f32 %v1367, %v1126
    %v1389 = vmul.f32 %v1371, %v1127
    %v1390 = vmul.f32 %v1375, %v1128
    %v1391 = vmul.f32 %v1379, %v1129
    %v1392 = vmul.f32 %v1383, %v1130
    %v1393 = vadd.f32 %v1345, %v1385
    %v1394 = vadd.f32 %v1346, %v1386
    %v1395 = vadd.f32 %v1347, %v1387
    %v1396 = vadd.f32 %v1348, %v1388
    %v1397 = vadd.f32 %v1349, %v1389
    %v1398 = vadd.f32 %v1350, %v1390
    %v1399 = vadd.f32 %v1351, %v1391
    %v1400 = vadd.f32 %v1352, %v1392
    %1401 = vset.pattern.permute.xlu0 3
    %1402 = vperm.xlu0 %1401, %v1000
    %v1403 = vpop.permute.xlu0 %1402
    %1405 = vset.pattern.permute.xlu0 3
    %1406 = vperm.xlu0 %1405, %v1001
    %v1407 = vpop.permute.xlu0 %1406
    %1409 = vset.pattern.permute.xlu0 3
    %1410 = vperm.xlu0 %1409, %v1002
    %v1411 = vpop.permute.xlu0 %1410
    %1413 = vset.pattern.permute.xlu0 3
    %1414 = vperm.xlu0 %1413, %v1003
    %v1415 = vpop.permute.xlu0 %1414
    %1417 = vset.pattern.permute.xlu0 3
    %1418 = vperm.xlu0 %1417, %v1004
    %v1419 = vpop.permute.xlu0 %1418
    %1421 = vset.pattern.permute.xlu0 3
    %1422 = vperm.xlu0 %1421, %v1005
    %v1423 = vpop.permute.xlu0 %1422
    %1425 = vset.pattern.permute.xlu0 3
    %1426 = vperm.xlu0 %1425, %v1006
    %v1427 = vpop.permute.xlu0 %1426
    %1429 = vset.pattern.permute.xlu0 3
    %1430 = vperm.xlu0 %1429, %v1007
    %v1431 = vpop.permute.xlu0 %1430
    %v1433 = vmul.f32 %v1403, %v1180
    %v1434 = vmul.f32 %v1407, %v1181
    %v1435 = vmul.f32 %v1411, %v1182
    %v1436 = vmul.f32 %v1415, %v1183
    %v1437 = vmul.f32 %v1419, %v1184
    %v1438 = vmul.f32 %v1423, %v1185
    %v1439 = vmul.f32 %v1427, %v1186
    %v1440 = vmul.f32 %v1431, %v1187
    %v1441 = vadd.f32 %v1393, %v1433
    %v1442 = vadd.f32 %v1394, %v1434
    %v1443 = vadd.f32 %v1395, %v1435
    %v1444 = vadd.f32 %v1396, %v1436
    %v1445 = vadd.f32 %v1397, %v1437
    %v1446 = vadd.f32 %v1398, %v1438
    %v1447 = vadd.f32 %v1399, %v1439
    %v1448 = vadd.f32 %v1400, %v1440
    %v1449 = vsel %vm502, %v1441, 0.0
    %v1450 = vsel %vm502, %v1442, 0.0
    %v1451 = vadd.f32 %v1449, %v1450
    %v1452 = vsel %vm502, %v1443, 0.0
    %v1453 = vadd.f32 %v1451, %v1452
    %v1454 = vsel %vm502, %v1444, 0.0
    %v1455 = vadd.f32 %v1453, %v1454
    %v1456 = vsel %vm502, %v1445, 0.0
    %v1457 = vadd.f32 %v1455, %v1456
    %v1458 = vsel %vm502, %v1446, 0.0
    %v1459 = vadd.f32 %v1457, %v1458
    %v1460 = vsel %vm502, %v1447, 0.0
    %v1461 = vadd.f32 %v1459, %v1460
    %v1462 = vsel %vm502, %v1448, 0.0
    %v1463 = vadd.f32 %v1461, %v1462
    %v1464 = vrot.slane %v1463, 4
    %v1465 = vadd.f32 %v1463, %v1464
    %v1466 = vrot.slane %v1465, 2
    %v1467 = vadd.f32 %v1465, %v1466
    %v1468 = vrot.slane %v1467, 1
    %v1469 = vadd.f32 %v1467, %v1468
    %v1470 = vsel %vm737, %v1256, %v1469
    %s1471 = scalar_lea.vmem %s4, 1
    %v1472 = vld [vmem:[%s1471] sm:$0x1]
    %v1474 = vlaneseq
    %v1475 = vshrl.u32 %v1474, 7
    %v1476 = vsub.s32 0, %v1475
    %v1477 = vrot.slane %v1472, %v1476
    %v1479 = vadd.f32 %v1470, %v1477
    %v1480 = vtanh.pop %v1479
    %s1481 = scalar_lea.vmem %s5, 2
    %v1482 = vld [vmem:[%s1481] sm:$0x3]
    %v1483 = vmul.f32 %v1480, 0.5
    %v1484 = vmul.f32 %v1483, 1.442695
    %v1485 = vpow.pop %v1484
    %1487 = vrot.lane.b32.xlu0 %v1485, 124
    %v1488 = vpop.permute.xlu0 %1487
    %v1490 = vmul.f32 %v1482, %v1488
    %v1491 = vadd.f32 %v1480, %v1490
    %v1492 = vmul.f32 %v747, 2.0
    %v1493 = vmul.f32 %v1492, 1.442695
    %v1494 = vpow.pop %v1493
    %v1495 = vmul.f32 %v1480, 2.0
    %v1496 = vmul.f32 %v1495, 1.442695
    %v1497 = vpow.pop %v1496
    %v1498 = vsub.f32 %v1480, %v747
    %v1499 = vsub.f32 %v747, %v1480
    %v1500 = vmul.f32 %v1499, %v1499
    %1502 = vrot.lane.b32.xlu0 %v1500, 4
    %v1503 = vpop.permute.xlu0 %1502
    %v1505 = vadd.f32 %v1494, %v1503
    %v1506 = vmul.f32 %v1497, 2.0
    %v1507 = vrcp.pop %v1506
    %v1508 = vmul.f32 %v1505, %v1507
    %v1509 = vadd.f32 %v1498, %v1508
    %v1510 = vsub.f32 %v1509, 0.5
    %1512 = vrot.lane.b32.xlu0 %v1510, 124
    %v1513 = vpop.permute.xlu0 %1512
    %vm1515 = vcmask 25600
    %v1516 = vsel %vm1515, %v1513, 0.0
    %1517 = vadd.xlane.f32.xlu0 %v1516
    %v1518 = vpop.xlane.xlu0 %1517
    %vm1519 = vcmask 1041408
    %v1520 = vsel %vm1519, %v1518, 0.0
    %v1521 = vrot.slane %v1520, 4
    %v1522 = vadd.f32 %v1520, %v1521
    %v1523 = vrot.slane %v1522, 2
    %v1524 = vadd.f32 %v1522, %v1523
    %v1525 = vrot.slane %v1524, 1
    %v1526 = vadd.f32 %v1524, %v1525
    %v1527 = vrcp.pop 2.0
    %v1528 = vmul.f32 %v1526, %v1527
    %v1529 = vmul.f32 %v1498, %v1498
    %1531 = vrot.lane.b32.xlu0 %v1529, 4
    %v1532 = vpop.permute.xlu0 %1531
    %v1534 = vadd.f32 %v1497, %v1532
    %v1535 = vmul.f32 %v1494, 2.0
    %v1536 = vrcp.pop %v1535
    %v1537 = vmul.f32 %v1534, %v1536
    %v1538 = vadd.f32 %v1499, %v1537
    %v1539 = vsub.f32 %v1538, 0.5
    %1541 = vrot.lane.b32.xlu0 %v1539, 124
    %v1542 = vpop.permute.xlu0 %1541
    %v1544 = vsel %vm1515, %v1542, 0.0
    %1545 = vadd.xlane.f32.xlu0 %v1544
    %v1546 = vpop.xlane.xlu0 %1545
    %v1547 = vsel %vm1519, %v1546, 0.0
    %v1548 = vrot.slane %v1547, 4
    %v1549 = vadd.f32 %v1547, %v1548
    %v1550 = vrot.slane %v1549, 2
    %v1551 = vadd.f32 %v1549, %v1550
    %v1552 = vrot.slane %v1551, 1
    %v1553 = vadd.f32 %v1551, %v1552
    %v1554 = vmul.f32 %v1553, %v1527
    %v1555 = vadd.f32 %v1528, %v1554
    %v1556 = vsub.f32 0.0, %v757
    %v1557 = vmul.f32 %v1556, 1.442695
    %v1558 = vpow.pop %v1557
    %v1559 = vadd.f32 %v1558, 1.0
    %v1560 = vrcp.pop %v1559
    %v1561 = vmul.f32 1.0, %v1560
    %v1562 = vsub.f32 0.0, %v1491
    %v1563 = vmul.f32 %v1562, 1.442695
    %v1564 = vpow.pop %v1563
    %v1565 = vadd.f32 %v1564, 1.0
    %v1566 = vrcp.pop %v1565
    %v1567 = vmul.f32 1.0, %v1566
    %v1568 = vmax.f32 %v1556, 0.0
    %v1569 = vand.u32 2147483647, %v1556
    %v1570 = vsub.f32 0.0, %v1569
    %v1571 = vmul.f32 %v1570, 1.442695
    %v1572 = vpow.pop %v1571
    %v1573 = vadd.f32 %v1572, 1.0
    %v1574 = vlog2.pop %v1573
    %v1575 = vmul.f32 %v1574, 0.6931472
    %v1576 = vadd.f32 %v1568, %v1575
    %v1577 = vmul.f32 %v1567, %v1576
    %v1578 = vsub.f32 1.0, %v1567
    %v1579 = vmax.f32 %v757, 0.0
    %v1580 = vand.u32 2147483647, %v757
    %v1581 = vsub.f32 0.0, %v1580
    %v1582 = vmul.f32 %v1581, 1.442695
    %v1583 = vpow.pop %v1582
    %v1584 = vadd.f32 %v1583, 1.0
    %v1585 = vlog2.pop %v1584
    %v1586 = vmul.f32 %v1585, 0.6931472
    %v1587 = vadd.f32 %v1579, %v1586
    %v1588 = vmul.f32 %v1578, %v1587
    %v1589 = vadd.f32 %v1577, %v1588
    %v1590 = vsel %vm1515, %v1589, 0.0
    %1591 = vadd.xlane.f32.xlu0 %v1590
    %v1592 = vpop.xlane.xlu0 %1591
    %v1593 = vsel %vm1519, %v1592, 0.0
    %v1594 = vrot.slane %v1593, 4
    %v1595 = vadd.f32 %v1593, %v1594
    %v1596 = vrot.slane %v1595, 2
    %v1597 = vadd.f32 %v1595, %v1596
    %v1598 = vrot.slane %v1597, 1
    %v1599 = vadd.f32 %v1597, %v1598
    %v1600 = vmax.f32 %v1562, 0.0
    %v1601 = vand.u32 2147483647, %v1562
    %v1602 = vsub.f32 0.0, %v1601
    %v1603 = vmul.f32 %v1602, 1.442695
    %v1604 = vpow.pop %v1603
    %v1605 = vadd.f32 %v1604, 1.0
    %v1606 = vlog2.pop %v1605
    %v1607 = vmul.f32 %v1606, 0.6931472
    %v1608 = vadd.f32 %v1600, %v1607
    %v1609 = vmul.f32 %v1561, %v1608
    %v1610 = vsub.f32 1.0, %v1561
    %v1611 = vmax.f32 %v1491, 0.0
    %v1612 = vand.u32 2147483647, %v1491
    %v1613 = vsub.f32 0.0, %v1612
    %v1614 = vmul.f32 %v1613, 1.442695
    %v1615 = vpow.pop %v1614
    %v1616 = vadd.f32 %v1615, 1.0
    %v1617 = vlog2.pop %v1616
    %v1618 = vmul.f32 %v1617, 0.6931472
    %v1619 = vadd.f32 %v1611, %v1618
    %v1620 = vmul.f32 %v1610, %v1619
    %v1621 = vadd.f32 %v1609, %v1620
    %v1622 = vsel %vm1515, %v1621, 0.0
    %1623 = vadd.xlane.f32.xlu0 %v1622
    %v1624 = vpop.xlane.xlu0 %1623
    %v1625 = vsel %vm1519, %v1624, 0.0
    %v1626 = vrot.slane %v1625, 4
    %v1627 = vadd.f32 %v1625, %v1626
    %v1628 = vrot.slane %v1627, 2
    %v1629 = vadd.f32 %v1627, %v1628
    %v1630 = vrot.slane %v1629, 1
    %v1631 = vadd.f32 %v1629, %v1630
    %v1632 = vadd.f32 %v1599, %v1631
    %v1633 = vsub.f32 %v1632, %v1555
    %v1634 = vmax.f32 %v1633, -1.0
    %v1635 = vmin.f32 %v1634, 1.0
    %s1636 = scalar_lea.vmem %s1, 64
    %v1637 = vld [vmem:[%s1636] sm:$0xf]
    %v1638 = vld [vmem:[%s1636 + $0x4] sm:$0xf]
    %v1639 = vld [vmem:[%s1636 + $0x8] sm:$0xf]
    %v1640 = vld [vmem:[%s1636 + $0xc] sm:$0xf]
    %v1641 = vld [vmem:[%s1636 + $0x10] sm:$0xf]
    %v1642 = vld [vmem:[%s1636 + $0x14] sm:$0xf]
    %v1643 = vld [vmem:[%s1636 + $0x18] sm:$0xf]
    %v1644 = vld [vmem:[%s1636 + $0x1c] sm:$0xf]
    %s1645 = scalar_lea.vmem %s2, 2
    %v1646 = vld [vmem:[%s1645] sm:$0x1]
    %v1648 = vlaneseq
    %v1649 = vshrl.u32 %v1648, 7
    %v1650 = vsub.s32 0, %v1649
    %v1651 = vrot.slane %v1646, %v1650
    %v1661 = vunpack.c.l.b16 %v1637
    %v1662 = vunpack.c.l.b16 %v1638
    %v1663 = vunpack.c.l.b16 %v1639
    %v1664 = vunpack.c.l.b16 %v1640
    %v1665 = vunpack.c.l.b16 %v1641
    %v1666 = vunpack.c.l.b16 %v1642
    %v1667 = vunpack.c.l.b16 %v1643
    %v1668 = vunpack.c.l.b16 %v1644
    %v1669 = vpack.c.b16 %v1662, %v1661
    %v1670 = vpack.c.b16 %v1664, %v1663
    %v1671 = vpack.c.b16 %v1666, %v1665
    %v1672 = vpack.c.b16 %v1668, %v1667
    %1677 = vmatprep.subr.bf16.mxu0 0
    %1678 = vmatpush1.bf16.msra.mxu0 0
    %1679 = vmatprep.subr.bf16.mxu0 0
    %1680 = vmatpush1.bf16.msra.mxu0 0
    %1681 = vmatprep.subr.bf16.mxu0 0
    %1682 = vmatpush1.bf16.msra.mxu0 0
    %1683 = vmatprep.subr.bf16.mxu0 0
    %1684 = vmatpush1.bf16.msra.mxu0 0
    %1685 = vmatprep.subr.bf16.mxu0 0
    %1686 = vmatpush1.bf16.msra.mxu0 %v1672
    %1687 = vmatprep.subr.bf16.mxu0 0
    %1688 = vmatpush1.bf16.msra.mxu0 %v1671
    %1689 = vmatprep.subr.bf16.mxu0 0
    %1690 = vmatpush1.bf16.msra.mxu0 %v1670
    %1691 = vmatprep.subr.bf16.mxu0 0
    %1692 = vmatpush1.bf16.msra.mxu0 %v1669
    %1693 = vmatprep.subr.bf16.mxu0 0
    %1694 = vmatpush2.bf16.msra.mxu0 0
    %1695 = vmatprep.subr.bf16.mxu0 0
    %1696 = vmatpush2.bf16.msra.mxu0 0
    %1697 = vmatprep.subr.bf16.mxu0 0
    %1698 = vmatpush2.bf16.msra.mxu0 0
    %1699 = vmatprep.subr.bf16.mxu0 0
    %1700 = vmatpush2.bf16.msra.mxu0 0
    %1701 = vmatprep.subr.bf16.mxu0 0
    %1702 = vmatpush2.bf16.msra.mxu0 0
    %1703 = vmatprep.subr.bf16.mxu0 0
    %1704 = vmatpush2.bf16.msra.mxu0 0
    %1705 = vmatprep.subr.bf16.mxu0 0
    %1706 = vmatpush2.bf16.msra.mxu0 0
    %1707 = vmatprep.subr.bf16.mxu0 0
    %1708 = vmatpush2.bf16.msra.mxu0 0
    %1709 = vmatprep.mubr.bf16.mxu0 0
    %1710 = vmatmul.mubr.bf16.gmra.mxu0 %v123
    %v1711 = vpop.f32.mrf.mxu0
    %v1712 = vadd.f32 %v1651, %v1711
    %v1713 = vpop.f32.mrf.mxu0
    %v1714 = vpop.f32.mrf.mxu0
    %v1715 = vadd.f32 %v1651, %v1714
    %v1716 = vpop.f32.mrf.mxu0
    %1717 = vmatprep.mubr.bf16.mxu0 0
    %1718 = vmatmul.mubr.bf16.gmra.mxu0 %v126
    %v1719 = vpop.f32.mrf.mxu0
    %v1720 = vadd.f32 %v1651, %v1719
    %v1721 = vpop.f32.mrf.mxu0
    %v1722 = vpop.f32.mrf.mxu0
    %v1723 = vadd.f32 %v1651, %v1722
    %v1724 = vpop.f32.mrf.mxu0
    %1725 = vmatprep.mubr.bf16.mxu0 0
    %1726 = vmatmul.mubr.bf16.gmra.mxu0 %v129
    %v1727 = vpop.f32.mrf.mxu0
    %v1728 = vadd.f32 %v1651, %v1727
    %v1729 = vpop.f32.mrf.mxu0
    %v1730 = vpop.f32.mrf.mxu0
    %v1731 = vadd.f32 %v1651, %v1730
    %v1732 = vpop.f32.mrf.mxu0
    %1733 = vmatprep.mubr.bf16.mxu0 0
    %1734 = vmatmul.mubr.bf16.gmra.mxu0 %v132
    %v1735 = vpop.f32.mrf.mxu0
    %v1736 = vadd.f32 %v1651, %v1735
    %v1737 = vpop.f32.mrf.mxu0
    %v1738 = vpop.f32.mrf.mxu0
    %v1739 = vadd.f32 %v1651, %v1738
    %v1740 = vpop.f32.mrf.mxu0
    %1741 = vmatprep.mubr.bf16.mxu0 0
    %1742 = vmatmul.mubr.bf16.gmra.mxu0 %v135
    %v1743 = vpop.f32.mrf.mxu0
    %v1744 = vadd.f32 %v1651, %v1743
    %v1745 = vpop.f32.mrf.mxu0
    %v1746 = vpop.f32.mrf.mxu0
    %v1747 = vadd.f32 %v1651, %v1746
    %v1748 = vpop.f32.mrf.mxu0
    %1749 = vmatprep.mubr.bf16.mxu0 0
    %1750 = vmatmul.mubr.bf16.gmra.mxu0 %v138
    %v1751 = vpop.f32.mrf.mxu0
    %v1752 = vadd.f32 %v1651, %v1751
    %v1753 = vpop.f32.mrf.mxu0
    %v1754 = vpop.f32.mrf.mxu0
    %v1755 = vadd.f32 %v1651, %v1754
    %v1756 = vpop.f32.mrf.mxu0
    %1757 = vmatprep.mubr.bf16.mxu0 0
    %1758 = vmatmul.mubr.bf16.gmra.mxu0 %v141
    %v1759 = vpop.f32.mrf.mxu0
    %v1760 = vadd.f32 %v1651, %v1759
    %v1761 = vpop.f32.mrf.mxu0
    %v1762 = vpop.f32.mrf.mxu0
    %v1763 = vadd.f32 %v1651, %v1762
    %v1764 = vpop.f32.mrf.mxu0
    %1765 = vmatprep.mubr.bf16.mxu0 0
    %1766 = vmatmul.mubr.bf16.gmra.mxu0 %v144
    %v1767 = vpop.f32.mrf.mxu0
    %v1768 = vadd.f32 %v1651, %v1767
    %v1769 = vpop.f32.mrf.mxu0
    %v1770 = vpop.f32.mrf.mxu0
    %v1771 = vadd.f32 %v1651, %v1770
    %v1772 = vpop.f32.mrf.mxu0
    %1773 = vdwg.mxu0
    %v1774 = vmul.f32 %v1712, 0.01
    %v1775 = vmul.f32 %v1715, 0.01
    %v1776 = vmul.f32 %v1720, 0.01
    %v1777 = vmul.f32 %v1723, 0.01
    %v1778 = vmul.f32 %v1728, 0.01
    %v1779 = vmul.f32 %v1731, 0.01
    %v1780 = vmul.f32 %v1736, 0.01
    %v1781 = vmul.f32 %v1739, 0.01
    %v1782 = vmul.f32 %v1744, 0.01
    %v1783 = vmul.f32 %v1747, 0.01
    %v1784 = vmul.f32 %v1752, 0.01
    %v1785 = vmul.f32 %v1755, 0.01
    %v1786 = vmul.f32 %v1760, 0.01
    %v1787 = vmul.f32 %v1763, 0.01
    %v1788 = vmul.f32 %v1768, 0.01
    %v1789 = vmul.f32 %v1771, 0.01
    %v1790 = vmax.f32 %v1712, %v1774
    %v1791 = vmax.f32 %v1715, %v1775
    %v1792 = vmax.f32 %v1720, %v1776
    %v1793 = vmax.f32 %v1723, %v1777
    %v1794 = vmax.f32 %v1728, %v1778
    %v1795 = vmax.f32 %v1731, %v1779
    %v1796 = vmax.f32 %v1736, %v1780
    %v1797 = vmax.f32 %v1739, %v1781
    %v1798 = vmax.f32 %v1744, %v1782
    %v1799 = vmax.f32 %v1747, %v1783
    %v1800 = vmax.f32 %v1752, %v1784
    %v1801 = vmax.f32 %v1755, %v1785
    %v1802 = vmax.f32 %v1760, %v1786
    %v1803 = vmax.f32 %v1763, %v1787
    %v1804 = vmax.f32 %v1768, %v1788
    %v1805 = vmax.f32 %v1771, %v1789
    %s1806 = scalar_lea.vmem %s3, 512
    %v1807 = vld [vmem:[%s1806] sm:$0xff]
    %v1808 = vld [vmem:[%s1806 + $0x8] sm:$0xff]
    %v1809 = vld [vmem:[%s1806 + $0x10] sm:$0xff]
    %v1810 = vld [vmem:[%s1806 + $0x18] sm:$0xff]
    %v1811 = vld [vmem:[%s1806 + $0x20] sm:$0xff]
    %v1812 = vld [vmem:[%s1806 + $0x28] sm:$0xff]
    %v1813 = vld [vmem:[%s1806 + $0x30] sm:$0xff]
    %v1814 = vld [vmem:[%s1806 + $0x38] sm:$0xff]
    %1816 = vset.pattern.permute.xlu0 0
    %1817 = vperm.xlu0 %1816, %v1790
    %v1818 = vpop.permute.xlu0 %1817
    %1821 = vset.pattern.permute.xlu0 0
    %1822 = vperm.xlu0 %1821, %v1791
    %v1823 = vpop.permute.xlu0 %1822
    %1826 = vset.pattern.permute.xlu0 0
    %1827 = vperm.xlu0 %1826, %v1792
    %v1828 = vpop.permute.xlu0 %1827
    %1831 = vset.pattern.permute.xlu0 0
    %1832 = vperm.xlu0 %1831, %v1793
    %v1833 = vpop.permute.xlu0 %1832
    %1836 = vset.pattern.permute.xlu0 0
    %1837 = vperm.xlu0 %1836, %v1794
    %v1838 = vpop.permute.xlu0 %1837
    %1841 = vset.pattern.permute.xlu0 0
    %1842 = vperm.xlu0 %1841, %v1795
    %v1843 = vpop.permute.xlu0 %1842
    %1846 = vset.pattern.permute.xlu0 0
    %1847 = vperm.xlu0 %1846, %v1796
    %v1848 = vpop.permute.xlu0 %1847
    %1851 = vset.pattern.permute.xlu0 0
    %1852 = vperm.xlu0 %1851, %v1797
    %v1853 = vpop.permute.xlu0 %1852
    %v1855 = vmul.f32 %v1818, %v1807
    %v1856 = vmul.f32 %v1823, %v1808
    %v1857 = vmul.f32 %v1828, %v1809
    %v1858 = vmul.f32 %v1833, %v1810
    %v1859 = vmul.f32 %v1838, %v1811
    %v1860 = vmul.f32 %v1843, %v1812
    %v1861 = vmul.f32 %v1848, %v1813
    %v1862 = vmul.f32 %v1853, %v1814
    %s1863 = scalar_lea.vmem %s3, 576
    %v1864 = vld [vmem:[%s1863] sm:$0xff]
    %v1865 = vld [vmem:[%s1863 + $0x8] sm:$0xff]
    %v1866 = vld [vmem:[%s1863 + $0x10] sm:$0xff]
    %v1867 = vld [vmem:[%s1863 + $0x18] sm:$0xff]
    %v1868 = vld [vmem:[%s1863 + $0x20] sm:$0xff]
    %v1869 = vld [vmem:[%s1863 + $0x28] sm:$0xff]
    %v1870 = vld [vmem:[%s1863 + $0x30] sm:$0xff]
    %v1871 = vld [vmem:[%s1863 + $0x38] sm:$0xff]
    %1872 = vset.pattern.permute.xlu0 1
    %1873 = vperm.xlu0 %1872, %v1790
    %v1874 = vpop.permute.xlu0 %1873
    %1876 = vset.pattern.permute.xlu0 1
    %1877 = vperm.xlu0 %1876, %v1791
    %v1878 = vpop.permute.xlu0 %1877
    %1880 = vset.pattern.permute.xlu0 1
    %1881 = vperm.xlu0 %1880, %v1792
    %v1882 = vpop.permute.xlu0 %1881
    %1884 = vset.pattern.permute.xlu0 1
    %1885 = vperm.xlu0 %1884, %v1793
    %v1886 = vpop.permute.xlu0 %1885
    %1888 = vset.pattern.permute.xlu0 1
    %1889 = vperm.xlu0 %1888, %v1794
    %v1890 = vpop.permute.xlu0 %1889
    %1892 = vset.pattern.permute.xlu0 1
    %1893 = vperm.xlu0 %1892, %v1795
    %v1894 = vpop.permute.xlu0 %1893
    %1896 = vset.pattern.permute.xlu0 1
    %1897 = vperm.xlu0 %1896, %v1796
    %v1898 = vpop.permute.xlu0 %1897
    %1900 = vset.pattern.permute.xlu0 1
    %1901 = vperm.xlu0 %1900, %v1797
    %v1902 = vpop.permute.xlu0 %1901
    %v1904 = vmul.f32 %v1874, %v1864
    %v1905 = vmul.f32 %v1878, %v1865
    %v1906 = vmul.f32 %v1882, %v1866
    %v1907 = vmul.f32 %v1886, %v1867
    %v1908 = vmul.f32 %v1890, %v1868
    %v1909 = vmul.f32 %v1894, %v1869
    %v1910 = vmul.f32 %v1898, %v1870
    %v1911 = vmul.f32 %v1902, %v1871
    %v1912 = vadd.f32 %v1855, %v1904
    %v1913 = vadd.f32 %v1856, %v1905
    %v1914 = vadd.f32 %v1857, %v1906
    %v1915 = vadd.f32 %v1858, %v1907
    %v1916 = vadd.f32 %v1859, %v1908
    %v1917 = vadd.f32 %v1860, %v1909
    %v1918 = vadd.f32 %v1861, %v1910
    %v1919 = vadd.f32 %v1862, %v1911
    %s1920 = scalar_lea.vmem %s3, 640
    %v1921 = vld [vmem:[%s1920] sm:$0xff]
    %v1922 = vld [vmem:[%s1920 + $0x8] sm:$0xff]
    %v1923 = vld [vmem:[%s1920 + $0x10] sm:$0xff]
    %v1924 = vld [vmem:[%s1920 + $0x18] sm:$0xff]
    %v1925 = vld [vmem:[%s1920 + $0x20] sm:$0xff]
    %v1926 = vld [vmem:[%s1920 + $0x28] sm:$0xff]
    %v1927 = vld [vmem:[%s1920 + $0x30] sm:$0xff]
    %v1928 = vld [vmem:[%s1920 + $0x38] sm:$0xff]
    %1929 = vset.pattern.permute.xlu0 2
    %1930 = vperm.xlu0 %1929, %v1790
    %v1931 = vpop.permute.xlu0 %1930
    %1933 = vset.pattern.permute.xlu0 2
    %1934 = vperm.xlu0 %1933, %v1791
    %v1935 = vpop.permute.xlu0 %1934
    %1937 = vset.pattern.permute.xlu0 2
    %1938 = vperm.xlu0 %1937, %v1792
    %v1939 = vpop.permute.xlu0 %1938
    %1941 = vset.pattern.permute.xlu0 2
    %1942 = vperm.xlu0 %1941, %v1793
    %v1943 = vpop.permute.xlu0 %1942
    %1945 = vset.pattern.permute.xlu0 2
    %1946 = vperm.xlu0 %1945, %v1794
    %v1947 = vpop.permute.xlu0 %1946
    %1949 = vset.pattern.permute.xlu0 2
    %1950 = vperm.xlu0 %1949, %v1795
    %v1951 = vpop.permute.xlu0 %1950
    %1953 = vset.pattern.permute.xlu0 2
    %1954 = vperm.xlu0 %1953, %v1796
    %v1955 = vpop.permute.xlu0 %1954
    %1957 = vset.pattern.permute.xlu0 2
    %1958 = vperm.xlu0 %1957, %v1797
    %v1959 = vpop.permute.xlu0 %1958
    %v1961 = vmul.f32 %v1931, %v1921
    %v1962 = vmul.f32 %v1935, %v1922
    %v1963 = vmul.f32 %v1939, %v1923
    %v1964 = vmul.f32 %v1943, %v1924
    %v1965 = vmul.f32 %v1947, %v1925
    %v1966 = vmul.f32 %v1951, %v1926
    %v1967 = vmul.f32 %v1955, %v1927
    %v1968 = vmul.f32 %v1959, %v1928
    %v1969 = vadd.f32 %v1912, %v1961
    %v1970 = vadd.f32 %v1913, %v1962
    %v1971 = vadd.f32 %v1914, %v1963
    %v1972 = vadd.f32 %v1915, %v1964
    %v1973 = vadd.f32 %v1916, %v1965
    %v1974 = vadd.f32 %v1917, %v1966
    %v1975 = vadd.f32 %v1918, %v1967
    %v1976 = vadd.f32 %v1919, %v1968
    %s1977 = scalar_lea.vmem %s3, 704
    %v1978 = vld [vmem:[%s1977] sm:$0xff]
    %v1979 = vld [vmem:[%s1977 + $0x8] sm:$0xff]
    %v1980 = vld [vmem:[%s1977 + $0x10] sm:$0xff]
    %v1981 = vld [vmem:[%s1977 + $0x18] sm:$0xff]
    %v1982 = vld [vmem:[%s1977 + $0x20] sm:$0xff]
    %v1983 = vld [vmem:[%s1977 + $0x28] sm:$0xff]
    %v1984 = vld [vmem:[%s1977 + $0x30] sm:$0xff]
    %v1985 = vld [vmem:[%s1977 + $0x38] sm:$0xff]
    %1986 = vset.pattern.permute.xlu0 3
    %1987 = vperm.xlu0 %1986, %v1790
    %v1988 = vpop.permute.xlu0 %1987
    %1990 = vset.pattern.permute.xlu0 3
    %1991 = vperm.xlu0 %1990, %v1791
    %v1992 = vpop.permute.xlu0 %1991
    %1994 = vset.pattern.permute.xlu0 3
    %1995 = vperm.xlu0 %1994, %v1792
    %v1996 = vpop.permute.xlu0 %1995
    %1998 = vset.pattern.permute.xlu0 3
    %1999 = vperm.xlu0 %1998, %v1793
    %v2000 = vpop.permute.xlu0 %1999
    %2002 = vset.pattern.permute.xlu0 3
    %2003 = vperm.xlu0 %2002, %v1794
    %v2004 = vpop.permute.xlu0 %2003
    %2006 = vset.pattern.permute.xlu0 3
    %2007 = vperm.xlu0 %2006, %v1795
    %v2008 = vpop.permute.xlu0 %2007
    %2010 = vset.pattern.permute.xlu0 3
    %2011 = vperm.xlu0 %2010, %v1796
    %v2012 = vpop.permute.xlu0 %2011
    %2014 = vset.pattern.permute.xlu0 3
    %2015 = vperm.xlu0 %2014, %v1797
    %v2016 = vpop.permute.xlu0 %2015
    %v2018 = vmul.f32 %v1988, %v1978
    %v2019 = vmul.f32 %v1992, %v1979
    %v2020 = vmul.f32 %v1996, %v1980
    %v2021 = vmul.f32 %v2000, %v1981
    %v2022 = vmul.f32 %v2004, %v1982
    %v2023 = vmul.f32 %v2008, %v1983
    %v2024 = vmul.f32 %v2012, %v1984
    %v2025 = vmul.f32 %v2016, %v1985
    %v2026 = vadd.f32 %v1969, %v2018
    %v2027 = vadd.f32 %v1970, %v2019
    %v2028 = vadd.f32 %v1971, %v2020
    %v2029 = vadd.f32 %v1972, %v2021
    %v2030 = vadd.f32 %v1973, %v2022
    %v2031 = vadd.f32 %v1974, %v2023
    %v2032 = vadd.f32 %v1975, %v2024
    %v2033 = vadd.f32 %v1976, %v2025
    %v2034 = vsel %vm502, %v2026, 0.0
    %v2035 = vsel %vm502, %v2027, 0.0
    %v2036 = vadd.f32 %v2034, %v2035
    %v2037 = vsel %vm502, %v2028, 0.0
    %v2038 = vadd.f32 %v2036, %v2037
    %v2039 = vsel %vm502, %v2029, 0.0
    %v2040 = vadd.f32 %v2038, %v2039
    %v2041 = vsel %vm502, %v2030, 0.0
    %v2042 = vadd.f32 %v2040, %v2041
    %v2043 = vsel %vm502, %v2031, 0.0
    %v2044 = vadd.f32 %v2042, %v2043
    %v2045 = vsel %vm502, %v2032, 0.0
    %v2046 = vadd.f32 %v2044, %v2045
    %v2047 = vsel %vm502, %v2033, 0.0
    %v2048 = vadd.f32 %v2046, %v2047
    %v2049 = vrot.slane %v2048, 4
    %v2050 = vadd.f32 %v2048, %v2049
    %v2051 = vrot.slane %v2050, 2
    %v2052 = vadd.f32 %v2050, %v2051
    %v2053 = vrot.slane %v2052, 1
    %v2054 = vadd.f32 %v2052, %v2053
    %2056 = vset.pattern.permute.xlu0 0
    %2057 = vperm.xlu0 %2056, %v1798
    %v2058 = vpop.permute.xlu0 %2057
    %2061 = vset.pattern.permute.xlu0 0
    %2062 = vperm.xlu0 %2061, %v1799
    %v2063 = vpop.permute.xlu0 %2062
    %2066 = vset.pattern.permute.xlu0 0
    %2067 = vperm.xlu0 %2066, %v1800
    %v2068 = vpop.permute.xlu0 %2067
    %2071 = vset.pattern.permute.xlu0 0
    %2072 = vperm.xlu0 %2071, %v1801
    %v2073 = vpop.permute.xlu0 %2072
    %2076 = vset.pattern.permute.xlu0 0
    %2077 = vperm.xlu0 %2076, %v1802
    %v2078 = vpop.permute.xlu0 %2077
    %2081 = vset.pattern.permute.xlu0 0
    %2082 = vperm.xlu0 %2081, %v1803
    %v2083 = vpop.permute.xlu0 %2082
    %2086 = vset.pattern.permute.xlu0 0
    %2087 = vperm.xlu0 %2086, %v1804
    %v2088 = vpop.permute.xlu0 %2087
    %2091 = vset.pattern.permute.xlu0 0
    %2092 = vperm.xlu0 %2091, %v1805
    %v2093 = vpop.permute.xlu0 %2092
    %v2095 = vmul.f32 %v2058, %v1807
    %v2096 = vmul.f32 %v2063, %v1808
    %v2097 = vmul.f32 %v2068, %v1809
    %v2098 = vmul.f32 %v2073, %v1810
    %v2099 = vmul.f32 %v2078, %v1811
    %v2100 = vmul.f32 %v2083, %v1812
    %v2101 = vmul.f32 %v2088, %v1813
    %v2102 = vmul.f32 %v2093, %v1814
    %2103 = vset.pattern.permute.xlu0 1
    %2104 = vperm.xlu0 %2103, %v1798
    %v2105 = vpop.permute.xlu0 %2104
    %2107 = vset.pattern.permute.xlu0 1
    %2108 = vperm.xlu0 %2107, %v1799
    %v2109 = vpop.permute.xlu0 %2108
    %2111 = vset.pattern.permute.xlu0 1
    %2112 = vperm.xlu0 %2111, %v1800
    %v2113 = vpop.permute.xlu0 %2112
    %2115 = vset.pattern.permute.xlu0 1
    %2116 = vperm.xlu0 %2115, %v1801
    %v2117 = vpop.permute.xlu0 %2116
    %2119 = vset.pattern.permute.xlu0 1
    %2120 = vperm.xlu0 %2119, %v1802
    %v2121 = vpop.permute.xlu0 %2120
    %2123 = vset.pattern.permute.xlu0 1
    %2124 = vperm.xlu0 %2123, %v1803
    %v2125 = vpop.permute.xlu0 %2124
    %2127 = vset.pattern.permute.xlu0 1
    %2128 = vperm.xlu0 %2127, %v1804
    %v2129 = vpop.permute.xlu0 %2128
    %2131 = vset.pattern.permute.xlu0 1
    %2132 = vperm.xlu0 %2131, %v1805
    %v2133 = vpop.permute.xlu0 %2132
    %v2135 = vmul.f32 %v2105, %v1864
    %v2136 = vmul.f32 %v2109, %v1865
    %v2137 = vmul.f32 %v2113, %v1866
    %v2138 = vmul.f32 %v2117, %v1867
    %v2139 = vmul.f32 %v2121, %v1868
    %v2140 = vmul.f32 %v2125, %v1869
    %v2141 = vmul.f32 %v2129, %v1870
    %v2142 = vmul.f32 %v2133, %v1871
    %v2143 = vadd.f32 %v2095, %v2135
    %v2144 = vadd.f32 %v2096, %v2136
    %v2145 = vadd.f32 %v2097, %v2137
    %v2146 = vadd.f32 %v2098, %v2138
    %v2147 = vadd.f32 %v2099, %v2139
    %v2148 = vadd.f32 %v2100, %v2140
    %v2149 = vadd.f32 %v2101, %v2141
    %v2150 = vadd.f32 %v2102, %v2142
    %2151 = vset.pattern.permute.xlu0 2
    %2152 = vperm.xlu0 %2151, %v1798
    %v2153 = vpop.permute.xlu0 %2152
    %2155 = vset.pattern.permute.xlu0 2
    %2156 = vperm.xlu0 %2155, %v1799
    %v2157 = vpop.permute.xlu0 %2156
    %2159 = vset.pattern.permute.xlu0 2
    %2160 = vperm.xlu0 %2159, %v1800
    %v2161 = vpop.permute.xlu0 %2160
    %2163 = vset.pattern.permute.xlu0 2
    %2164 = vperm.xlu0 %2163, %v1801
    %v2165 = vpop.permute.xlu0 %2164
    %2167 = vset.pattern.permute.xlu0 2
    %2168 = vperm.xlu0 %2167, %v1802
    %v2169 = vpop.permute.xlu0 %2168
    %2171 = vset.pattern.permute.xlu0 2
    %2172 = vperm.xlu0 %2171, %v1803
    %v2173 = vpop.permute.xlu0 %2172
    %2175 = vset.pattern.permute.xlu0 2
    %2176 = vperm.xlu0 %2175, %v1804
    %v2177 = vpop.permute.xlu0 %2176
    %2179 = vset.pattern.permute.xlu0 2
    %2180 = vperm.xlu0 %2179, %v1805
    %v2181 = vpop.permute.xlu0 %2180
    %v2183 = vmul.f32 %v2153, %v1921
    %v2184 = vmul.f32 %v2157, %v1922
    %v2185 = vmul.f32 %v2161, %v1923
    %v2186 = vmul.f32 %v2165, %v1924
    %v2187 = vmul.f32 %v2169, %v1925
    %v2188 = vmul.f32 %v2173, %v1926
    %v2189 = vmul.f32 %v2177, %v1927
    %v2190 = vmul.f32 %v2181, %v1928
    %v2191 = vadd.f32 %v2143, %v2183
    %v2192 = vadd.f32 %v2144, %v2184
    %v2193 = vadd.f32 %v2145, %v2185
    %v2194 = vadd.f32 %v2146, %v2186
    %v2195 = vadd.f32 %v2147, %v2187
    %v2196 = vadd.f32 %v2148, %v2188
    %v2197 = vadd.f32 %v2149, %v2189
    %v2198 = vadd.f32 %v2150, %v2190
    %2199 = vset.pattern.permute.xlu0 3
    %2200 = vperm.xlu0 %2199, %v1798
    %v2201 = vpop.permute.xlu0 %2200
    %2203 = vset.pattern.permute.xlu0 3
    %2204 = vperm.xlu0 %2203, %v1799
    %v2205 = vpop.permute.xlu0 %2204
    %2207 = vset.pattern.permute.xlu0 3
    %2208 = vperm.xlu0 %2207, %v1800
    %v2209 = vpop.permute.xlu0 %2208
    %2211 = vset.pattern.permute.xlu0 3
    %2212 = vperm.xlu0 %2211, %v1801
    %v2213 = vpop.permute.xlu0 %2212
    %2215 = vset.pattern.permute.xlu0 3
    %2216 = vperm.xlu0 %2215, %v1802
    %v2217 = vpop.permute.xlu0 %2216
    %2219 = vset.pattern.permute.xlu0 3
    %2220 = vperm.xlu0 %2219, %v1803
    %v2221 = vpop.permute.xlu0 %2220
    %2223 = vset.pattern.permute.xlu0 3
    %2224 = vperm.xlu0 %2223, %v1804
    %v2225 = vpop.permute.xlu0 %2224
    %2227 = vset.pattern.permute.xlu0 3
    %2228 = vperm.xlu0 %2227, %v1805
    %v2229 = vpop.permute.xlu0 %2228
    %v2231 = vmul.f32 %v2201, %v1978
    %v2232 = vmul.f32 %v2205, %v1979
    %v2233 = vmul.f32 %v2209, %v1980
    %v2234 = vmul.f32 %v2213, %v1981
    %v2235 = vmul.f32 %v2217, %v1982
    %v2236 = vmul.f32 %v2221, %v1983
    %v2237 = vmul.f32 %v2225, %v1984
    %v2238 = vmul.f32 %v2229, %v1985
    %v2239 = vadd.f32 %v2191, %v2231
    %v2240 = vadd.f32 %v2192, %v2232
    %v2241 = vadd.f32 %v2193, %v2233
    %v2242 = vadd.f32 %v2194, %v2234
    %v2243 = vadd.f32 %v2195, %v2235
    %v2244 = vadd.f32 %v2196, %v2236
    %v2245 = vadd.f32 %v2197, %v2237
    %v2246 = vadd.f32 %v2198, %v2238
    %v2247 = vsel %vm502, %v2239, 0.0
    %v2248 = vsel %vm502, %v2240, 0.0
    %v2249 = vadd.f32 %v2247, %v2248
    %v2250 = vsel %vm502, %v2241, 0.0
    %v2251 = vadd.f32 %v2249, %v2250
    %v2252 = vsel %vm502, %v2242, 0.0
    %v2253 = vadd.f32 %v2251, %v2252
    %v2254 = vsel %vm502, %v2243, 0.0
    %v2255 = vadd.f32 %v2253, %v2254
    %v2256 = vsel %vm502, %v2244, 0.0
    %v2257 = vadd.f32 %v2255, %v2256
    %v2258 = vsel %vm502, %v2245, 0.0
    %v2259 = vadd.f32 %v2257, %v2258
    %v2260 = vsel %vm502, %v2246, 0.0
    %v2261 = vadd.f32 %v2259, %v2260
    %v2262 = vrot.slane %v2261, 4
    %v2263 = vadd.f32 %v2261, %v2262
    %v2264 = vrot.slane %v2263, 2
    %v2265 = vadd.f32 %v2263, %v2264
    %v2266 = vrot.slane %v2265, 1
    %v2267 = vadd.f32 %v2265, %v2266
    %v2268 = vsel %vm737, %v2054, %v2267
    %s2269 = scalar_lea.vmem %s4, 2
    %v2270 = vld [vmem:[%s2269] sm:$0x1]
    %v2272 = vlaneseq
    %v2273 = vshrl.u32 %v2272, 7
    %v2274 = vsub.s32 0, %v2273
    %v2275 = vrot.slane %v2270, %v2274
    %v2277 = vadd.f32 %v2268, %v2275
    %v2278 = vtanh.pop %v2277
    %s2279 = scalar_lea.vmem %s5, 4
    %v2280 = vld [vmem:[%s2279] sm:$0x3]
    %v2281 = vmul.f32 %v2278, 0.5
    %v2282 = vmul.f32 %v2281, 1.442695
    %v2283 = vpow.pop %v2282
    %2285 = vrot.lane.b32.xlu0 %v2283, 124
    %v2286 = vpop.permute.xlu0 %2285
    %v2288 = vmul.f32 %v2280, %v2286
    %v2289 = vadd.f32 %v2278, %v2288
    %s2290 = scalar_lea.vmem %s0, 128
    %v2291 = vld [vmem:[%s2290] sm:$0xf]
    %v2292 = vld [vmem:[%s2290 + $0x4] sm:$0xf]
    %v2293 = vld [vmem:[%s2290 + $0x8] sm:$0xf]
    %v2294 = vld [vmem:[%s2290 + $0xc] sm:$0xf]
    %v2295 = vld [vmem:[%s2290 + $0x10] sm:$0xf]
    %v2296 = vld [vmem:[%s2290 + $0x14] sm:$0xf]
    %v2297 = vld [vmem:[%s2290 + $0x18] sm:$0xf]
    %v2298 = vld [vmem:[%s2290 + $0x1c] sm:$0xf]
    %v2299 = vld [vmem:[%s2290 + $0x20] sm:$0xf]
    %v2300 = vld [vmem:[%s2290 + $0x24] sm:$0xf]
    %v2301 = vld [vmem:[%s2290 + $0x28] sm:$0xf]
    %v2302 = vld [vmem:[%s2290 + $0x2c] sm:$0xf]
    %v2303 = vld [vmem:[%s2290 + $0x30] sm:$0xf]
    %v2304 = vld [vmem:[%s2290 + $0x34] sm:$0xf]
    %v2305 = vld [vmem:[%s2290 + $0x38] sm:$0xf]
    %v2306 = vld [vmem:[%s2290 + $0x3c] sm:$0xf]
    %s2307 = scalar_lea.vmem %s1, 96
    %v2308 = vld [vmem:[%s2307] sm:$0xf]
    %v2309 = vld [vmem:[%s2307 + $0x4] sm:$0xf]
    %v2310 = vld [vmem:[%s2307 + $0x8] sm:$0xf]
    %v2311 = vld [vmem:[%s2307 + $0xc] sm:$0xf]
    %v2312 = vld [vmem:[%s2307 + $0x10] sm:$0xf]
    %v2313 = vld [vmem:[%s2307 + $0x14] sm:$0xf]
    %v2314 = vld [vmem:[%s2307 + $0x18] sm:$0xf]
    %v2315 = vld [vmem:[%s2307 + $0x1c] sm:$0xf]
    %s2316 = scalar_lea.vmem %s2, 3
    %v2317 = vld [vmem:[%s2316] sm:$0x1]
    %v2319 = vlaneseq
    %v2320 = vshrl.u32 %v2319, 7
    %v2321 = vsub.s32 0, %v2320
    %v2322 = vrot.slane %v2317, %v2321
    %v2340 = vunpack.c.l.b16 %v2291
    %v2341 = vunpack.c.l.b16 %v2292
    %v2342 = vunpack.c.l.b16 %v2293
    %v2343 = vunpack.c.l.b16 %v2294
    %v2344 = vunpack.c.l.b16 %v2295
    %v2345 = vunpack.c.l.b16 %v2296
    %v2346 = vunpack.c.l.b16 %v2297
    %v2347 = vunpack.c.l.b16 %v2298
    %v2348 = vunpack.c.l.b16 %v2299
    %v2349 = vunpack.c.l.b16 %v2300
    %v2350 = vunpack.c.l.b16 %v2301
    %v2351 = vunpack.c.l.b16 %v2302
    %v2352 = vunpack.c.l.b16 %v2303
    %v2353 = vunpack.c.l.b16 %v2304
    %v2354 = vunpack.c.l.b16 %v2305
    %v2355 = vunpack.c.l.b16 %v2306
    %v2356 = vpack.c.b16 %v2341, %v2340
    %v2357 = vpack.c.b16 %v2343, %v2342
    %v2358 = vpack.c.b16 %v2345, %v2344
    %v2359 = vpack.c.b16 %v2347, %v2346
    %v2360 = vpack.c.b16 %v2349, %v2348
    %v2361 = vpack.c.b16 %v2351, %v2350
    %v2362 = vpack.c.b16 %v2353, %v2352
    %v2363 = vpack.c.b16 %v2355, %v2354
    %v2372 = vunpack.c.l.b16 %v2308
    %v2373 = vunpack.c.l.b16 %v2309
    %v2374 = vunpack.c.l.b16 %v2310
    %v2375 = vunpack.c.l.b16 %v2311
    %v2376 = vunpack.c.l.b16 %v2312
    %v2377 = vunpack.c.l.b16 %v2313
    %v2378 = vunpack.c.l.b16 %v2314
    %v2379 = vunpack.c.l.b16 %v2315
    %v2380 = vpack.c.b16 %v2373, %v2372
    %v2381 = vpack.c.b16 %v2375, %v2374
    %v2382 = vpack.c.b16 %v2377, %v2376
    %v2383 = vpack.c.b16 %v2379, %v2378
    %v2389 = vsel %vm121, %v2356, 0
    %v2392 = vsel %vm121, %v2357, 0
    %v2395 = vsel %vm121, %v2358, 0
    %v2398 = vsel %vm121, %v2359, 0
    %v2401 = vsel %vm121, %v2360, 0
    %v2404 = vsel %vm121, %v2361, 0
    %v2407 = vsel %vm121, %v2362, 0
    %v2410 = vsel %vm121, %v2363, 0
    %2412 = vmatprep.subr.bf16.mxu0 0
    %2413 = vmatpush1.bf16.msra.mxu0 0
    %2414 = vmatprep.subr.bf16.mxu0 0
    %2415 = vmatpush1.bf16.msra.mxu0 0
    %2416 = vmatprep.subr.bf16.mxu0 0
    %2417 = vmatpush1.bf16.msra.mxu0 0
    %2418 = vmatprep.subr.bf16.mxu0 0
    %2419 = vmatpush1.bf16.msra.mxu0 0
    %2420 = vmatprep.subr.bf16.mxu0 0
    %2421 = vmatpush1.bf16.msra.mxu0 %v2383
    %2422 = vmatprep.subr.bf16.mxu0 0
    %2423 = vmatpush1.bf16.msra.mxu0 %v2382
    %2424 = vmatprep.subr.bf16.mxu0 0
    %2425 = vmatpush1.bf16.msra.mxu0 %v2381
    %2426 = vmatprep.subr.bf16.mxu0 0
    %2427 = vmatpush1.bf16.msra.mxu0 %v2380
    %2428 = vmatprep.subr.bf16.mxu0 0
    %2429 = vmatpush2.bf16.msra.mxu0 0
    %2430 = vmatprep.subr.bf16.mxu0 0
    %2431 = vmatpush2.bf16.msra.mxu0 0
    %2432 = vmatprep.subr.bf16.mxu0 0
    %2433 = vmatpush2.bf16.msra.mxu0 0
    %2434 = vmatprep.subr.bf16.mxu0 0
    %2435 = vmatpush2.bf16.msra.mxu0 0
    %2436 = vmatprep.subr.bf16.mxu0 0
    %2437 = vmatpush2.bf16.msra.mxu0 0
    %2438 = vmatprep.subr.bf16.mxu0 0
    %2439 = vmatpush2.bf16.msra.mxu0 0
    %2440 = vmatprep.subr.bf16.mxu0 0
    %2441 = vmatpush2.bf16.msra.mxu0 0
    %2442 = vmatprep.subr.bf16.mxu0 0
    %2443 = vmatpush2.bf16.msra.mxu0 0
    %2444 = vmatprep.mubr.bf16.mxu0 0
    %2445 = vmatmul.mubr.bf16.gmra.mxu0 %v2389
    %v2446 = vpop.f32.mrf.mxu0
    %v2447 = vadd.f32 %v2322, %v2446
    %v2448 = vpop.f32.mrf.mxu0
    %v2449 = vpop.f32.mrf.mxu0
    %v2450 = vadd.f32 %v2322, %v2449
    %v2451 = vpop.f32.mrf.mxu0
    %2452 = vmatprep.mubr.bf16.mxu0 0
    %2453 = vmatmul.mubr.bf16.gmra.mxu0 %v2392
    %v2454 = vpop.f32.mrf.mxu0
    %v2455 = vadd.f32 %v2322, %v2454
    %v2456 = vpop.f32.mrf.mxu0
    %v2457 = vpop.f32.mrf.mxu0
    %v2458 = vadd.f32 %v2322, %v2457
    %v2459 = vpop.f32.mrf.mxu0
    %2460 = vmatprep.mubr.bf16.mxu0 0
    %2461 = vmatmul.mubr.bf16.gmra.mxu0 %v2395
    %v2462 = vpop.f32.mrf.mxu0
    %v2463 = vadd.f32 %v2322, %v2462
    %v2464 = vpop.f32.mrf.mxu0
    %v2465 = vpop.f32.mrf.mxu0
    %v2466 = vadd.f32 %v2322, %v2465
    %v2467 = vpop.f32.mrf.mxu0
    %2468 = vmatprep.mubr.bf16.mxu0 0
    %2469 = vmatmul.mubr.bf16.gmra.mxu0 %v2398
    %v2470 = vpop.f32.mrf.mxu0
    %v2471 = vadd.f32 %v2322, %v2470
    %v2472 = vpop.f32.mrf.mxu0
    %v2473 = vpop.f32.mrf.mxu0
    %v2474 = vadd.f32 %v2322, %v2473
    %v2475 = vpop.f32.mrf.mxu0
    %2476 = vmatprep.mubr.bf16.mxu0 0
    %2477 = vmatmul.mubr.bf16.gmra.mxu0 %v2401
    %v2478 = vpop.f32.mrf.mxu0
    %v2479 = vadd.f32 %v2322, %v2478
    %v2480 = vpop.f32.mrf.mxu0
    %v2481 = vpop.f32.mrf.mxu0
    %v2482 = vadd.f32 %v2322, %v2481
    %v2483 = vpop.f32.mrf.mxu0
    %2484 = vmatprep.mubr.bf16.mxu0 0
    %2485 = vmatmul.mubr.bf16.gmra.mxu0 %v2404
    %v2486 = vpop.f32.mrf.mxu0
    %v2487 = vadd.f32 %v2322, %v2486
    %v2488 = vpop.f32.mrf.mxu0
    %v2489 = vpop.f32.mrf.mxu0
    %v2490 = vadd.f32 %v2322, %v2489
    %v2491 = vpop.f32.mrf.mxu0
    %2492 = vmatprep.mubr.bf16.mxu0 0
    %2493 = vmatmul.mubr.bf16.gmra.mxu0 %v2407
    %v2494 = vpop.f32.mrf.mxu0
    %v2495 = vadd.f32 %v2322, %v2494
    %v2496 = vpop.f32.mrf.mxu0
    %v2497 = vpop.f32.mrf.mxu0
    %v2498 = vadd.f32 %v2322, %v2497
    %v2499 = vpop.f32.mrf.mxu0
    %2500 = vmatprep.mubr.bf16.mxu0 0
    %2501 = vmatmul.mubr.bf16.gmra.mxu0 %v2410
    %v2502 = vpop.f32.mrf.mxu0
    %v2503 = vadd.f32 %v2322, %v2502
    %v2504 = vpop.f32.mrf.mxu0
    %v2505 = vpop.f32.mrf.mxu0
    %v2506 = vadd.f32 %v2322, %v2505
    %v2507 = vpop.f32.mrf.mxu0
    %2508 = vdwg.mxu0
    %v2509 = vmul.f32 %v2447, 0.01
    %v2510 = vmul.f32 %v2450, 0.01
    %v2511 = vmul.f32 %v2455, 0.01
    %v2512 = vmul.f32 %v2458, 0.01
    %v2513 = vmul.f32 %v2463, 0.01
    %v2514 = vmul.f32 %v2466, 0.01
    %v2515 = vmul.f32 %v2471, 0.01
    %v2516 = vmul.f32 %v2474, 0.01
    %v2517 = vmul.f32 %v2479, 0.01
    %v2518 = vmul.f32 %v2482, 0.01
    %v2519 = vmul.f32 %v2487, 0.01
    %v2520 = vmul.f32 %v2490, 0.01
    %v2521 = vmul.f32 %v2495, 0.01
    %v2522 = vmul.f32 %v2498, 0.01
    %v2523 = vmul.f32 %v2503, 0.01
    %v2524 = vmul.f32 %v2506, 0.01
    %v2525 = vmax.f32 %v2447, %v2509
    %v2526 = vmax.f32 %v2450, %v2510
    %v2527 = vmax.f32 %v2455, %v2511
    %v2528 = vmax.f32 %v2458, %v2512
    %v2529 = vmax.f32 %v2463, %v2513
    %v2530 = vmax.f32 %v2466, %v2514
    %v2531 = vmax.f32 %v2471, %v2515
    %v2532 = vmax.f32 %v2474, %v2516
    %v2533 = vmax.f32 %v2479, %v2517
    %v2534 = vmax.f32 %v2482, %v2518
    %v2535 = vmax.f32 %v2487, %v2519
    %v2536 = vmax.f32 %v2490, %v2520
    %v2537 = vmax.f32 %v2495, %v2521
    %v2538 = vmax.f32 %v2498, %v2522
    %v2539 = vmax.f32 %v2503, %v2523
    %v2540 = vmax.f32 %v2506, %v2524
    %s2541 = scalar_lea.vmem %s3, 768
    %v2542 = vld [vmem:[%s2541] sm:$0xff]
    %v2543 = vld [vmem:[%s2541 + $0x8] sm:$0xff]
    %v2544 = vld [vmem:[%s2541 + $0x10] sm:$0xff]
    %v2545 = vld [vmem:[%s2541 + $0x18] sm:$0xff]
    %v2546 = vld [vmem:[%s2541 + $0x20] sm:$0xff]
    %v2547 = vld [vmem:[%s2541 + $0x28] sm:$0xff]
    %v2548 = vld [vmem:[%s2541 + $0x30] sm:$0xff]
    %v2549 = vld [vmem:[%s2541 + $0x38] sm:$0xff]
    %2551 = vset.pattern.permute.xlu0 0
    %2552 = vperm.xlu0 %2551, %v2525
    %v2553 = vpop.permute.xlu0 %2552
    %2556 = vset.pattern.permute.xlu0 0
    %2557 = vperm.xlu0 %2556, %v2526
    %v2558 = vpop.permute.xlu0 %2557
    %2561 = vset.pattern.permute.xlu0 0
    %2562 = vperm.xlu0 %2561, %v2527
    %v2563 = vpop.permute.xlu0 %2562
    %2566 = vset.pattern.permute.xlu0 0
    %2567 = vperm.xlu0 %2566, %v2528
    %v2568 = vpop.permute.xlu0 %2567
    %2571 = vset.pattern.permute.xlu0 0
    %2572 = vperm.xlu0 %2571, %v2529
    %v2573 = vpop.permute.xlu0 %2572
    %2576 = vset.pattern.permute.xlu0 0
    %2577 = vperm.xlu0 %2576, %v2530
    %v2578 = vpop.permute.xlu0 %2577
    %2581 = vset.pattern.permute.xlu0 0
    %2582 = vperm.xlu0 %2581, %v2531
    %v2583 = vpop.permute.xlu0 %2582
    %2586 = vset.pattern.permute.xlu0 0
    %2587 = vperm.xlu0 %2586, %v2532
    %v2588 = vpop.permute.xlu0 %2587
    %v2590 = vmul.f32 %v2553, %v2542
    %v2591 = vmul.f32 %v2558, %v2543
    %v2592 = vmul.f32 %v2563, %v2544
    %v2593 = vmul.f32 %v2568, %v2545
    %v2594 = vmul.f32 %v2573, %v2546
    %v2595 = vmul.f32 %v2578, %v2547
    %v2596 = vmul.f32 %v2583, %v2548
    %v2597 = vmul.f32 %v2588, %v2549
    %s2598 = scalar_lea.vmem %s3, 832
    %v2599 = vld [vmem:[%s2598] sm:$0xff]
    %v2600 = vld [vmem:[%s2598 + $0x8] sm:$0xff]
    %v2601 = vld [vmem:[%s2598 + $0x10] sm:$0xff]
    %v2602 = vld [vmem:[%s2598 + $0x18] sm:$0xff]
    %v2603 = vld [vmem:[%s2598 + $0x20] sm:$0xff]
    %v2604 = vld [vmem:[%s2598 + $0x28] sm:$0xff]
    %v2605 = vld [vmem:[%s2598 + $0x30] sm:$0xff]
    %v2606 = vld [vmem:[%s2598 + $0x38] sm:$0xff]
    %2607 = vset.pattern.permute.xlu0 1
    %2608 = vperm.xlu0 %2607, %v2525
    %v2609 = vpop.permute.xlu0 %2608
    %2611 = vset.pattern.permute.xlu0 1
    %2612 = vperm.xlu0 %2611, %v2526
    %v2613 = vpop.permute.xlu0 %2612
    %2615 = vset.pattern.permute.xlu0 1
    %2616 = vperm.xlu0 %2615, %v2527
    %v2617 = vpop.permute.xlu0 %2616
    %2619 = vset.pattern.permute.xlu0 1
    %2620 = vperm.xlu0 %2619, %v2528
    %v2621 = vpop.permute.xlu0 %2620
    %2623 = vset.pattern.permute.xlu0 1
    %2624 = vperm.xlu0 %2623, %v2529
    %v2625 = vpop.permute.xlu0 %2624
    %2627 = vset.pattern.permute.xlu0 1
    %2628 = vperm.xlu0 %2627, %v2530
    %v2629 = vpop.permute.xlu0 %2628
    %2631 = vset.pattern.permute.xlu0 1
    %2632 = vperm.xlu0 %2631, %v2531
    %v2633 = vpop.permute.xlu0 %2632
    %2635 = vset.pattern.permute.xlu0 1
    %2636 = vperm.xlu0 %2635, %v2532
    %v2637 = vpop.permute.xlu0 %2636
    %v2639 = vmul.f32 %v2609, %v2599
    %v2640 = vmul.f32 %v2613, %v2600
    %v2641 = vmul.f32 %v2617, %v2601
    %v2642 = vmul.f32 %v2621, %v2602
    %v2643 = vmul.f32 %v2625, %v2603
    %v2644 = vmul.f32 %v2629, %v2604
    %v2645 = vmul.f32 %v2633, %v2605
    %v2646 = vmul.f32 %v2637, %v2606
    %v2647 = vadd.f32 %v2590, %v2639
    %v2648 = vadd.f32 %v2591, %v2640
    %v2649 = vadd.f32 %v2592, %v2641
    %v2650 = vadd.f32 %v2593, %v2642
    %v2651 = vadd.f32 %v2594, %v2643
    %v2652 = vadd.f32 %v2595, %v2644
    %v2653 = vadd.f32 %v2596, %v2645
    %v2654 = vadd.f32 %v2597, %v2646
    %s2655 = scalar_lea.vmem %s3, 896
    %v2656 = vld [vmem:[%s2655] sm:$0xff]
    %v2657 = vld [vmem:[%s2655 + $0x8] sm:$0xff]
    %v2658 = vld [vmem:[%s2655 + $0x10] sm:$0xff]
    %v2659 = vld [vmem:[%s2655 + $0x18] sm:$0xff]
    %v2660 = vld [vmem:[%s2655 + $0x20] sm:$0xff]
    %v2661 = vld [vmem:[%s2655 + $0x28] sm:$0xff]
    %v2662 = vld [vmem:[%s2655 + $0x30] sm:$0xff]
    %v2663 = vld [vmem:[%s2655 + $0x38] sm:$0xff]
    %2664 = vset.pattern.permute.xlu0 2
    %2665 = vperm.xlu0 %2664, %v2525
    %v2666 = vpop.permute.xlu0 %2665
    %2668 = vset.pattern.permute.xlu0 2
    %2669 = vperm.xlu0 %2668, %v2526
    %v2670 = vpop.permute.xlu0 %2669
    %2672 = vset.pattern.permute.xlu0 2
    %2673 = vperm.xlu0 %2672, %v2527
    %v2674 = vpop.permute.xlu0 %2673
    %2676 = vset.pattern.permute.xlu0 2
    %2677 = vperm.xlu0 %2676, %v2528
    %v2678 = vpop.permute.xlu0 %2677
    %2680 = vset.pattern.permute.xlu0 2
    %2681 = vperm.xlu0 %2680, %v2529
    %v2682 = vpop.permute.xlu0 %2681
    %2684 = vset.pattern.permute.xlu0 2
    %2685 = vperm.xlu0 %2684, %v2530
    %v2686 = vpop.permute.xlu0 %2685
    %2688 = vset.pattern.permute.xlu0 2
    %2689 = vperm.xlu0 %2688, %v2531
    %v2690 = vpop.permute.xlu0 %2689
    %2692 = vset.pattern.permute.xlu0 2
    %2693 = vperm.xlu0 %2692, %v2532
    %v2694 = vpop.permute.xlu0 %2693
    %v2696 = vmul.f32 %v2666, %v2656
    %v2697 = vmul.f32 %v2670, %v2657
    %v2698 = vmul.f32 %v2674, %v2658
    %v2699 = vmul.f32 %v2678, %v2659
    %v2700 = vmul.f32 %v2682, %v2660
    %v2701 = vmul.f32 %v2686, %v2661
    %v2702 = vmul.f32 %v2690, %v2662
    %v2703 = vmul.f32 %v2694, %v2663
    %v2704 = vadd.f32 %v2647, %v2696
    %v2705 = vadd.f32 %v2648, %v2697
    %v2706 = vadd.f32 %v2649, %v2698
    %v2707 = vadd.f32 %v2650, %v2699
    %v2708 = vadd.f32 %v2651, %v2700
    %v2709 = vadd.f32 %v2652, %v2701
    %v2710 = vadd.f32 %v2653, %v2702
    %v2711 = vadd.f32 %v2654, %v2703
    %s2712 = scalar_lea.vmem %s3, 960
    %v2713 = vld [vmem:[%s2712] sm:$0xff]
    %v2714 = vld [vmem:[%s2712 + $0x8] sm:$0xff]
    %v2715 = vld [vmem:[%s2712 + $0x10] sm:$0xff]
    %v2716 = vld [vmem:[%s2712 + $0x18] sm:$0xff]
    %v2717 = vld [vmem:[%s2712 + $0x20] sm:$0xff]
    %v2718 = vld [vmem:[%s2712 + $0x28] sm:$0xff]
    %v2719 = vld [vmem:[%s2712 + $0x30] sm:$0xff]
    %v2720 = vld [vmem:[%s2712 + $0x38] sm:$0xff]
    %2721 = vset.pattern.permute.xlu0 3
    %2722 = vperm.xlu0 %2721, %v2525
    %v2723 = vpop.permute.xlu0 %2722
    %2725 = vset.pattern.permute.xlu0 3
    %2726 = vperm.xlu0 %2725, %v2526
    %v2727 = vpop.permute.xlu0 %2726
    %2729 = vset.pattern.permute.xlu0 3
    %2730 = vperm.xlu0 %2729, %v2527
    %v2731 = vpop.permute.xlu0 %2730
    %2733 = vset.pattern.permute.xlu0 3
    %2734 = vperm.xlu0 %2733, %v2528
    %v2735 = vpop.permute.xlu0 %2734
    %2737 = vset.pattern.permute.xlu0 3
    %2738 = vperm.xlu0 %2737, %v2529
    %v2739 = vpop.permute.xlu0 %2738
    %2741 = vset.pattern.permute.xlu0 3
    %2742 = vperm.xlu0 %2741, %v2530
    %v2743 = vpop.permute.xlu0 %2742
    %2745 = vset.pattern.permute.xlu0 3
    %2746 = vperm.xlu0 %2745, %v2531
    %v2747 = vpop.permute.xlu0 %2746
    %2749 = vset.pattern.permute.xlu0 3
    %2750 = vperm.xlu0 %2749, %v2532
    %v2751 = vpop.permute.xlu0 %2750
    %v2753 = vmul.f32 %v2723, %v2713
    %v2754 = vmul.f32 %v2727, %v2714
    %v2755 = vmul.f32 %v2731, %v2715
    %v2756 = vmul.f32 %v2735, %v2716
    %v2757 = vmul.f32 %v2739, %v2717
    %v2758 = vmul.f32 %v2743, %v2718
    %v2759 = vmul.f32 %v2747, %v2719
    %v2760 = vmul.f32 %v2751, %v2720
    %v2761 = vadd.f32 %v2704, %v2753
    %v2762 = vadd.f32 %v2705, %v2754
    %v2763 = vadd.f32 %v2706, %v2755
    %v2764 = vadd.f32 %v2707, %v2756
    %v2765 = vadd.f32 %v2708, %v2757
    %v2766 = vadd.f32 %v2709, %v2758
    %v2767 = vadd.f32 %v2710, %v2759
    %v2768 = vadd.f32 %v2711, %v2760
    %v2769 = vsel %vm502, %v2761, 0.0
    %v2770 = vsel %vm502, %v2762, 0.0
    %v2771 = vadd.f32 %v2769, %v2770
    %v2772 = vsel %vm502, %v2763, 0.0
    %v2773 = vadd.f32 %v2771, %v2772
    %v2774 = vsel %vm502, %v2764, 0.0
    %v2775 = vadd.f32 %v2773, %v2774
    %v2776 = vsel %vm502, %v2765, 0.0
    %v2777 = vadd.f32 %v2775, %v2776
    %v2778 = vsel %vm502, %v2766, 0.0
    %v2779 = vadd.f32 %v2777, %v2778
    %v2780 = vsel %vm502, %v2767, 0.0
    %v2781 = vadd.f32 %v2779, %v2780
    %v2782 = vsel %vm502, %v2768, 0.0
    %v2783 = vadd.f32 %v2781, %v2782
    %v2784 = vrot.slane %v2783, 4
    %v2785 = vadd.f32 %v2783, %v2784
    %v2786 = vrot.slane %v2785, 2
    %v2787 = vadd.f32 %v2785, %v2786
    %v2788 = vrot.slane %v2787, 1
    %v2789 = vadd.f32 %v2787, %v2788
    %2791 = vset.pattern.permute.xlu0 0
    %2792 = vperm.xlu0 %2791, %v2533
    %v2793 = vpop.permute.xlu0 %2792
    %2796 = vset.pattern.permute.xlu0 0
    %2797 = vperm.xlu0 %2796, %v2534
    %v2798 = vpop.permute.xlu0 %2797
    %2801 = vset.pattern.permute.xlu0 0
    %2802 = vperm.xlu0 %2801, %v2535
    %v2803 = vpop.permute.xlu0 %2802
    %2806 = vset.pattern.permute.xlu0 0
    %2807 = vperm.xlu0 %2806, %v2536
    %v2808 = vpop.permute.xlu0 %2807
    %2811 = vset.pattern.permute.xlu0 0
    %2812 = vperm.xlu0 %2811, %v2537
    %v2813 = vpop.permute.xlu0 %2812
    %2816 = vset.pattern.permute.xlu0 0
    %2817 = vperm.xlu0 %2816, %v2538
    %v2818 = vpop.permute.xlu0 %2817
    %2821 = vset.pattern.permute.xlu0 0
    %2822 = vperm.xlu0 %2821, %v2539
    %v2823 = vpop.permute.xlu0 %2822
    %2826 = vset.pattern.permute.xlu0 0
    %2827 = vperm.xlu0 %2826, %v2540
    %v2828 = vpop.permute.xlu0 %2827
    %v2830 = vmul.f32 %v2793, %v2542
    %v2831 = vmul.f32 %v2798, %v2543
    %v2832 = vmul.f32 %v2803, %v2544
    %v2833 = vmul.f32 %v2808, %v2545
    %v2834 = vmul.f32 %v2813, %v2546
    %v2835 = vmul.f32 %v2818, %v2547
    %v2836 = vmul.f32 %v2823, %v2548
    %v2837 = vmul.f32 %v2828, %v2549
    %2838 = vset.pattern.permute.xlu0 1
    %2839 = vperm.xlu0 %2838, %v2533
    %v2840 = vpop.permute.xlu0 %2839
    %2842 = vset.pattern.permute.xlu0 1
    %2843 = vperm.xlu0 %2842, %v2534
    %v2844 = vpop.permute.xlu0 %2843
    %2846 = vset.pattern.permute.xlu0 1
    %2847 = vperm.xlu0 %2846, %v2535
    %v2848 = vpop.permute.xlu0 %2847
    %2850 = vset.pattern.permute.xlu0 1
    %2851 = vperm.xlu0 %2850, %v2536
    %v2852 = vpop.permute.xlu0 %2851
    %2854 = vset.pattern.permute.xlu0 1
    %2855 = vperm.xlu0 %2854, %v2537
    %v2856 = vpop.permute.xlu0 %2855
    %2858 = vset.pattern.permute.xlu0 1
    %2859 = vperm.xlu0 %2858, %v2538
    %v2860 = vpop.permute.xlu0 %2859
    %2862 = vset.pattern.permute.xlu0 1
    %2863 = vperm.xlu0 %2862, %v2539
    %v2864 = vpop.permute.xlu0 %2863
    %2866 = vset.pattern.permute.xlu0 1
    %2867 = vperm.xlu0 %2866, %v2540
    %v2868 = vpop.permute.xlu0 %2867
    %v2870 = vmul.f32 %v2840, %v2599
    %v2871 = vmul.f32 %v2844, %v2600
    %v2872 = vmul.f32 %v2848, %v2601
    %v2873 = vmul.f32 %v2852, %v2602
    %v2874 = vmul.f32 %v2856, %v2603
    %v2875 = vmul.f32 %v2860, %v2604
    %v2876 = vmul.f32 %v2864, %v2605
    %v2877 = vmul.f32 %v2868, %v2606
    %v2878 = vadd.f32 %v2830, %v2870
    %v2879 = vadd.f32 %v2831, %v2871
    %v2880 = vadd.f32 %v2832, %v2872
    %v2881 = vadd.f32 %v2833, %v2873
    %v2882 = vadd.f32 %v2834, %v2874
    %v2883 = vadd.f32 %v2835, %v2875
    %v2884 = vadd.f32 %v2836, %v2876
    %v2885 = vadd.f32 %v2837, %v2877
    %2886 = vset.pattern.permute.xlu0 2
    %2887 = vperm.xlu0 %2886, %v2533
    %v2888 = vpop.permute.xlu0 %2887
    %2890 = vset.pattern.permute.xlu0 2
    %2891 = vperm.xlu0 %2890, %v2534
    %v2892 = vpop.permute.xlu0 %2891
    %2894 = vset.pattern.permute.xlu0 2
    %2895 = vperm.xlu0 %2894, %v2535
    %v2896 = vpop.permute.xlu0 %2895
    %2898 = vset.pattern.permute.xlu0 2
    %2899 = vperm.xlu0 %2898, %v2536
    %v2900 = vpop.permute.xlu0 %2899
    %2902 = vset.pattern.permute.xlu0 2
    %2903 = vperm.xlu0 %2902, %v2537
    %v2904 = vpop.permute.xlu0 %2903
    %2906 = vset.pattern.permute.xlu0 2
    %2907 = vperm.xlu0 %2906, %v2538
    %v2908 = vpop.permute.xlu0 %2907
    %2910 = vset.pattern.permute.xlu0 2
    %2911 = vperm.xlu0 %2910, %v2539
    %v2912 = vpop.permute.xlu0 %2911
    %2914 = vset.pattern.permute.xlu0 2
    %2915 = vperm.xlu0 %2914, %v2540
    %v2916 = vpop.permute.xlu0 %2915
    %v2918 = vmul.f32 %v2888, %v2656
    %v2919 = vmul.f32 %v2892, %v2657
    %v2920 = vmul.f32 %v2896, %v2658
    %v2921 = vmul.f32 %v2900, %v2659
    %v2922 = vmul.f32 %v2904, %v2660
    %v2923 = vmul.f32 %v2908, %v2661
    %v2924 = vmul.f32 %v2912, %v2662
    %v2925 = vmul.f32 %v2916, %v2663
    %v2926 = vadd.f32 %v2878, %v2918
    %v2927 = vadd.f32 %v2879, %v2919
    %v2928 = vadd.f32 %v2880, %v2920
    %v2929 = vadd.f32 %v2881, %v2921
    %v2930 = vadd.f32 %v2882, %v2922
    %v2931 = vadd.f32 %v2883, %v2923
    %v2932 = vadd.f32 %v2884, %v2924
    %v2933 = vadd.f32 %v2885, %v2925
    %2934 = vset.pattern.permute.xlu0 3
    %2935 = vperm.xlu0 %2934, %v2533
    %v2936 = vpop.permute.xlu0 %2935
    %2938 = vset.pattern.permute.xlu0 3
    %2939 = vperm.xlu0 %2938, %v2534
    %v2940 = vpop.permute.xlu0 %2939
    %2942 = vset.pattern.permute.xlu0 3
    %2943 = vperm.xlu0 %2942, %v2535
    %v2944 = vpop.permute.xlu0 %2943
    %2946 = vset.pattern.permute.xlu0 3
    %2947 = vperm.xlu0 %2946, %v2536
    %v2948 = vpop.permute.xlu0 %2947
    %2950 = vset.pattern.permute.xlu0 3
    %2951 = vperm.xlu0 %2950, %v2537
    %v2952 = vpop.permute.xlu0 %2951
    %2954 = vset.pattern.permute.xlu0 3
    %2955 = vperm.xlu0 %2954, %v2538
    %v2956 = vpop.permute.xlu0 %2955
    %2958 = vset.pattern.permute.xlu0 3
    %2959 = vperm.xlu0 %2958, %v2539
    %v2960 = vpop.permute.xlu0 %2959
    %2962 = vset.pattern.permute.xlu0 3
    %2963 = vperm.xlu0 %2962, %v2540
    %v2964 = vpop.permute.xlu0 %2963
    %v2966 = vmul.f32 %v2936, %v2713
    %v2967 = vmul.f32 %v2940, %v2714
    %v2968 = vmul.f32 %v2944, %v2715
    %v2969 = vmul.f32 %v2948, %v2716
    %v2970 = vmul.f32 %v2952, %v2717
    %v2971 = vmul.f32 %v2956, %v2718
    %v2972 = vmul.f32 %v2960, %v2719
    %v2973 = vmul.f32 %v2964, %v2720
    %v2974 = vadd.f32 %v2926, %v2966
    %v2975 = vadd.f32 %v2927, %v2967
    %v2976 = vadd.f32 %v2928, %v2968
    %v2977 = vadd.f32 %v2929, %v2969
    %v2978 = vadd.f32 %v2930, %v2970
    %v2979 = vadd.f32 %v2931, %v2971
    %v2980 = vadd.f32 %v2932, %v2972
    %v2981 = vadd.f32 %v2933, %v2973
    %v2982 = vsel %vm502, %v2974, 0.0
    %v2983 = vsel %vm502, %v2975, 0.0
    %v2984 = vadd.f32 %v2982, %v2983
    %v2985 = vsel %vm502, %v2976, 0.0
    %v2986 = vadd.f32 %v2984, %v2985
    %v2987 = vsel %vm502, %v2977, 0.0
    %v2988 = vadd.f32 %v2986, %v2987
    %v2989 = vsel %vm502, %v2978, 0.0
    %v2990 = vadd.f32 %v2988, %v2989
    %v2991 = vsel %vm502, %v2979, 0.0
    %v2992 = vadd.f32 %v2990, %v2991
    %v2993 = vsel %vm502, %v2980, 0.0
    %v2994 = vadd.f32 %v2992, %v2993
    %v2995 = vsel %vm502, %v2981, 0.0
    %v2996 = vadd.f32 %v2994, %v2995
    %v2997 = vrot.slane %v2996, 4
    %v2998 = vadd.f32 %v2996, %v2997
    %v2999 = vrot.slane %v2998, 2
    %v3000 = vadd.f32 %v2998, %v2999
    %v3001 = vrot.slane %v3000, 1
    %v3002 = vadd.f32 %v3000, %v3001
    %v3003 = vsel %vm737, %v2789, %v3002
    %s3004 = scalar_lea.vmem %s4, 3
    %v3005 = vld [vmem:[%s3004] sm:$0x1]
    %v3007 = vlaneseq
    %v3008 = vshrl.u32 %v3007, 7
    %v3009 = vsub.s32 0, %v3008
    %v3010 = vrot.slane %v3005, %v3009
    %v3012 = vadd.f32 %v3003, %v3010
    %v3013 = vtanh.pop %v3012
    %s3014 = scalar_lea.vmem %s5, 6
    %v3015 = vld [vmem:[%s3014] sm:$0x3]
    %v3016 = vmul.f32 %v3013, 0.5
    %v3017 = vmul.f32 %v3016, 1.442695
    %v3018 = vpow.pop %v3017
    %3020 = vrot.lane.b32.xlu0 %v3018, 124
    %v3021 = vpop.permute.xlu0 %3020
    %v3023 = vmul.f32 %v3015, %v3021
    %v3024 = vadd.f32 %v3013, %v3023
    %v3025 = vmul.f32 %v2278, 2.0
    %v3026 = vmul.f32 %v3025, 1.442695
    %v3027 = vpow.pop %v3026
    %v3028 = vmul.f32 %v3013, 2.0
    %v3029 = vmul.f32 %v3028, 1.442695
    %v3030 = vpow.pop %v3029
    %v3031 = vsub.f32 %v3013, %v2278
    %v3032 = vsub.f32 %v2278, %v3013
    %v3033 = vmul.f32 %v3032, %v3032
    %3035 = vrot.lane.b32.xlu0 %v3033, 4
    %v3036 = vpop.permute.xlu0 %3035
    %v3038 = vadd.f32 %v3027, %v3036
    %v3039 = vmul.f32 %v3030, 2.0
    %v3040 = vrcp.pop %v3039
    %v3041 = vmul.f32 %v3038, %v3040
    %v3042 = vadd.f32 %v3031, %v3041
    %v3043 = vsub.f32 %v3042, 0.5
    %3045 = vrot.lane.b32.xlu0 %v3043, 124
    %v3046 = vpop.permute.xlu0 %3045
    %v3048 = vsel %vm1515, %v3046, 0.0
    %3049 = vadd.xlane.f32.xlu0 %v3048
    %v3050 = vpop.xlane.xlu0 %3049
    %v3051 = vsel %vm1519, %v3050, 0.0
    %v3052 = vrot.slane %v3051, 4
    %v3053 = vadd.f32 %v3051, %v3052
    %v3054 = vrot.slane %v3053, 2
    %v3055 = vadd.f32 %v3053, %v3054
    %v3056 = vrot.slane %v3055, 1
    %v3057 = vadd.f32 %v3055, %v3056
    %v3058 = vmul.f32 %v3057, %v1527
    %v3059 = vmul.f32 %v3031, %v3031
    %3061 = vrot.lane.b32.xlu0 %v3059, 4
    %v3062 = vpop.permute.xlu0 %3061
    %v3064 = vadd.f32 %v3030, %v3062
    %v3065 = vmul.f32 %v3027, 2.0
    %v3066 = vrcp.pop %v3065
    %v3067 = vmul.f32 %v3064, %v3066
    %v3068 = vadd.f32 %v3032, %v3067
    %v3069 = vsub.f32 %v3068, 0.5
    %3071 = vrot.lane.b32.xlu0 %v3069, 124
    %v3072 = vpop.permute.xlu0 %3071
    %v3074 = vsel %vm1515, %v3072, 0.0
    %3075 = vadd.xlane.f32.xlu0 %v3074
    %v3076 = vpop.xlane.xlu0 %3075
    %v3077 = vsel %vm1519, %v3076, 0.0
    %v3078 = vrot.slane %v3077, 4
    %v3079 = vadd.f32 %v3077, %v3078
    %v3080 = vrot.slane %v3079, 2
    %v3081 = vadd.f32 %v3079, %v3080
    %v3082 = vrot.slane %v3081, 1
    %v3083 = vadd.f32 %v3081, %v3082
    %v3084 = vmul.f32 %v3083, %v1527
    %v3085 = vadd.f32 %v3058, %v3084
    %v3086 = vsub.f32 0.0, %v2289
    %v3087 = vmul.f32 %v3086, 1.442695
    %v3088 = vpow.pop %v3087
    %v3089 = vadd.f32 %v3088, 1.0
    %v3090 = vrcp.pop %v3089
    %v3091 = vmul.f32 1.0, %v3090
    %v3092 = vsub.f32 0.0, %v3024
    %v3093 = vmul.f32 %v3092, 1.442695
    %v3094 = vpow.pop %v3093
    %v3095 = vadd.f32 %v3094, 1.0
    %v3096 = vrcp.pop %v3095
    %v3097 = vmul.f32 1.0, %v3096
    %v3098 = vmax.f32 %v3086, 0.0
    %v3099 = vand.u32 2147483647, %v3086
    %v3100 = vsub.f32 0.0, %v3099
    %v3101 = vmul.f32 %v3100, 1.442695
    %v3102 = vpow.pop %v3101
    %v3103 = vadd.f32 %v3102, 1.0
    %v3104 = vlog2.pop %v3103
    %v3105 = vmul.f32 %v3104, 0.6931472
    %v3106 = vadd.f32 %v3098, %v3105
    %v3107 = vmul.f32 %v3097, %v3106
    %v3108 = vsub.f32 1.0, %v3097
    %v3109 = vmax.f32 %v2289, 0.0
    %v3110 = vand.u32 2147483647, %v2289
    %v3111 = vsub.f32 0.0, %v3110
    %v3112 = vmul.f32 %v3111, 1.442695
    %v3113 = vpow.pop %v3112
    %v3114 = vadd.f32 %v3113, 1.0
    %v3115 = vlog2.pop %v3114
    %v3116 = vmul.f32 %v3115, 0.6931472
    %v3117 = vadd.f32 %v3109, %v3116
    %v3118 = vmul.f32 %v3108, %v3117
    %v3119 = vadd.f32 %v3107, %v3118
    %v3120 = vsel %vm1515, %v3119, 0.0
    %3121 = vadd.xlane.f32.xlu0 %v3120
    %v3122 = vpop.xlane.xlu0 %3121
    %v3123 = vsel %vm1519, %v3122, 0.0
    %v3124 = vrot.slane %v3123, 4
    %v3125 = vadd.f32 %v3123, %v3124
    %v3126 = vrot.slane %v3125, 2
    %v3127 = vadd.f32 %v3125, %v3126
    %v3128 = vrot.slane %v3127, 1
    %v3129 = vadd.f32 %v3127, %v3128
    %v3130 = vmax.f32 %v3092, 0.0
    %v3131 = vand.u32 2147483647, %v3092
    %v3132 = vsub.f32 0.0, %v3131
    %v3133 = vmul.f32 %v3132, 1.442695
    %v3134 = vpow.pop %v3133
    %v3135 = vadd.f32 %v3134, 1.0
    %v3136 = vlog2.pop %v3135
    %v3137 = vmul.f32 %v3136, 0.6931472
    %v3138 = vadd.f32 %v3130, %v3137
    %v3139 = vmul.f32 %v3091, %v3138
    %v3140 = vsub.f32 1.0, %v3091
    %v3141 = vmax.f32 %v3024, 0.0
    %v3142 = vand.u32 2147483647, %v3024
    %v3143 = vsub.f32 0.0, %v3142
    %v3144 = vmul.f32 %v3143, 1.442695
    %v3145 = vpow.pop %v3144
    %v3146 = vadd.f32 %v3145, 1.0
    %v3147 = vlog2.pop %v3146
    %v3148 = vmul.f32 %v3147, 0.6931472
    %v3149 = vadd.f32 %v3141, %v3148
    %v3150 = vmul.f32 %v3140, %v3149
    %v3151 = vadd.f32 %v3139, %v3150
    %v3152 = vsel %vm1515, %v3151, 0.0
    %3153 = vadd.xlane.f32.xlu0 %v3152
    %v3154 = vpop.xlane.xlu0 %3153
    %v3155 = vsel %vm1519, %v3154, 0.0
    %v3156 = vrot.slane %v3155, 4
    %v3157 = vadd.f32 %v3155, %v3156
    %v3158 = vrot.slane %v3157, 2
    %v3159 = vadd.f32 %v3157, %v3158
    %v3160 = vrot.slane %v3159, 1
    %v3161 = vadd.f32 %v3159, %v3160
    %v3162 = vadd.f32 %v3129, %v3161
    %v3163 = vsub.f32 %v3162, %v3085
    %v3164 = vmax.f32 %v3163, -1.0
    %v3165 = vmin.f32 %v3164, 1.0
    %v3166 = vmul.f32 %v3165, 0.1
    %v3167 = vadd.f32 %v1635, %v3166
    %s3168 = scalar_lea.vmem %s1, 128
    %v3169 = vld [vmem:[%s3168] sm:$0xf]
    %v3170 = vld [vmem:[%s3168 + $0x4] sm:$0xf]
    %v3171 = vld [vmem:[%s3168 + $0x8] sm:$0xf]
    %v3172 = vld [vmem:[%s3168 + $0xc] sm:$0xf]
    %v3173 = vld [vmem:[%s3168 + $0x10] sm:$0xf]
    %v3174 = vld [vmem:[%s3168 + $0x14] sm:$0xf]
    %v3175 = vld [vmem:[%s3168 + $0x18] sm:$0xf]
    %v3176 = vld [vmem:[%s3168 + $0x1c] sm:$0xf]
    %s3177 = scalar_lea.vmem %s2, 4
    %v3178 = vld [vmem:[%s3177] sm:$0x1]
    %v3180 = vlaneseq
    %v3181 = vshrl.u32 %v3180, 7
    %v3182 = vsub.s32 0, %v3181
    %v3183 = vrot.slane %v3178, %v3182
    %v3193 = vunpack.c.l.b16 %v3169
    %v3194 = vunpack.c.l.b16 %v3170
    %v3195 = vunpack.c.l.b16 %v3171
    %v3196 = vunpack.c.l.b16 %v3172
    %v3197 = vunpack.c.l.b16 %v3173
    %v3198 = vunpack.c.l.b16 %v3174
    %v3199 = vunpack.c.l.b16 %v3175
    %v3200 = vunpack.c.l.b16 %v3176
    %v3201 = vpack.c.b16 %v3194, %v3193
    %v3202 = vpack.c.b16 %v3196, %v3195
    %v3203 = vpack.c.b16 %v3198, %v3197
    %v3204 = vpack.c.b16 %v3200, %v3199
    %3209 = vmatprep.subr.bf16.mxu0 0
    %3210 = vmatpush1.bf16.msra.mxu0 0
    %3211 = vmatprep.subr.bf16.mxu0 0
    %3212 = vmatpush1.bf16.msra.mxu0 0
    %3213 = vmatprep.subr.bf16.mxu0 0
    %3214 = vmatpush1.bf16.msra.mxu0 0
    %3215 = vmatprep.subr.bf16.mxu0 0
    %3216 = vmatpush1.bf16.msra.mxu0 0
    %3217 = vmatprep.subr.bf16.mxu0 0
    %3218 = vmatpush1.bf16.msra.mxu0 %v3204
    %3219 = vmatprep.subr.bf16.mxu0 0
    %3220 = vmatpush1.bf16.msra.mxu0 %v3203
    %3221 = vmatprep.subr.bf16.mxu0 0
    %3222 = vmatpush1.bf16.msra.mxu0 %v3202
    %3223 = vmatprep.subr.bf16.mxu0 0
    %3224 = vmatpush1.bf16.msra.mxu0 %v3201
    %3225 = vmatprep.subr.bf16.mxu0 0
    %3226 = vmatpush2.bf16.msra.mxu0 0
    %3227 = vmatprep.subr.bf16.mxu0 0
    %3228 = vmatpush2.bf16.msra.mxu0 0
    %3229 = vmatprep.subr.bf16.mxu0 0
    %3230 = vmatpush2.bf16.msra.mxu0 0
    %3231 = vmatprep.subr.bf16.mxu0 0
    %3232 = vmatpush2.bf16.msra.mxu0 0
    %3233 = vmatprep.subr.bf16.mxu0 0
    %3234 = vmatpush2.bf16.msra.mxu0 0
    %3235 = vmatprep.subr.bf16.mxu0 0
    %3236 = vmatpush2.bf16.msra.mxu0 0
    %3237 = vmatprep.subr.bf16.mxu0 0
    %3238 = vmatpush2.bf16.msra.mxu0 0
    %3239 = vmatprep.subr.bf16.mxu0 0
    %3240 = vmatpush2.bf16.msra.mxu0 0
    %3241 = vmatprep.mubr.bf16.mxu0 0
    %3242 = vmatmul.mubr.bf16.gmra.mxu0 %v856
    %v3243 = vpop.f32.mrf.mxu0
    %v3244 = vadd.f32 %v3183, %v3243
    %v3245 = vpop.f32.mrf.mxu0
    %v3246 = vpop.f32.mrf.mxu0
    %v3247 = vadd.f32 %v3183, %v3246
    %v3248 = vpop.f32.mrf.mxu0
    %3249 = vmatprep.mubr.bf16.mxu0 0
    %3250 = vmatmul.mubr.bf16.gmra.mxu0 %v859
    %v3251 = vpop.f32.mrf.mxu0
    %v3252 = vadd.f32 %v3183, %v3251
    %v3253 = vpop.f32.mrf.mxu0
    %v3254 = vpop.f32.mrf.mxu0
    %v3255 = vadd.f32 %v3183, %v3254
    %v3256 = vpop.f32.mrf.mxu0
    %3257 = vmatprep.mubr.bf16.mxu0 0
    %3258 = vmatmul.mubr.bf16.gmra.mxu0 %v862
    %v3259 = vpop.f32.mrf.mxu0
    %v3260 = vadd.f32 %v3183, %v3259
    %v3261 = vpop.f32.mrf.mxu0
    %v3262 = vpop.f32.mrf.mxu0
    %v3263 = vadd.f32 %v3183, %v3262
    %v3264 = vpop.f32.mrf.mxu0
    %3265 = vmatprep.mubr.bf16.mxu0 0
    %3266 = vmatmul.mubr.bf16.gmra.mxu0 %v865
    %v3267 = vpop.f32.mrf.mxu0
    %v3268 = vadd.f32 %v3183, %v3267
    %v3269 = vpop.f32.mrf.mxu0
    %v3270 = vpop.f32.mrf.mxu0
    %v3271 = vadd.f32 %v3183, %v3270
    %v3272 = vpop.f32.mrf.mxu0
    %3273 = vmatprep.mubr.bf16.mxu0 0
    %3274 = vmatmul.mubr.bf16.gmra.mxu0 %v868
    %v3275 = vpop.f32.mrf.mxu0
    %v3276 = vadd.f32 %v3183, %v3275
    %v3277 = vpop.f32.mrf.mxu0
    %v3278 = vpop.f32.mrf.mxu0
    %v3279 = vadd.f32 %v3183, %v3278
    %v3280 = vpop.f32.mrf.mxu0
    %3281 = vmatprep.mubr.bf16.mxu0 0
    %3282 = vmatmul.mubr.bf16.gmra.mxu0 %v871
    %v3283 = vpop.f32.mrf.mxu0
    %v3284 = vadd.f32 %v3183, %v3283
    %v3285 = vpop.f32.mrf.mxu0
    %v3286 = vpop.f32.mrf.mxu0
    %v3287 = vadd.f32 %v3183, %v3286
    %v3288 = vpop.f32.mrf.mxu0
    %3289 = vmatprep.mubr.bf16.mxu0 0
    %3290 = vmatmul.mubr.bf16.gmra.mxu0 %v874
    %v3291 = vpop.f32.mrf.mxu0
    %v3292 = vadd.f32 %v3183, %v3291
    %v3293 = vpop.f32.mrf.mxu0
    %v3294 = vpop.f32.mrf.mxu0
    %v3295 = vadd.f32 %v3183, %v3294
    %v3296 = vpop.f32.mrf.mxu0
    %3297 = vmatprep.mubr.bf16.mxu0 0
    %3298 = vmatmul.mubr.bf16.gmra.mxu0 %v877
    %v3299 = vpop.f32.mrf.mxu0
    %v3300 = vadd.f32 %v3183, %v3299
    %v3301 = vpop.f32.mrf.mxu0
    %v3302 = vpop.f32.mrf.mxu0
    %v3303 = vadd.f32 %v3183, %v3302
    %v3304 = vpop.f32.mrf.mxu0
    %3305 = vdwg.mxu0
    %v3306 = vmul.f32 %v3244, 0.01
    %v3307 = vmul.f32 %v3247, 0.01
    %v3308 = vmul.f32 %v3252, 0.01
    %v3309 = vmul.f32 %v3255, 0.01
    %v3310 = vmul.f32 %v3260, 0.01
    %v3311 = vmul.f32 %v3263, 0.01
    %v3312 = vmul.f32 %v3268, 0.01
    %v3313 = vmul.f32 %v3271, 0.01
    %v3314 = vmul.f32 %v3276, 0.01
    %v3315 = vmul.f32 %v3279, 0.01
    %v3316 = vmul.f32 %v3284, 0.01
    %v3317 = vmul.f32 %v3287, 0.01
    %v3318 = vmul.f32 %v3292, 0.01
    %v3319 = vmul.f32 %v3295, 0.01
    %v3320 = vmul.f32 %v3300, 0.01
    %v3321 = vmul.f32 %v3303, 0.01
    %v3322 = vmax.f32 %v3244, %v3306
    %v3323 = vmax.f32 %v3247, %v3307
    %v3324 = vmax.f32 %v3252, %v3308
    %v3325 = vmax.f32 %v3255, %v3309
    %v3326 = vmax.f32 %v3260, %v3310
    %v3327 = vmax.f32 %v3263, %v3311
    %v3328 = vmax.f32 %v3268, %v3312
    %v3329 = vmax.f32 %v3271, %v3313
    %v3330 = vmax.f32 %v3276, %v3314
    %v3331 = vmax.f32 %v3279, %v3315
    %v3332 = vmax.f32 %v3284, %v3316
    %v3333 = vmax.f32 %v3287, %v3317
    %v3334 = vmax.f32 %v3292, %v3318
    %v3335 = vmax.f32 %v3295, %v3319
    %v3336 = vmax.f32 %v3300, %v3320
    %v3337 = vmax.f32 %v3303, %v3321
    %s3338 = scalar_lea.vmem %s3, 1024
    %v3339 = vld [vmem:[%s3338] sm:$0xff]
    %v3340 = vld [vmem:[%s3338 + $0x8] sm:$0xff]
    %v3341 = vld [vmem:[%s3338 + $0x10] sm:$0xff]
    %v3342 = vld [vmem:[%s3338 + $0x18] sm:$0xff]
    %v3343 = vld [vmem:[%s3338 + $0x20] sm:$0xff]
    %v3344 = vld [vmem:[%s3338 + $0x28] sm:$0xff]
    %v3345 = vld [vmem:[%s3338 + $0x30] sm:$0xff]
    %v3346 = vld [vmem:[%s3338 + $0x38] sm:$0xff]
    %3348 = vset.pattern.permute.xlu0 0
    %3349 = vperm.xlu0 %3348, %v3322
    %v3350 = vpop.permute.xlu0 %3349
    %3353 = vset.pattern.permute.xlu0 0
    %3354 = vperm.xlu0 %3353, %v3323
    %v3355 = vpop.permute.xlu0 %3354
    %3358 = vset.pattern.permute.xlu0 0
    %3359 = vperm.xlu0 %3358, %v3324
    %v3360 = vpop.permute.xlu0 %3359
    %3363 = vset.pattern.permute.xlu0 0
    %3364 = vperm.xlu0 %3363, %v3325
    %v3365 = vpop.permute.xlu0 %3364
    %3368 = vset.pattern.permute.xlu0 0
    %3369 = vperm.xlu0 %3368, %v3326
    %v3370 = vpop.permute.xlu0 %3369
    %3373 = vset.pattern.permute.xlu0 0
    %3374 = vperm.xlu0 %3373, %v3327
    %v3375 = vpop.permute.xlu0 %3374
    %3378 = vset.pattern.permute.xlu0 0
    %3379 = vperm.xlu0 %3378, %v3328
    %v3380 = vpop.permute.xlu0 %3379
    %3383 = vset.pattern.permute.xlu0 0
    %3384 = vperm.xlu0 %3383, %v3329
    %v3385 = vpop.permute.xlu0 %3384
    %v3387 = vmul.f32 %v3350, %v3339
    %v3388 = vmul.f32 %v3355, %v3340
    %v3389 = vmul.f32 %v3360, %v3341
    %v3390 = vmul.f32 %v3365, %v3342
    %v3391 = vmul.f32 %v3370, %v3343
    %v3392 = vmul.f32 %v3375, %v3344
    %v3393 = vmul.f32 %v3380, %v3345
    %v3394 = vmul.f32 %v3385, %v3346
    %s3395 = scalar_lea.vmem %s3, 1088
    %v3396 = vld [vmem:[%s3395] sm:$0xff]
    %v3397 = vld [vmem:[%s3395 + $0x8] sm:$0xff]
    %v3398 = vld [vmem:[%s3395 + $0x10] sm:$0xff]
    %v3399 = vld [vmem:[%s3395 + $0x18] sm:$0xff]
    %v3400 = vld [vmem:[%s3395 + $0x20] sm:$0xff]
    %v3401 = vld [vmem:[%s3395 + $0x28] sm:$0xff]
    %v3402 = vld [vmem:[%s3395 + $0x30] sm:$0xff]
    %v3403 = vld [vmem:[%s3395 + $0x38] sm:$0xff]
    %3404 = vset.pattern.permute.xlu0 1
    %3405 = vperm.xlu0 %3404, %v3322
    %v3406 = vpop.permute.xlu0 %3405
    %3408 = vset.pattern.permute.xlu0 1
    %3409 = vperm.xlu0 %3408, %v3323
    %v3410 = vpop.permute.xlu0 %3409
    %3412 = vset.pattern.permute.xlu0 1
    %3413 = vperm.xlu0 %3412, %v3324
    %v3414 = vpop.permute.xlu0 %3413
    %3416 = vset.pattern.permute.xlu0 1
    %3417 = vperm.xlu0 %3416, %v3325
    %v3418 = vpop.permute.xlu0 %3417
    %3420 = vset.pattern.permute.xlu0 1
    %3421 = vperm.xlu0 %3420, %v3326
    %v3422 = vpop.permute.xlu0 %3421
    %3424 = vset.pattern.permute.xlu0 1
    %3425 = vperm.xlu0 %3424, %v3327
    %v3426 = vpop.permute.xlu0 %3425
    %3428 = vset.pattern.permute.xlu0 1
    %3429 = vperm.xlu0 %3428, %v3328
    %v3430 = vpop.permute.xlu0 %3429
    %3432 = vset.pattern.permute.xlu0 1
    %3433 = vperm.xlu0 %3432, %v3329
    %v3434 = vpop.permute.xlu0 %3433
    %v3436 = vmul.f32 %v3406, %v3396
    %v3437 = vmul.f32 %v3410, %v3397
    %v3438 = vmul.f32 %v3414, %v3398
    %v3439 = vmul.f32 %v3418, %v3399
    %v3440 = vmul.f32 %v3422, %v3400
    %v3441 = vmul.f32 %v3426, %v3401
    %v3442 = vmul.f32 %v3430, %v3402
    %v3443 = vmul.f32 %v3434, %v3403
    %v3444 = vadd.f32 %v3387, %v3436
    %v3445 = vadd.f32 %v3388, %v3437
    %v3446 = vadd.f32 %v3389, %v3438
    %v3447 = vadd.f32 %v3390, %v3439
    %v3448 = vadd.f32 %v3391, %v3440
    %v3449 = vadd.f32 %v3392, %v3441
    %v3450 = vadd.f32 %v3393, %v3442
    %v3451 = vadd.f32 %v3394, %v3443
    %s3452 = scalar_lea.vmem %s3, 1152
    %v3453 = vld [vmem:[%s3452] sm:$0xff]
    %v3454 = vld [vmem:[%s3452 + $0x8] sm:$0xff]
    %v3455 = vld [vmem:[%s3452 + $0x10] sm:$0xff]
    %v3456 = vld [vmem:[%s3452 + $0x18] sm:$0xff]
    %v3457 = vld [vmem:[%s3452 + $0x20] sm:$0xff]
    %v3458 = vld [vmem:[%s3452 + $0x28] sm:$0xff]
    %v3459 = vld [vmem:[%s3452 + $0x30] sm:$0xff]
    %v3460 = vld [vmem:[%s3452 + $0x38] sm:$0xff]
    %3461 = vset.pattern.permute.xlu0 2
    %3462 = vperm.xlu0 %3461, %v3322
    %v3463 = vpop.permute.xlu0 %3462
    %3465 = vset.pattern.permute.xlu0 2
    %3466 = vperm.xlu0 %3465, %v3323
    %v3467 = vpop.permute.xlu0 %3466
    %3469 = vset.pattern.permute.xlu0 2
    %3470 = vperm.xlu0 %3469, %v3324
    %v3471 = vpop.permute.xlu0 %3470
    %3473 = vset.pattern.permute.xlu0 2
    %3474 = vperm.xlu0 %3473, %v3325
    %v3475 = vpop.permute.xlu0 %3474
    %3477 = vset.pattern.permute.xlu0 2
    %3478 = vperm.xlu0 %3477, %v3326
    %v3479 = vpop.permute.xlu0 %3478
    %3481 = vset.pattern.permute.xlu0 2
    %3482 = vperm.xlu0 %3481, %v3327
    %v3483 = vpop.permute.xlu0 %3482
    %3485 = vset.pattern.permute.xlu0 2
    %3486 = vperm.xlu0 %3485, %v3328
    %v3487 = vpop.permute.xlu0 %3486
    %3489 = vset.pattern.permute.xlu0 2
    %3490 = vperm.xlu0 %3489, %v3329
    %v3491 = vpop.permute.xlu0 %3490
    %v3493 = vmul.f32 %v3463, %v3453
    %v3494 = vmul.f32 %v3467, %v3454
    %v3495 = vmul.f32 %v3471, %v3455
    %v3496 = vmul.f32 %v3475, %v3456
    %v3497 = vmul.f32 %v3479, %v3457
    %v3498 = vmul.f32 %v3483, %v3458
    %v3499 = vmul.f32 %v3487, %v3459
    %v3500 = vmul.f32 %v3491, %v3460
    %v3501 = vadd.f32 %v3444, %v3493
    %v3502 = vadd.f32 %v3445, %v3494
    %v3503 = vadd.f32 %v3446, %v3495
    %v3504 = vadd.f32 %v3447, %v3496
    %v3505 = vadd.f32 %v3448, %v3497
    %v3506 = vadd.f32 %v3449, %v3498
    %v3507 = vadd.f32 %v3450, %v3499
    %v3508 = vadd.f32 %v3451, %v3500
    %s3509 = scalar_lea.vmem %s3, 1216
    %v3510 = vld [vmem:[%s3509] sm:$0xff]
    %v3511 = vld [vmem:[%s3509 + $0x8] sm:$0xff]
    %v3512 = vld [vmem:[%s3509 + $0x10] sm:$0xff]
    %v3513 = vld [vmem:[%s3509 + $0x18] sm:$0xff]
    %v3514 = vld [vmem:[%s3509 + $0x20] sm:$0xff]
    %v3515 = vld [vmem:[%s3509 + $0x28] sm:$0xff]
    %v3516 = vld [vmem:[%s3509 + $0x30] sm:$0xff]
    %v3517 = vld [vmem:[%s3509 + $0x38] sm:$0xff]
    %3518 = vset.pattern.permute.xlu0 3
    %3519 = vperm.xlu0 %3518, %v3322
    %v3520 = vpop.permute.xlu0 %3519
    %3522 = vset.pattern.permute.xlu0 3
    %3523 = vperm.xlu0 %3522, %v3323
    %v3524 = vpop.permute.xlu0 %3523
    %3526 = vset.pattern.permute.xlu0 3
    %3527 = vperm.xlu0 %3526, %v3324
    %v3528 = vpop.permute.xlu0 %3527
    %3530 = vset.pattern.permute.xlu0 3
    %3531 = vperm.xlu0 %3530, %v3325
    %v3532 = vpop.permute.xlu0 %3531
    %3534 = vset.pattern.permute.xlu0 3
    %3535 = vperm.xlu0 %3534, %v3326
    %v3536 = vpop.permute.xlu0 %3535
    %3538 = vset.pattern.permute.xlu0 3
    %3539 = vperm.xlu0 %3538, %v3327
    %v3540 = vpop.permute.xlu0 %3539
    %3542 = vset.pattern.permute.xlu0 3
    %3543 = vperm.xlu0 %3542, %v3328
    %v3544 = vpop.permute.xlu0 %3543
    %3546 = vset.pattern.permute.xlu0 3
    %3547 = vperm.xlu0 %3546, %v3329
    %v3548 = vpop.permute.xlu0 %3547
    %v3550 = vmul.f32 %v3520, %v3510
    %v3551 = vmul.f32 %v3524, %v3511
    %v3552 = vmul.f32 %v3528, %v3512
    %v3553 = vmul.f32 %v3532, %v3513
    %v3554 = vmul.f32 %v3536, %v3514
    %v3555 = vmul.f32 %v3540, %v3515
    %v3556 = vmul.f32 %v3544, %v3516
    %v3557 = vmul.f32 %v3548, %v3517
    %v3558 = vadd.f32 %v3501, %v3550
    %v3559 = vadd.f32 %v3502, %v3551
    %v3560 = vadd.f32 %v3503, %v3552
    %v3561 = vadd.f32 %v3504, %v3553
    %v3562 = vadd.f32 %v3505, %v3554
    %v3563 = vadd.f32 %v3506, %v3555
    %v3564 = vadd.f32 %v3507, %v3556
    %v3565 = vadd.f32 %v3508, %v3557
    %v3566 = vsel %vm502, %v3558, 0.0
    %v3567 = vsel %vm502, %v3559, 0.0
    %v3568 = vadd.f32 %v3566, %v3567
    %v3569 = vsel %vm502, %v3560, 0.0
    %v3570 = vadd.f32 %v3568, %v3569
    %v3571 = vsel %vm502, %v3561, 0.0
    %v3572 = vadd.f32 %v3570, %v3571
    %v3573 = vsel %vm502, %v3562, 0.0
    %v3574 = vadd.f32 %v3572, %v3573
    %v3575 = vsel %vm502, %v3563, 0.0
    %v3576 = vadd.f32 %v3574, %v3575
    %v3577 = vsel %vm502, %v3564, 0.0
    %v3578 = vadd.f32 %v3576, %v3577
    %v3579 = vsel %vm502, %v3565, 0.0
    %v3580 = vadd.f32 %v3578, %v3579
    %v3581 = vrot.slane %v3580, 4
    %v3582 = vadd.f32 %v3580, %v3581
    %v3583 = vrot.slane %v3582, 2
    %v3584 = vadd.f32 %v3582, %v3583
    %v3585 = vrot.slane %v3584, 1
    %v3586 = vadd.f32 %v3584, %v3585
    %3588 = vset.pattern.permute.xlu0 0
    %3589 = vperm.xlu0 %3588, %v3330
    %v3590 = vpop.permute.xlu0 %3589
    %3593 = vset.pattern.permute.xlu0 0
    %3594 = vperm.xlu0 %3593, %v3331
    %v3595 = vpop.permute.xlu0 %3594
    %3598 = vset.pattern.permute.xlu0 0
    %3599 = vperm.xlu0 %3598, %v3332
    %v3600 = vpop.permute.xlu0 %3599
    %3603 = vset.pattern.permute.xlu0 0
    %3604 = vperm.xlu0 %3603, %v3333
    %v3605 = vpop.permute.xlu0 %3604
    %3608 = vset.pattern.permute.xlu0 0
    %3609 = vperm.xlu0 %3608, %v3334
    %v3610 = vpop.permute.xlu0 %3609
    %3613 = vset.pattern.permute.xlu0 0
    %3614 = vperm.xlu0 %3613, %v3335
    %v3615 = vpop.permute.xlu0 %3614
    %3618 = vset.pattern.permute.xlu0 0
    %3619 = vperm.xlu0 %3618, %v3336
    %v3620 = vpop.permute.xlu0 %3619
    %3623 = vset.pattern.permute.xlu0 0
    %3624 = vperm.xlu0 %3623, %v3337
    %v3625 = vpop.permute.xlu0 %3624
    %v3627 = vmul.f32 %v3590, %v3339
    %v3628 = vmul.f32 %v3595, %v3340
    %v3629 = vmul.f32 %v3600, %v3341
    %v3630 = vmul.f32 %v3605, %v3342
    %v3631 = vmul.f32 %v3610, %v3343
    %v3632 = vmul.f32 %v3615, %v3344
    %v3633 = vmul.f32 %v3620, %v3345
    %v3634 = vmul.f32 %v3625, %v3346
    %3635 = vset.pattern.permute.xlu0 1
    %3636 = vperm.xlu0 %3635, %v3330
    %v3637 = vpop.permute.xlu0 %3636
    %3639 = vset.pattern.permute.xlu0 1
    %3640 = vperm.xlu0 %3639, %v3331
    %v3641 = vpop.permute.xlu0 %3640
    %3643 = vset.pattern.permute.xlu0 1
    %3644 = vperm.xlu0 %3643, %v3332
    %v3645 = vpop.permute.xlu0 %3644
    %3647 = vset.pattern.permute.xlu0 1
    %3648 = vperm.xlu0 %3647, %v3333
    %v3649 = vpop.permute.xlu0 %3648
    %3651 = vset.pattern.permute.xlu0 1
    %3652 = vperm.xlu0 %3651, %v3334
    %v3653 = vpop.permute.xlu0 %3652
    %3655 = vset.pattern.permute.xlu0 1
    %3656 = vperm.xlu0 %3655, %v3335
    %v3657 = vpop.permute.xlu0 %3656
    %3659 = vset.pattern.permute.xlu0 1
    %3660 = vperm.xlu0 %3659, %v3336
    %v3661 = vpop.permute.xlu0 %3660
    %3663 = vset.pattern.permute.xlu0 1
    %3664 = vperm.xlu0 %3663, %v3337
    %v3665 = vpop.permute.xlu0 %3664
    %v3667 = vmul.f32 %v3637, %v3396
    %v3668 = vmul.f32 %v3641, %v3397
    %v3669 = vmul.f32 %v3645, %v3398
    %v3670 = vmul.f32 %v3649, %v3399
    %v3671 = vmul.f32 %v3653, %v3400
    %v3672 = vmul.f32 %v3657, %v3401
    %v3673 = vmul.f32 %v3661, %v3402
    %v3674 = vmul.f32 %v3665, %v3403
    %v3675 = vadd.f32 %v3627, %v3667
    %v3676 = vadd.f32 %v3628, %v3668
    %v3677 = vadd.f32 %v3629, %v3669
    %v3678 = vadd.f32 %v3630, %v3670
    %v3679 = vadd.f32 %v3631, %v3671
    %v3680 = vadd.f32 %v3632, %v3672
    %v3681 = vadd.f32 %v3633, %v3673
    %v3682 = vadd.f32 %v3634, %v3674
    %3683 = vset.pattern.permute.xlu0 2
    %3684 = vperm.xlu0 %3683, %v3330
    %v3685 = vpop.permute.xlu0 %3684
    %3687 = vset.pattern.permute.xlu0 2
    %3688 = vperm.xlu0 %3687, %v3331
    %v3689 = vpop.permute.xlu0 %3688
    %3691 = vset.pattern.permute.xlu0 2
    %3692 = vperm.xlu0 %3691, %v3332
    %v3693 = vpop.permute.xlu0 %3692
    %3695 = vset.pattern.permute.xlu0 2
    %3696 = vperm.xlu0 %3695, %v3333
    %v3697 = vpop.permute.xlu0 %3696
    %3699 = vset.pattern.permute.xlu0 2
    %3700 = vperm.xlu0 %3699, %v3334
    %v3701 = vpop.permute.xlu0 %3700
    %3703 = vset.pattern.permute.xlu0 2
    %3704 = vperm.xlu0 %3703, %v3335
    %v3705 = vpop.permute.xlu0 %3704
    %3707 = vset.pattern.permute.xlu0 2
    %3708 = vperm.xlu0 %3707, %v3336
    %v3709 = vpop.permute.xlu0 %3708
    %3711 = vset.pattern.permute.xlu0 2
    %3712 = vperm.xlu0 %3711, %v3337
    %v3713 = vpop.permute.xlu0 %3712
    %v3715 = vmul.f32 %v3685, %v3453
    %v3716 = vmul.f32 %v3689, %v3454
    %v3717 = vmul.f32 %v3693, %v3455
    %v3718 = vmul.f32 %v3697, %v3456
    %v3719 = vmul.f32 %v3701, %v3457
    %v3720 = vmul.f32 %v3705, %v3458
    %v3721 = vmul.f32 %v3709, %v3459
    %v3722 = vmul.f32 %v3713, %v3460
    %v3723 = vadd.f32 %v3675, %v3715
    %v3724 = vadd.f32 %v3676, %v3716
    %v3725 = vadd.f32 %v3677, %v3717
    %v3726 = vadd.f32 %v3678, %v3718
    %v3727 = vadd.f32 %v3679, %v3719
    %v3728 = vadd.f32 %v3680, %v3720
    %v3729 = vadd.f32 %v3681, %v3721
    %v3730 = vadd.f32 %v3682, %v3722
    %3731 = vset.pattern.permute.xlu0 3
    %3732 = vperm.xlu0 %3731, %v3330
    %v3733 = vpop.permute.xlu0 %3732
    %3735 = vset.pattern.permute.xlu0 3
    %3736 = vperm.xlu0 %3735, %v3331
    %v3737 = vpop.permute.xlu0 %3736
    %3739 = vset.pattern.permute.xlu0 3
    %3740 = vperm.xlu0 %3739, %v3332
    %v3741 = vpop.permute.xlu0 %3740
    %3743 = vset.pattern.permute.xlu0 3
    %3744 = vperm.xlu0 %3743, %v3333
    %v3745 = vpop.permute.xlu0 %3744
    %3747 = vset.pattern.permute.xlu0 3
    %3748 = vperm.xlu0 %3747, %v3334
    %v3749 = vpop.permute.xlu0 %3748
    %3751 = vset.pattern.permute.xlu0 3
    %3752 = vperm.xlu0 %3751, %v3335
    %v3753 = vpop.permute.xlu0 %3752
    %3755 = vset.pattern.permute.xlu0 3
    %3756 = vperm.xlu0 %3755, %v3336
    %v3757 = vpop.permute.xlu0 %3756
    %3759 = vset.pattern.permute.xlu0 3
    %3760 = vperm.xlu0 %3759, %v3337
    %v3761 = vpop.permute.xlu0 %3760
    %v3763 = vmul.f32 %v3733, %v3510
    %v3764 = vmul.f32 %v3737, %v3511
    %v3765 = vmul.f32 %v3741, %v3512
    %v3766 = vmul.f32 %v3745, %v3513
    %v3767 = vmul.f32 %v3749, %v3514
    %v3768 = vmul.f32 %v3753, %v3515
    %v3769 = vmul.f32 %v3757, %v3516
    %v3770 = vmul.f32 %v3761, %v3517
    %v3771 = vadd.f32 %v3723, %v3763
    %v3772 = vadd.f32 %v3724, %v3764
    %v3773 = vadd.f32 %v3725, %v3765
    %v3774 = vadd.f32 %v3726, %v3766
    %v3775 = vadd.f32 %v3727, %v3767
    %v3776 = vadd.f32 %v3728, %v3768
    %v3777 = vadd.f32 %v3729, %v3769
    %v3778 = vadd.f32 %v3730, %v3770
    %v3779 = vsel %vm502, %v3771, 0.0
    %v3780 = vsel %vm502, %v3772, 0.0
    %v3781 = vadd.f32 %v3779, %v3780
    %v3782 = vsel %vm502, %v3773, 0.0
    %v3783 = vadd.f32 %v3781, %v3782
    %v3784 = vsel %vm502, %v3774, 0.0
    %v3785 = vadd.f32 %v3783, %v3784
    %v3786 = vsel %vm502, %v3775, 0.0
    %v3787 = vadd.f32 %v3785, %v3786
    %v3788 = vsel %vm502, %v3776, 0.0
    %v3789 = vadd.f32 %v3787, %v3788
    %v3790 = vsel %vm502, %v3777, 0.0
    %v3791 = vadd.f32 %v3789, %v3790
    %v3792 = vsel %vm502, %v3778, 0.0
    %v3793 = vadd.f32 %v3791, %v3792
    %v3794 = vrot.slane %v3793, 4
    %v3795 = vadd.f32 %v3793, %v3794
    %v3796 = vrot.slane %v3795, 2
    %v3797 = vadd.f32 %v3795, %v3796
    %v3798 = vrot.slane %v3797, 1
    %v3799 = vadd.f32 %v3797, %v3798
    %v3800 = vsel %vm737, %v3586, %v3799
    %s3801 = scalar_lea.vmem %s4, 4
    %v3802 = vld [vmem:[%s3801] sm:$0x1]
    %v3804 = vlaneseq
    %v3805 = vshrl.u32 %v3804, 7
    %v3806 = vsub.s32 0, %v3805
    %v3807 = vrot.slane %v3802, %v3806
    %v3809 = vadd.f32 %v3800, %v3807
    %v3810 = vtanh.pop %v3809
    %s3811 = scalar_lea.vmem %s5, 8
    %v3812 = vld [vmem:[%s3811] sm:$0x3]
    %v3813 = vmul.f32 %v3810, 0.5
    %v3814 = vmul.f32 %v3813, 1.442695
    %v3815 = vpow.pop %v3814
    %3817 = vrot.lane.b32.xlu0 %v3815, 124
    %v3818 = vpop.permute.xlu0 %3817
    %v3820 = vmul.f32 %v3812, %v3818
    %v3821 = vadd.f32 %v3810, %v3820
    %s3822 = scalar_lea.vmem %s1, 160
    %v3823 = vld [vmem:[%s3822] sm:$0xf]
    %v3824 = vld [vmem:[%s3822 + $0x4] sm:$0xf]
    %v3825 = vld [vmem:[%s3822 + $0x8] sm:$0xf]
    %v3826 = vld [vmem:[%s3822 + $0xc] sm:$0xf]
    %v3827 = vld [vmem:[%s3822 + $0x10] sm:$0xf]
    %v3828 = vld [vmem:[%s3822 + $0x14] sm:$0xf]
    %v3829 = vld [vmem:[%s3822 + $0x18] sm:$0xf]
    %v3830 = vld [vmem:[%s3822 + $0x1c] sm:$0xf]
    %s3831 = scalar_lea.vmem %s2, 5
    %v3832 = vld [vmem:[%s3831] sm:$0x1]
    %v3834 = vlaneseq
    %v3835 = vshrl.u32 %v3834, 7
    %v3836 = vsub.s32 0, %v3835
    %v3837 = vrot.slane %v3832, %v3836
    %v3847 = vunpack.c.l.b16 %v3823
    %v3848 = vunpack.c.l.b16 %v3824
    %v3849 = vunpack.c.l.b16 %v3825
    %v3850 = vunpack.c.l.b16 %v3826
    %v3851 = vunpack.c.l.b16 %v3827
    %v3852 = vunpack.c.l.b16 %v3828
    %v3853 = vunpack.c.l.b16 %v3829
    %v3854 = vunpack.c.l.b16 %v3830
    %v3855 = vpack.c.b16 %v3848, %v3847
    %v3856 = vpack.c.b16 %v3850, %v3849
    %v3857 = vpack.c.b16 %v3852, %v3851
    %v3858 = vpack.c.b16 %v3854, %v3853
    %3863 = vmatprep.subr.bf16.mxu0 0
    %3864 = vmatpush1.bf16.msra.mxu0 0
    %3865 = vmatprep.subr.bf16.mxu0 0
    %3866 = vmatpush1.bf16.msra.mxu0 0
    %3867 = vmatprep.subr.bf16.mxu0 0
    %3868 = vmatpush1.bf16.msra.mxu0 0
    %3869 = vmatprep.subr.bf16.mxu0 0
    %3870 = vmatpush1.bf16.msra.mxu0 0
    %3871 = vmatprep.subr.bf16.mxu0 0
    %3872 = vmatpush1.bf16.msra.mxu0 %v3858
    %3873 = vmatprep.subr.bf16.mxu0 0
    %3874 = vmatpush1.bf16.msra.mxu0 %v3857
    %3875 = vmatprep.subr.bf16.mxu0 0
    %3876 = vmatpush1.bf16.msra.mxu0 %v3856
    %3877 = vmatprep.subr.bf16.mxu0 0
    %3878 = vmatpush1.bf16.msra.mxu0 %v3855
    %3879 = vmatprep.subr.bf16.mxu0 0
    %3880 = vmatpush2.bf16.msra.mxu0 0
    %3881 = vmatprep.subr.bf16.mxu0 0
    %3882 = vmatpush2.bf16.msra.mxu0 0
    %3883 = vmatprep.subr.bf16.mxu0 0
    %3884 = vmatpush2.bf16.msra.mxu0 0
    %3885 = vmatprep.subr.bf16.mxu0 0
    %3886 = vmatpush2.bf16.msra.mxu0 0
    %3887 = vmatprep.subr.bf16.mxu0 0
    %3888 = vmatpush2.bf16.msra.mxu0 0
    %3889 = vmatprep.subr.bf16.mxu0 0
    %3890 = vmatpush2.bf16.msra.mxu0 0
    %3891 = vmatprep.subr.bf16.mxu0 0
    %3892 = vmatpush2.bf16.msra.mxu0 0
    %3893 = vmatprep.subr.bf16.mxu0 0
    %3894 = vmatpush2.bf16.msra.mxu0 0
    %3895 = vmatprep.mubr.bf16.mxu0 0
    %3896 = vmatmul.mubr.bf16.gmra.mxu0 %v2389
    %v3897 = vpop.f32.mrf.mxu0
    %v3898 = vadd.f32 %v3837, %v3897
    %v3899 = vpop.f32.mrf.mxu0
    %v3900 = vpop.f32.mrf.mxu0
    %v3901 = vadd.f32 %v3837, %v3900
    %v3902 = vpop.f32.mrf.mxu0
    %3903 = vmatprep.mubr.bf16.mxu0 0
    %3904 = vmatmul.mubr.bf16.gmra.mxu0 %v2392
    %v3905 = vpop.f32.mrf.mxu0
    %v3906 = vadd.f32 %v3837, %v3905
    %v3907 = vpop.f32.mrf.mxu0
    %v3908 = vpop.f32.mrf.mxu0
    %v3909 = vadd.f32 %v3837, %v3908
    %v3910 = vpop.f32.mrf.mxu0
    %3911 = vmatprep.mubr.bf16.mxu0 0
    %3912 = vmatmul.mubr.bf16.gmra.mxu0 %v2395
    %v3913 = vpop.f32.mrf.mxu0
    %v3914 = vadd.f32 %v3837, %v3913
    %v3915 = vpop.f32.mrf.mxu0
    %v3916 = vpop.f32.mrf.mxu0
    %v3917 = vadd.f32 %v3837, %v3916
    %v3918 = vpop.f32.mrf.mxu0
    %3919 = vmatprep.mubr.bf16.mxu0 0
    %3920 = vmatmul.mubr.bf16.gmra.mxu0 %v2398
    %v3921 = vpop.f32.mrf.mxu0
    %v3922 = vadd.f32 %v3837, %v3921
    %v3923 = vpop.f32.mrf.mxu0
    %v3924 = vpop.f32.mrf.mxu0
    %v3925 = vadd.f32 %v3837, %v3924
    %v3926 = vpop.f32.mrf.mxu0
    %3927 = vmatprep.mubr.bf16.mxu0 0
    %3928 = vmatmul.mubr.bf16.gmra.mxu0 %v2401
    %v3929 = vpop.f32.mrf.mxu0
    %v3930 = vadd.f32 %v3837, %v3929
    %v3931 = vpop.f32.mrf.mxu0
    %v3932 = vpop.f32.mrf.mxu0
    %v3933 = vadd.f32 %v3837, %v3932
    %v3934 = vpop.f32.mrf.mxu0
    %3935 = vmatprep.mubr.bf16.mxu0 0
    %3936 = vmatmul.mubr.bf16.gmra.mxu0 %v2404
    %v3937 = vpop.f32.mrf.mxu0
    %v3938 = vadd.f32 %v3837, %v3937
    %v3939 = vpop.f32.mrf.mxu0
    %v3940 = vpop.f32.mrf.mxu0
    %v3941 = vadd.f32 %v3837, %v3940
    %v3942 = vpop.f32.mrf.mxu0
    %3943 = vmatprep.mubr.bf16.mxu0 0
    %3944 = vmatmul.mubr.bf16.gmra.mxu0 %v2407
    %v3945 = vpop.f32.mrf.mxu0
    %v3946 = vadd.f32 %v3837, %v3945
    %v3947 = vpop.f32.mrf.mxu0
    %v3948 = vpop.f32.mrf.mxu0
    %v3949 = vadd.f32 %v3837, %v3948
    %v3950 = vpop.f32.mrf.mxu0
    %3951 = vmatprep.mubr.bf16.mxu0 0
    %3952 = vmatmul.mubr.bf16.gmra.mxu0 %v2410
    %v3953 = vpop.f32.mrf.mxu0
    %v3954 = vadd.f32 %v3837, %v3953
    %v3955 = vpop.f32.mrf.mxu0
    %v3956 = vpop.f32.mrf.mxu0
    %v3957 = vadd.f32 %v3837, %v3956
    %v3958 = vpop.f32.mrf.mxu0
    %3959 = vdwg.mxu0
    %v3960 = vmul.f32 %v3898, 0.01
    %v3961 = vmul.f32 %v3901, 0.01
    %v3962 = vmul.f32 %v3906, 0.01
    %v3963 = vmul.f32 %v3909, 0.01
    %v3964 = vmul.f32 %v3914, 0.01
    %v3965 = vmul.f32 %v3917, 0.01
    %v3966 = vmul.f32 %v3922, 0.01
    %v3967 = vmul.f32 %v3925, 0.01
    %v3968 = vmul.f32 %v3930, 0.01
    %v3969 = vmul.f32 %v3933, 0.01
    %v3970 = vmul.f32 %v3938, 0.01
    %v3971 = vmul.f32 %v3941, 0.01
    %v3972 = vmul.f32 %v3946, 0.01
    %v3973 = vmul.f32 %v3949, 0.01
    %v3974 = vmul.f32 %v3954, 0.01
    %v3975 = vmul.f32 %v3957, 0.01
    %v3976 = vmax.f32 %v3898, %v3960
    %v3977 = vmax.f32 %v3901, %v3961
    %v3978 = vmax.f32 %v3906, %v3962
    %v3979 = vmax.f32 %v3909, %v3963
    %v3980 = vmax.f32 %v3914, %v3964
    %v3981 = vmax.f32 %v3917, %v3965
    %v3982 = vmax.f32 %v3922, %v3966
    %v3983 = vmax.f32 %v3925, %v3967
    %v3984 = vmax.f32 %v3930, %v3968
    %v3985 = vmax.f32 %v3933, %v3969
    %v3986 = vmax.f32 %v3938, %v3970
    %v3987 = vmax.f32 %v3941, %v3971
    %v3988 = vmax.f32 %v3946, %v3972
    %v3989 = vmax.f32 %v3949, %v3973
    %v3990 = vmax.f32 %v3954, %v3974
    %v3991 = vmax.f32 %v3957, %v3975
    %s3992 = scalar_lea.vmem %s3, 1280
    %v3993 = vld [vmem:[%s3992] sm:$0xff]
    %v3994 = vld [vmem:[%s3992 + $0x8] sm:$0xff]
    %v3995 = vld [vmem:[%s3992 + $0x10] sm:$0xff]
    %v3996 = vld [vmem:[%s3992 + $0x18] sm:$0xff]
    %v3997 = vld [vmem:[%s3992 + $0x20] sm:$0xff]
    %v3998 = vld [vmem:[%s3992 + $0x28] sm:$0xff]
    %v3999 = vld [vmem:[%s3992 + $0x30] sm:$0xff]
    %v4000 = vld [vmem:[%s3992 + $0x38] sm:$0xff]
    %4002 = vset.pattern.permute.xlu0 0
    %4003 = vperm.xlu0 %4002, %v3976
    %v4004 = vpop.permute.xlu0 %4003
    %4007 = vset.pattern.permute.xlu0 0
    %4008 = vperm.xlu0 %4007, %v3977
    %v4009 = vpop.permute.xlu0 %4008
    %4012 = vset.pattern.permute.xlu0 0
    %4013 = vperm.xlu0 %4012, %v3978
    %v4014 = vpop.permute.xlu0 %4013
    %4017 = vset.pattern.permute.xlu0 0
    %4018 = vperm.xlu0 %4017, %v3979
    %v4019 = vpop.permute.xlu0 %4018
    %4022 = vset.pattern.permute.xlu0 0
    %4023 = vperm.xlu0 %4022, %v3980
    %v4024 = vpop.permute.xlu0 %4023
    %4027 = vset.pattern.permute.xlu0 0
    %4028 = vperm.xlu0 %4027, %v3981
    %v4029 = vpop.permute.xlu0 %4028
    %4032 = vset.pattern.permute.xlu0 0
    %4033 = vperm.xlu0 %4032, %v3982
    %v4034 = vpop.permute.xlu0 %4033
    %4037 = vset.pattern.permute.xlu0 0
    %4038 = vperm.xlu0 %4037, %v3983
    %v4039 = vpop.permute.xlu0 %4038
    %v4041 = vmul.f32 %v4004, %v3993
    %v4042 = vmul.f32 %v4009, %v3994
    %v4043 = vmul.f32 %v4014, %v3995
    %v4044 = vmul.f32 %v4019, %v3996
    %v4045 = vmul.f32 %v4024, %v3997
    %v4046 = vmul.f32 %v4029, %v3998
    %v4047 = vmul.f32 %v4034, %v3999
    %v4048 = vmul.f32 %v4039, %v4000
    %s4049 = scalar_lea.vmem %s3, 1344
    %v4050 = vld [vmem:[%s4049] sm:$0xff]
    %v4051 = vld [vmem:[%s4049 + $0x8] sm:$0xff]
    %v4052 = vld [vmem:[%s4049 + $0x10] sm:$0xff]
    %v4053 = vld [vmem:[%s4049 + $0x18] sm:$0xff]
    %v4054 = vld [vmem:[%s4049 + $0x20] sm:$0xff]
    %v4055 = vld [vmem:[%s4049 + $0x28] sm:$0xff]
    %v4056 = vld [vmem:[%s4049 + $0x30] sm:$0xff]
    %v4057 = vld [vmem:[%s4049 + $0x38] sm:$0xff]
    %4058 = vset.pattern.permute.xlu0 1
    %4059 = vperm.xlu0 %4058, %v3976
    %v4060 = vpop.permute.xlu0 %4059
    %4062 = vset.pattern.permute.xlu0 1
    %4063 = vperm.xlu0 %4062, %v3977
    %v4064 = vpop.permute.xlu0 %4063
    %4066 = vset.pattern.permute.xlu0 1
    %4067 = vperm.xlu0 %4066, %v3978
    %v4068 = vpop.permute.xlu0 %4067
    %4070 = vset.pattern.permute.xlu0 1
    %4071 = vperm.xlu0 %4070, %v3979
    %v4072 = vpop.permute.xlu0 %4071
    %4074 = vset.pattern.permute.xlu0 1
    %4075 = vperm.xlu0 %4074, %v3980
    %v4076 = vpop.permute.xlu0 %4075
    %4078 = vset.pattern.permute.xlu0 1
    %4079 = vperm.xlu0 %4078, %v3981
    %v4080 = vpop.permute.xlu0 %4079
    %4082 = vset.pattern.permute.xlu0 1
    %4083 = vperm.xlu0 %4082, %v3982
    %v4084 = vpop.permute.xlu0 %4083
    %4086 = vset.pattern.permute.xlu0 1
    %4087 = vperm.xlu0 %4086, %v3983
    %v4088 = vpop.permute.xlu0 %4087
    %v4090 = vmul.f32 %v4060, %v4050
    %v4091 = vmul.f32 %v4064, %v4051
    %v4092 = vmul.f32 %v4068, %v4052
    %v4093 = vmul.f32 %v4072, %v4053
    %v4094 = vmul.f32 %v4076, %v4054
    %v4095 = vmul.f32 %v4080, %v4055
    %v4096 = vmul.f32 %v4084, %v4056
    %v4097 = vmul.f32 %v4088, %v4057
    %v4098 = vadd.f32 %v4041, %v4090
    %v4099 = vadd.f32 %v4042, %v4091
    %v4100 = vadd.f32 %v4043, %v4092
    %v4101 = vadd.f32 %v4044, %v4093
    %v4102 = vadd.f32 %v4045, %v4094
    %v4103 = vadd.f32 %v4046, %v4095
    %v4104 = vadd.f32 %v4047, %v4096
    %v4105 = vadd.f32 %v4048, %v4097
    %s4106 = scalar_lea.vmem %s3, 1408
    %v4107 = vld [vmem:[%s4106] sm:$0xff]
    %v4108 = vld [vmem:[%s4106 + $0x8] sm:$0xff]
    %v4109 = vld [vmem:[%s4106 + $0x10] sm:$0xff]
    %v4110 = vld [vmem:[%s4106 + $0x18] sm:$0xff]
    %v4111 = vld [vmem:[%s4106 + $0x20] sm:$0xff]
    %v4112 = vld [vmem:[%s4106 + $0x28] sm:$0xff]
    %v4113 = vld [vmem:[%s4106 + $0x30] sm:$0xff]
    %v4114 = vld [vmem:[%s4106 + $0x38] sm:$0xff]
    %4115 = vset.pattern.permute.xlu0 2
    %4116 = vperm.xlu0 %4115, %v3976
    %v4117 = vpop.permute.xlu0 %4116
    %4119 = vset.pattern.permute.xlu0 2
    %4120 = vperm.xlu0 %4119, %v3977
    %v4121 = vpop.permute.xlu0 %4120
    %4123 = vset.pattern.permute.xlu0 2
    %4124 = vperm.xlu0 %4123, %v3978
    %v4125 = vpop.permute.xlu0 %4124
    %4127 = vset.pattern.permute.xlu0 2
    %4128 = vperm.xlu0 %4127, %v3979
    %v4129 = vpop.permute.xlu0 %4128
    %4131 = vset.pattern.permute.xlu0 2
    %4132 = vperm.xlu0 %4131, %v3980
    %v4133 = vpop.permute.xlu0 %4132
    %4135 = vset.pattern.permute.xlu0 2
    %4136 = vperm.xlu0 %4135, %v3981
    %v4137 = vpop.permute.xlu0 %4136
    %4139 = vset.pattern.permute.xlu0 2
    %4140 = vperm.xlu0 %4139, %v3982
    %v4141 = vpop.permute.xlu0 %4140
    %4143 = vset.pattern.permute.xlu0 2
    %4144 = vperm.xlu0 %4143, %v3983
    %v4145 = vpop.permute.xlu0 %4144
    %v4147 = vmul.f32 %v4117, %v4107
    %v4148 = vmul.f32 %v4121, %v4108
    %v4149 = vmul.f32 %v4125, %v4109
    %v4150 = vmul.f32 %v4129, %v4110
    %v4151 = vmul.f32 %v4133, %v4111
    %v4152 = vmul.f32 %v4137, %v4112
    %v4153 = vmul.f32 %v4141, %v4113
    %v4154 = vmul.f32 %v4145, %v4114
    %v4155 = vadd.f32 %v4098, %v4147
    %v4156 = vadd.f32 %v4099, %v4148
    %v4157 = vadd.f32 %v4100, %v4149
    %v4158 = vadd.f32 %v4101, %v4150
    %v4159 = vadd.f32 %v4102, %v4151
    %v4160 = vadd.f32 %v4103, %v4152
    %v4161 = vadd.f32 %v4104, %v4153
    %v4162 = vadd.f32 %v4105, %v4154
    %s4163 = scalar_lea.vmem %s3, 1472
    %v4164 = vld [vmem:[%s4163] sm:$0xff]
    %v4165 = vld [vmem:[%s4163 + $0x8] sm:$0xff]
    %v4166 = vld [vmem:[%s4163 + $0x10] sm:$0xff]
    %v4167 = vld [vmem:[%s4163 + $0x18] sm:$0xff]
    %v4168 = vld [vmem:[%s4163 + $0x20] sm:$0xff]
    %v4169 = vld [vmem:[%s4163 + $0x28] sm:$0xff]
    %v4170 = vld [vmem:[%s4163 + $0x30] sm:$0xff]
    %v4171 = vld [vmem:[%s4163 + $0x38] sm:$0xff]
    %4172 = vset.pattern.permute.xlu0 3
    %4173 = vperm.xlu0 %4172, %v3976
    %v4174 = vpop.permute.xlu0 %4173
    %4176 = vset.pattern.permute.xlu0 3
    %4177 = vperm.xlu0 %4176, %v3977
    %v4178 = vpop.permute.xlu0 %4177
    %4180 = vset.pattern.permute.xlu0 3
    %4181 = vperm.xlu0 %4180, %v3978
    %v4182 = vpop.permute.xlu0 %4181
    %4184 = vset.pattern.permute.xlu0 3
    %4185 = vperm.xlu0 %4184, %v3979
    %v4186 = vpop.permute.xlu0 %4185
    %4188 = vset.pattern.permute.xlu0 3
    %4189 = vperm.xlu0 %4188, %v3980
    %v4190 = vpop.permute.xlu0 %4189
    %4192 = vset.pattern.permute.xlu0 3
    %4193 = vperm.xlu0 %4192, %v3981
    %v4194 = vpop.permute.xlu0 %4193
    %4196 = vset.pattern.permute.xlu0 3
    %4197 = vperm.xlu0 %4196, %v3982
    %v4198 = vpop.permute.xlu0 %4197
    %4200 = vset.pattern.permute.xlu0 3
    %4201 = vperm.xlu0 %4200, %v3983
    %v4202 = vpop.permute.xlu0 %4201
    %v4204 = vmul.f32 %v4174, %v4164
    %v4205 = vmul.f32 %v4178, %v4165
    %v4206 = vmul.f32 %v4182, %v4166
    %v4207 = vmul.f32 %v4186, %v4167
    %v4208 = vmul.f32 %v4190, %v4168
    %v4209 = vmul.f32 %v4194, %v4169
    %v4210 = vmul.f32 %v4198, %v4170
    %v4211 = vmul.f32 %v4202, %v4171
    %v4212 = vadd.f32 %v4155, %v4204
    %v4213 = vadd.f32 %v4156, %v4205
    %v4214 = vadd.f32 %v4157, %v4206
    %v4215 = vadd.f32 %v4158, %v4207
    %v4216 = vadd.f32 %v4159, %v4208
    %v4217 = vadd.f32 %v4160, %v4209
    %v4218 = vadd.f32 %v4161, %v4210
    %v4219 = vadd.f32 %v4162, %v4211
    %v4220 = vsel %vm502, %v4212, 0.0
    %v4221 = vsel %vm502, %v4213, 0.0
    %v4222 = vadd.f32 %v4220, %v4221
    %v4223 = vsel %vm502, %v4214, 0.0
    %v4224 = vadd.f32 %v4222, %v4223
    %v4225 = vsel %vm502, %v4215, 0.0
    %v4226 = vadd.f32 %v4224, %v4225
    %v4227 = vsel %vm502, %v4216, 0.0
    %v4228 = vadd.f32 %v4226, %v4227
    %v4229 = vsel %vm502, %v4217, 0.0
    %v4230 = vadd.f32 %v4228, %v4229
    %v4231 = vsel %vm502, %v4218, 0.0
    %v4232 = vadd.f32 %v4230, %v4231
    %v4233 = vsel %vm502, %v4219, 0.0
    %v4234 = vadd.f32 %v4232, %v4233
    %v4235 = vrot.slane %v4234, 4
    %v4236 = vadd.f32 %v4234, %v4235
    %v4237 = vrot.slane %v4236, 2
    %v4238 = vadd.f32 %v4236, %v4237
    %v4239 = vrot.slane %v4238, 1
    %v4240 = vadd.f32 %v4238, %v4239
    %4242 = vset.pattern.permute.xlu0 0
    %4243 = vperm.xlu0 %4242, %v3984
    %v4244 = vpop.permute.xlu0 %4243
    %4247 = vset.pattern.permute.xlu0 0
    %4248 = vperm.xlu0 %4247, %v3985
    %v4249 = vpop.permute.xlu0 %4248
    %4252 = vset.pattern.permute.xlu0 0
    %4253 = vperm.xlu0 %4252, %v3986
    %v4254 = vpop.permute.xlu0 %4253
    %4257 = vset.pattern.permute.xlu0 0
    %4258 = vperm.xlu0 %4257, %v3987
    %v4259 = vpop.permute.xlu0 %4258
    %4262 = vset.pattern.permute.xlu0 0
    %4263 = vperm.xlu0 %4262, %v3988
    %v4264 = vpop.permute.xlu0 %4263
    %4267 = vset.pattern.permute.xlu0 0
    %4268 = vperm.xlu0 %4267, %v3989
    %v4269 = vpop.permute.xlu0 %4268
    %4272 = vset.pattern.permute.xlu0 0
    %4273 = vperm.xlu0 %4272, %v3990
    %v4274 = vpop.permute.xlu0 %4273
    %4277 = vset.pattern.permute.xlu0 0
    %4278 = vperm.xlu0 %4277, %v3991
    %v4279 = vpop.permute.xlu0 %4278
    %v4281 = vmul.f32 %v4244, %v3993
    %v4282 = vmul.f32 %v4249, %v3994
    %v4283 = vmul.f32 %v4254, %v3995
    %v4284 = vmul.f32 %v4259, %v3996
    %v4285 = vmul.f32 %v4264, %v3997
    %v4286 = vmul.f32 %v4269, %v3998
    %v4287 = vmul.f32 %v4274, %v3999
    %v4288 = vmul.f32 %v4279, %v4000
    %4289 = vset.pattern.permute.xlu0 1
    %4290 = vperm.xlu0 %4289, %v3984
    %v4291 = vpop.permute.xlu0 %4290
    %4293 = vset.pattern.permute.xlu0 1
    %4294 = vperm.xlu0 %4293, %v3985
    %v4295 = vpop.permute.xlu0 %4294
    %4297 = vset.pattern.permute.xlu0 1
    %4298 = vperm.xlu0 %4297, %v3986
    %v4299 = vpop.permute.xlu0 %4298
    %4301 = vset.pattern.permute.xlu0 1
    %4302 = vperm.xlu0 %4301, %v3987
    %v4303 = vpop.permute.xlu0 %4302
    %4305 = vset.pattern.permute.xlu0 1
    %4306 = vperm.xlu0 %4305, %v3988
    %v4307 = vpop.permute.xlu0 %4306
    %4309 = vset.pattern.permute.xlu0 1
    %4310 = vperm.xlu0 %4309, %v3989
    %v4311 = vpop.permute.xlu0 %4310
    %4313 = vset.pattern.permute.xlu0 1
    %4314 = vperm.xlu0 %4313, %v3990
    %v4315 = vpop.permute.xlu0 %4314
    %4317 = vset.pattern.permute.xlu0 1
    %4318 = vperm.xlu0 %4317, %v3991
    %v4319 = vpop.permute.xlu0 %4318
    %v4321 = vmul.f32 %v4291, %v4050
    %v4322 = vmul.f32 %v4295, %v4051
    %v4323 = vmul.f32 %v4299, %v4052
    %v4324 = vmul.f32 %v4303, %v4053
    %v4325 = vmul.f32 %v4307, %v4054
    %v4326 = vmul.f32 %v4311, %v4055
    %v4327 = vmul.f32 %v4315, %v4056
    %v4328 = vmul.f32 %v4319, %v4057
    %v4329 = vadd.f32 %v4281, %v4321
    %v4330 = vadd.f32 %v4282, %v4322
    %v4331 = vadd.f32 %v4283, %v4323
    %v4332 = vadd.f32 %v4284, %v4324
    %v4333 = vadd.f32 %v4285, %v4325
    %v4334 = vadd.f32 %v4286, %v4326
    %v4335 = vadd.f32 %v4287, %v4327
    %v4336 = vadd.f32 %v4288, %v4328
    %4337 = vset.pattern.permute.xlu0 2
    %4338 = vperm.xlu0 %4337, %v3984
    %v4339 = vpop.permute.xlu0 %4338
    %4341 = vset.pattern.permute.xlu0 2
    %4342 = vperm.xlu0 %4341, %v3985
    %v4343 = vpop.permute.xlu0 %4342
    %4345 = vset.pattern.permute.xlu0 2
    %4346 = vperm.xlu0 %4345, %v3986
    %v4347 = vpop.permute.xlu0 %4346
    %4349 = vset.pattern.permute.xlu0 2
    %4350 = vperm.xlu0 %4349, %v3987
    %v4351 = vpop.permute.xlu0 %4350
    %4353 = vset.pattern.permute.xlu0 2
    %4354 = vperm.xlu0 %4353, %v3988
    %v4355 = vpop.permute.xlu0 %4354
    %4357 = vset.pattern.permute.xlu0 2
    %4358 = vperm.xlu0 %4357, %v3989
    %v4359 = vpop.permute.xlu0 %4358
    %4361 = vset.pattern.permute.xlu0 2
    %4362 = vperm.xlu0 %4361, %v3990
    %v4363 = vpop.permute.xlu0 %4362
    %4365 = vset.pattern.permute.xlu0 2
    %4366 = vperm.xlu0 %4365, %v3991
    %v4367 = vpop.permute.xlu0 %4366
    %v4369 = vmul.f32 %v4339, %v4107
    %v4370 = vmul.f32 %v4343, %v4108
    %v4371 = vmul.f32 %v4347, %v4109
    %v4372 = vmul.f32 %v4351, %v4110
    %v4373 = vmul.f32 %v4355, %v4111
    %v4374 = vmul.f32 %v4359, %v4112
    %v4375 = vmul.f32 %v4363, %v4113
    %v4376 = vmul.f32 %v4367, %v4114
    %v4377 = vadd.f32 %v4329, %v4369
    %v4378 = vadd.f32 %v4330, %v4370
    %v4379 = vadd.f32 %v4331, %v4371
    %v4380 = vadd.f32 %v4332, %v4372
    %v4381 = vadd.f32 %v4333, %v4373
    %v4382 = vadd.f32 %v4334, %v4374
    %v4383 = vadd.f32 %v4335, %v4375
    %v4384 = vadd.f32 %v4336, %v4376
    %4385 = vset.pattern.permute.xlu0 3
    %4386 = vperm.xlu0 %4385, %v3984
    %v4387 = vpop.permute.xlu0 %4386
    %4389 = vset.pattern.permute.xlu0 3
    %4390 = vperm.xlu0 %4389, %v3985
    %v4391 = vpop.permute.xlu0 %4390
    %4393 = vset.pattern.permute.xlu0 3
    %4394 = vperm.xlu0 %4393, %v3986
    %v4395 = vpop.permute.xlu0 %4394
    %4397 = vset.pattern.permute.xlu0 3
    %4398 = vperm.xlu0 %4397, %v3987
    %v4399 = vpop.permute.xlu0 %4398
    %4401 = vset.pattern.permute.xlu0 3
    %4402 = vperm.xlu0 %4401, %v3988
    %v4403 = vpop.permute.xlu0 %4402
    %4405 = vset.pattern.permute.xlu0 3
    %4406 = vperm.xlu0 %4405, %v3989
    %v4407 = vpop.permute.xlu0 %4406
    %4409 = vset.pattern.permute.xlu0 3
    %4410 = vperm.xlu0 %4409, %v3990
    %v4411 = vpop.permute.xlu0 %4410
    %4413 = vset.pattern.permute.xlu0 3
    %4414 = vperm.xlu0 %4413, %v3991
    %v4415 = vpop.permute.xlu0 %4414
    %v4417 = vmul.f32 %v4387, %v4164
    %v4418 = vmul.f32 %v4391, %v4165
    %v4419 = vmul.f32 %v4395, %v4166
    %v4420 = vmul.f32 %v4399, %v4167
    %v4421 = vmul.f32 %v4403, %v4168
    %v4422 = vmul.f32 %v4407, %v4169
    %v4423 = vmul.f32 %v4411, %v4170
    %v4424 = vmul.f32 %v4415, %v4171
    %v4425 = vadd.f32 %v4377, %v4417
    %v4426 = vadd.f32 %v4378, %v4418
    %v4427 = vadd.f32 %v4379, %v4419
    %v4428 = vadd.f32 %v4380, %v4420
    %v4429 = vadd.f32 %v4381, %v4421
    %v4430 = vadd.f32 %v4382, %v4422
    %v4431 = vadd.f32 %v4383, %v4423
    %v4432 = vadd.f32 %v4384, %v4424
    %v4433 = vsel %vm502, %v4425, 0.0
    %v4434 = vsel %vm502, %v4426, 0.0
    %v4435 = vadd.f32 %v4433, %v4434
    %v4436 = vsel %vm502, %v4427, 0.0
    %v4437 = vadd.f32 %v4435, %v4436
    %v4438 = vsel %vm502, %v4428, 0.0
    %v4439 = vadd.f32 %v4437, %v4438
    %v4440 = vsel %vm502, %v4429, 0.0
    %v4441 = vadd.f32 %v4439, %v4440
    %v4442 = vsel %vm502, %v4430, 0.0
    %v4443 = vadd.f32 %v4441, %v4442
    %v4444 = vsel %vm502, %v4431, 0.0
    %v4445 = vadd.f32 %v4443, %v4444
    %v4446 = vsel %vm502, %v4432, 0.0
    %v4447 = vadd.f32 %v4445, %v4446
    %v4448 = vrot.slane %v4447, 4
    %v4449 = vadd.f32 %v4447, %v4448
    %v4450 = vrot.slane %v4449, 2
    %v4451 = vadd.f32 %v4449, %v4450
    %v4452 = vrot.slane %v4451, 1
    %v4453 = vadd.f32 %v4451, %v4452
    %v4454 = vsel %vm737, %v4240, %v4453
    %s4455 = scalar_lea.vmem %s4, 5
    %v4456 = vld [vmem:[%s4455] sm:$0x1]
    %v4458 = vlaneseq
    %v4459 = vshrl.u32 %v4458, 7
    %v4460 = vsub.s32 0, %v4459
    %v4461 = vrot.slane %v4456, %v4460
    %v4463 = vadd.f32 %v4454, %v4461
    %v4464 = vtanh.pop %v4463
    %s4465 = scalar_lea.vmem %s5, 10
    %v4466 = vld [vmem:[%s4465] sm:$0x3]
    %v4467 = vmul.f32 %v4464, 0.5
    %v4468 = vmul.f32 %v4467, 1.442695
    %v4469 = vpow.pop %v4468
    %4471 = vrot.lane.b32.xlu0 %v4469, 124
    %v4472 = vpop.permute.xlu0 %4471
    %v4474 = vmul.f32 %v4466, %v4472
    %v4475 = vadd.f32 %v4464, %v4474
    %v4476 = vmul.f32 %v3810, 2.0
    %v4477 = vmul.f32 %v4476, 1.442695
    %v4478 = vpow.pop %v4477
    %v4479 = vmul.f32 %v4464, 2.0
    %v4480 = vmul.f32 %v4479, 1.442695
    %v4481 = vpow.pop %v4480
    %v4482 = vsub.f32 %v4464, %v3810
    %v4483 = vsub.f32 %v3810, %v4464
    %v4484 = vmul.f32 %v4483, %v4483
    %4486 = vrot.lane.b32.xlu0 %v4484, 4
    %v4487 = vpop.permute.xlu0 %4486
    %v4489 = vadd.f32 %v4478, %v4487
    %v4490 = vmul.f32 %v4481, 2.0
    %v4491 = vrcp.pop %v4490
    %v4492 = vmul.f32 %v4489, %v4491
    %v4493 = vadd.f32 %v4482, %v4492
    %v4494 = vsub.f32 %v4493, 0.5
    %4496 = vrot.lane.b32.xlu0 %v4494, 124
    %v4497 = vpop.permute.xlu0 %4496
    %v4499 = vsel %vm1515, %v4497, 0.0
    %4500 = vadd.xlane.f32.xlu0 %v4499
    %v4501 = vpop.xlane.xlu0 %4500
    %v4502 = vsel %vm1519, %v4501, 0.0
    %v4503 = vrot.slane %v4502, 4
    %v4504 = vadd.f32 %v4502, %v4503
    %v4505 = vrot.slane %v4504, 2
    %v4506 = vadd.f32 %v4504, %v4505
    %v4507 = vrot.slane %v4506, 1
    %v4508 = vadd.f32 %v4506, %v4507
    %v4509 = vmul.f32 %v4508, %v1527
    %v4510 = vmul.f32 %v4482, %v4482
    %4512 = vrot.lane.b32.xlu0 %v4510, 4
    %v4513 = vpop.permute.xlu0 %4512
    %v4515 = vadd.f32 %v4481, %v4513
    %v4516 = vmul.f32 %v4478, 2.0
    %v4517 = vrcp.pop %v4516
    %v4518 = vmul.f32 %v4515, %v4517
    %v4519 = vadd.f32 %v4483, %v4518
    %v4520 = vsub.f32 %v4519, 0.5
    %4522 = vrot.lane.b32.xlu0 %v4520, 124
    %v4523 = vpop.permute.xlu0 %4522
    %v4525 = vsel %vm1515, %v4523, 0.0
    %4526 = vadd.xlane.f32.xlu0 %v4525
    %v4527 = vpop.xlane.xlu0 %4526
    %v4528 = vsel %vm1519, %v4527, 0.0
    %v4529 = vrot.slane %v4528, 4
    %v4530 = vadd.f32 %v4528, %v4529
    %v4531 = vrot.slane %v4530, 2
    %v4532 = vadd.f32 %v4530, %v4531
    %v4533 = vrot.slane %v4532, 1
    %v4534 = vadd.f32 %v4532, %v4533
    %v4535 = vmul.f32 %v4534, %v1527
    %v4536 = vadd.f32 %v4509, %v4535
    %v4537 = vsub.f32 0.0, %v3821
    %v4538 = vmul.f32 %v4537, 1.442695
    %v4539 = vpow.pop %v4538
    %v4540 = vadd.f32 %v4539, 1.0
    %v4541 = vrcp.pop %v4540
    %v4542 = vmul.f32 1.0, %v4541
    %v4543 = vsub.f32 0.0, %v4475
    %v4544 = vmul.f32 %v4543, 1.442695
    %v4545 = vpow.pop %v4544
    %v4546 = vadd.f32 %v4545, 1.0
    %v4547 = vrcp.pop %v4546
    %v4548 = vmul.f32 1.0, %v4547
    %v4549 = vmax.f32 %v4537, 0.0
    %v4550 = vand.u32 2147483647, %v4537
    %v4551 = vsub.f32 0.0, %v4550
    %v4552 = vmul.f32 %v4551, 1.442695
    %v4553 = vpow.pop %v4552
    %v4554 = vadd.f32 %v4553, 1.0
    %v4555 = vlog2.pop %v4554
    %v4556 = vmul.f32 %v4555, 0.6931472
    %v4557 = vadd.f32 %v4549, %v4556
    %v4558 = vmul.f32 %v4548, %v4557
    %v4559 = vsub.f32 1.0, %v4548
    %v4560 = vmax.f32 %v3821, 0.0
    %v4561 = vand.u32 2147483647, %v3821
    %v4562 = vsub.f32 0.0, %v4561
    %v4563 = vmul.f32 %v4562, 1.442695
    %v4564 = vpow.pop %v4563
    %v4565 = vadd.f32 %v4564, 1.0
    %v4566 = vlog2.pop %v4565
    %v4567 = vmul.f32 %v4566, 0.6931472
    %v4568 = vadd.f32 %v4560, %v4567
    %v4569 = vmul.f32 %v4559, %v4568
    %v4570 = vadd.f32 %v4558, %v4569
    %v4571 = vsel %vm1515, %v4570, 0.0
    %4572 = vadd.xlane.f32.xlu0 %v4571
    %v4573 = vpop.xlane.xlu0 %4572
    %v4574 = vsel %vm1519, %v4573, 0.0
    %v4575 = vrot.slane %v4574, 4
    %v4576 = vadd.f32 %v4574, %v4575
    %v4577 = vrot.slane %v4576, 2
    %v4578 = vadd.f32 %v4576, %v4577
    %v4579 = vrot.slane %v4578, 1
    %v4580 = vadd.f32 %v4578, %v4579
    %v4581 = vmax.f32 %v4543, 0.0
    %v4582 = vand.u32 2147483647, %v4543
    %v4583 = vsub.f32 0.0, %v4582
    %v4584 = vmul.f32 %v4583, 1.442695
    %v4585 = vpow.pop %v4584
    %v4586 = vadd.f32 %v4585, 1.0
    %v4587 = vlog2.pop %v4586
    %v4588 = vmul.f32 %v4587, 0.6931472
    %v4589 = vadd.f32 %v4581, %v4588
    %v4590 = vmul.f32 %v4542, %v4589
    %v4591 = vsub.f32 1.0, %v4542
    %v4592 = vmax.f32 %v4475, 0.0
    %v4593 = vand.u32 2147483647, %v4475
    %v4594 = vsub.f32 0.0, %v4593
    %v4595 = vmul.f32 %v4594, 1.442695
    %v4596 = vpow.pop %v4595
    %v4597 = vadd.f32 %v4596, 1.0
    %v4598 = vlog2.pop %v4597
    %v4599 = vmul.f32 %v4598, 0.6931472
    %v4600 = vadd.f32 %v4592, %v4599
    %v4601 = vmul.f32 %v4591, %v4600
    %v4602 = vadd.f32 %v4590, %v4601
    %v4603 = vsel %vm1515, %v4602, 0.0
    %4604 = vadd.xlane.f32.xlu0 %v4603
    %v4605 = vpop.xlane.xlu0 %4604
    %v4606 = vsel %vm1519, %v4605, 0.0
    %v4607 = vrot.slane %v4606, 4
    %v4608 = vadd.f32 %v4606, %v4607
    %v4609 = vrot.slane %v4608, 2
    %v4610 = vadd.f32 %v4608, %v4609
    %v4611 = vrot.slane %v4610, 1
    %v4612 = vadd.f32 %v4610, %v4611
    %v4613 = vadd.f32 %v4580, %v4612
    %v4614 = vsub.f32 %v4613, %v4536
    %v4615 = vmax.f32 %v4614, -1.0
    %v4616 = vmin.f32 %v4615, 1.0
    %v4617 = vmul.f32 %v4616, 0.1
    %v4618 = vadd.f32 %v3167, %v4617
    %vm4619 = vcmask 0
    %4620 = vst.msk [vmem:[#allocation2] sm:$0x1] %vm4619, %v4618
    // Predicated region
    $region26: #{mutual_information_loss_forward.1} parent=1 // pred_check
      _
    $region27: #{mutual_information_loss_forward.1} parent=1 // pred_check_branch
      %4622 = sbr.rel (0) target = $region29
    $region28: #{mutual_information_loss_forward.1} parent=1 // pred_region
      %s4624 = ssub.s32 16, 16
      %4625 = vsyncadd [#allocation3], %s4624
      %s4627 = sshll.u32 [#allocation2], 4
      %s4628 = int_to_ptr.vmem [resolvable:$true] %s4627
      %4630 = dma.vmem_to_hbm [thread:$0]  %s4628, 16, %s6, [#allocation3]
    $region29: #{mutual_information_loss_forward.1} parent=1 // pred_fallthru
      _
    // Predicated region
    $region30: #{mutual_information_loss_forward.1} parent=1 // pred_check
      _
    $region31: #{mutual_information_loss_forward.1} parent=1 // pred_check_branch
      %4632 = sbr.rel (0) target = $region33
    $region32: #{mutual_information_loss_forward.1} parent=1 // pred_region
      %4633 = dma.done [#allocation3], 16
    $region33: #{mutual_information_loss_forward.1} parent=1 // pred_fallthru
      _
    %4634 = vsyncpa [#allocation3], 1

</llo_original>
